<compile_context>
chip_gen: v6e
topology: v6e:2x2x1
jax: 0.10.0
libtpu: 0.0.40
codegen_flags: <defaults>
</compile_context>

<pallas_src>
import functools

import jax
import jax.numpy as jnp
from jax.experimental import pallas as pl
from jax.experimental.pallas import tpu as pltpu


def _round_up(n, m):
    return ((n + m - 1) // m) * m


def _pick_vmem_limit():
    """~75% of physical VMEM (v5e/v6e: 128 MiB, v7x: 64 MiB), capped at 100 MiB."""
    try:
        cap = int(pltpu.get_tpu_info().vmem_capacity_bytes)
        if cap > 0:
            return min(cap * 3 // 4, 100 * 1024 * 1024)
    except Exception:
        pass
    return 48 * 1024 * 1024


VMEM_LIMIT = _pick_vmem_limit()


# -----------------------------------------------------------------------------
# Fused ConvGRU recurrence kernel.
#
# Layout: every image lives as (C, Np) where Np = round_up((H+2)*(W+2), 128) is
# the flattened SAME-padded image.  The state buffer h_buf is (C, Ntot) with
# HEAD zero guard cells in front and HALO behind, so the 9 conv taps are simple
# contiguous lane slices h_buf[:, HEAD - HALO + ky*Wp2 + kx : ... + Np].
# Positions outside the true interior are garbage during the step and are
# forced back to exactly zero by `mask` before being stored / carried.
# -----------------------------------------------------------------------------
def _convgru_fused_kernel(x_ref, wx_ref, wgh_ref, woh_ref, b_ref, m_ref,
                          o_ref, h_buf, im_ref, *, C, Np, Wp2, HEAD):
    HALO = Wp2 + 1
    t = pl.program_id(1)

    @pl.when(t == 0)
    def _():
        # zero hidden state + halo guards once per sequence (per b, per core)
        h_buf[...] = jnp.zeros_like(h_buf)

    def build_im2col(src_ref):
        # 9 conv taps == 9 contiguous, lane-shifted slices of the padded-flat
        # buffer; cast to bf16 while copying (MXU operand dtype).
        for ky in range(3):
            for kx in range(3):
                tap = ky * 3 + kx
                start = HEAD - HALO + ky * Wp2 + kx
                im_ref[tap * C:(tap + 1) * C, :] = (
                    src_ref[:, start:start + Np].astype(jnp.bfloat16))

    # ---- x-side halves of both convs: ONE GEMM per step, biases folded in ----
    build_im2col(x_ref)                       # x taps (zero border from wrapper)
    xc = jnp.dot(wx_ref[...], im_ref[...],
                 preferred_element_type=jnp.float32) + b_ref[...]   # (3C, Np)

    # h_{t-1}: read the f32 state before the buffer gets reused for h * reset.
    h_prev = h_buf[:, HEAD:HEAD + Np]                                # (C, Np)

    # ---- gates = sigmoid(conv3x3([x, h])) -------------------------------------
    build_im2col(h_buf)
    pre_g = xc[:2 * C] + jnp.dot(wgh_ref[...], im_ref[...],
                                 preferred_element_type=jnp.float32)
    gates = jax.nn.sigmoid(pre_g)
    update = gates[:C]
    reset = gates[C:]

    # ---- out gate = tanh(conv3x3([x, h * reset])) -----------------------------
    # reuse the state buffer interior; its zero border/guards are preserved
    # because h_prev is exactly zero there.
    h_buf[:, HEAD:HEAD + Np] = h_prev * reset
    build_im2col(h_buf)
    pre_o = xc[2 * C:] + jnp.dot(woh_ref[...], im_ref[...],
                                 preferred_element_type=jnp.float32)
    out_inputs = jnp.tanh(pre_o)

    # ---- state update; mask pins padded / alignment positions back to zero ----
    h_new = (h_prev * (1.0 - update) + out_inputs * update) * m_ref[...]
    o_ref[...] = h_new                          # lane-dense (C, Np) store
    h_buf[:, HEAD:HEAD + Np] = h_new            # carry to t + 1


def _interior_mask(H, W, Np):
    Wp2 = W + 2
    idx = jnp.arange(Np)
    row = idx // Wp2
    col = idx % Wp2
    ok = (row >= 1) & (row <= H) & (col >= 1) & (col <= W) & (idx < (H + 2) * Wp2)
    return ok.astype(jnp.float32).reshape(1, Np)


# -----------------------------------------------------------------------------
# Per-layer wrapper (one ConvGRULayer): a single pallas_call over grid (B, T).
# -----------------------------------------------------------------------------
def convgru_layer(x_seq, params):
    """x_seq: (B, T, C, H, W) f32 (torch NCHW convention); returns same shape."""
    B, T, C, H, W = x_seq.shape
    Hp2, Wp2 = H + 2, W + 2
    IMG = Hp2 * Wp2                     # flattened padded image length
    Np = _round_up(IMG, 128)            # lane-aligned compute width
    HALO = Wp2 + 1                      # max |tap offset| from center
    HEAD = _round_up(HALO, 128)         # aligned front guard
    Ntot = HEAD + Np + HALO
    wx_all, bias_all, wg_h, wo_h = params

    # channel-major padded-flat x with halo guard cells, built once in XLA
    # (~1.6x raw activation volume, replacing the old 9x HBM im2col).
    xp = jnp.pad(x_seq, ((0, 0), (0, 0), (0, 0), (1, 1), (1, 1)))
    xp = xp.reshape(B, T, C, IMG)
    x_buf = jnp.pad(xp, ((0, 0), (0, 0), (0, 0), (HEAD, Np - IMG + HALO)))

    mask = _interior_mask(H, W, Np)

    kernel = functools.partial(_convgru_fused_kernel,
                               C=C, Np=Np, Wp2=Wp2, HEAD=HEAD)
    # TODO(synk): for production-size H,W add row tiling with a 1-row halo so the
    # per-step VMEM residency stays within v7x's 64 MiB budget.
    h_flat = pl.pallas_call(
        kernel,
        out_shape=jax.ShapeDtypeStruct((B, T, C, Np), jnp.float32),
        grid_spec=pltpu.PrefetchScalarGridSpec(
            num_scalar_prefetch=0,
            grid=(B, T),
            in_specs=[
                pl.BlockSpec((None, None, C, Ntot), lambda b, t: (b, t, 0, 0)),
                pl.BlockSpec((3 * C, 9 * C), lambda b, t: (0, 0)),
                pl.BlockSpec((2 * C, 9 * C), lambda b, t: (0, 0)),
                pl.BlockSpec((C, 9 * C), lambda b, t: (0, 0)),
                pl.BlockSpec((3 * C, 1), lambda b, t: (0, 0)),
                pl.BlockSpec((1, Np), lambda b, t: (0, 0)),
            ],
            out_specs=pl.BlockSpec((None, None, C, Np), lambda b, t: (b, t, 0, 0)),
            scratch_shapes=[
                pltpu.VMEM((C, Ntot), jnp.float32),      # padded-flat h state (f32)
                pltpu.VMEM((9 * C, Np), jnp.bfloat16),   # shared im2col (x / h / h*r)
            ]),
        compiler_params=pltpu.CompilerParams(
            # B parallel (megacore / multi-core), T MUST stay innermost+sequential
            # so the VMEM-resident hidden state carries correctly across steps.
            dimension_semantics=("parallel", "arbitrary"),
            vmem_limit_bytes=VMEM_LIMIT),
    )(x_buf, wx_all, wg_h, wo_h, bias_all, mask)

    # strip alignment tail + 1-pixel border back to (B, T, C, H, W) in XLA glue
    h_img = h_flat[..., :IMG].reshape(B, T, C, Hp2, Wp2)[..., 1:1 + H, 1:1 + W]
    return h_img


# -----------------------------------------------------------------------------
# Plain-JAX glue: pixel-unshuffle, full encoder, parameter setup.
# -----------------------------------------------------------------------------
def pixel_unshuffle_nchw(x, r=2):
    """(B,T,C,H,W) -> (B,T,C*r*r,H/r,W/r), channel order = torch.nn.PixelUnshuffle."""
    B, T, C, H, W = x.shape
    x = x.reshape(B, T, C, H // r, r, W // r, r)
    x = jnp.transpose(x, (0, 1, 2, 4, 6, 3, 5))
    return x.reshape(B, T, C * r * r, H // r, W // r)


def encoder_forward(x_btchw, blocks_params):
    """x: (B, T, C, H, W). Returns list of per-block hidden-state stacks (NCHW)."""
    x = x_btchw
    hidden_states = []
    for params in blocks_params:
        x = convgru_layer(x, params)       # ConvGRU over time
        x = pixel_unshuffle_nchw(x, 2)     # spatial downsample
        hidden_states.append(x)
    return hidden_states


def init_conv_params(key, in_ch, out_ch, k=3):
    """nn.Conv2d-style init (uniform +-1/sqrt(fan_in)), torch weight layout."""
    kw, kb = jax.random.split(key)
    fan_in = in_ch * k * k
    bound = 1.0 / (fan_in ** 0.5)
    w = jax.random.uniform(kw, (out_ch, in_ch, k, k), jnp.float32, -bound, bound)
    b = jax.random.uniform(kb, (out_ch,), jnp.float32, -bound, bound)
    return w, b


def _pack_taps(w):
    """Torch conv weight (Cout, Cin, 3, 3) -> (Cout, 9*Cin), column = tap*Cin + ci."""
    cout, cin = w.shape[0], w.shape[1]
    return jnp.transpose(w, (0, 2, 3, 1)).reshape(cout, 9 * cin)


def repack_block_params(wg, bg, wo, bo, c):
    """Split conv weights into x / h halves and pack them channel-major."""
    wg_x, wg_h = wg[:, :c], wg[:, c:]
    wo_x, wo_h = wo[:, :c], wo[:, c:]
    wx_all = jnp.concatenate([_pack_taps(wg_x), _pack_taps(wo_x)], axis=0)  # (3c, 9c)
    bias_all = jnp.concatenate([bg, bo]).reshape(3 * c, 1).astype(jnp.float32)
    return (wx_all.astype(jnp.bfloat16), bias_all,
            _pack_taps(wg_h).astype(jnp.bfloat16),
            _pack_taps(wo_h).astype(jnp.bfloat16))


def make_encoder_params(key, input_channels, num_blocks):
    raw, packed = [], []
    for i in range(num_blocks):
        c = input_channels * 4 ** i
        key, k1, k2 = jax.random.split(key, 3)
        wg, bg = init_conv_params(k1, 2 * c, 2 * c)    # combined_gates conv
        wo, bo = init_conv_params(k2, 2 * c, c)        # out_gate conv
        raw.append((wg, bg, wo, bo))
        packed.append(repack_block_params(wg, bg, wo, bo, c))
    return raw, packed


# -----------------------------------------------------------------------------
# Pure-JAX reference (lax.conv, f32) for the correctness check at demo sizes.
# -----------------------------------------------------------------------------
def _conv3x3_ref(x, w, b):
    y = jax.lax.conv_general_dilated(
        x, w, window_strides=(1, 1), padding="SAME",
        dimension_numbers=("NCHW", "OIHW", "NCHW"))
    return y + b[None, :, None, None]


def _convgru_layer_ref(x_seq, wg, bg, wo, bo):
    B, T, C, H, W = x_seq.shape
    h = jnp.zeros((B, C, H, W), jnp.float32)
    outs = []
    for t in range(T):
        x = x_seq[:, t]
        comb = _conv3x3_ref(jnp.concatenate([x, h], axis=1), wg, bg)
        update = jax.nn.sigmoid(comb[:, :C])
        reset = jax.nn.sigmoid(comb[:, C:])
        out = jnp.tanh(_conv3x3_ref(jnp.concatenate([x, h * reset], axis=1), wo, bo))
        h = h * (1.0 - update) + out * update
        outs.append(h)
    return jnp.stack(outs, axis=1)


def encoder_forward_ref(x, raw_params):
    hs = []
    for (wg, bg, wo, bo) in raw_params:
        x = _convgru_layer_ref(x, wg, bg, wo, bo)
        x = pixel_unshuffle_nchw(x, 2)
        hs.append(x)
    return hs


if __name__ == "__main__":
    key = jax.random.PRNGKey(0)
    B, T, C, H, W = 2, 4, 4, 16, 16
    num_blocks = 2

    k_x, k_p = jax.random.split(key)
    x = jax.random.normal(k_x, (B, T, C, H, W), jnp.float32)
    raw_params, packed_params = make_encoder_params(k_p, C, num_blocks)

    fwd = jax.jit(encoder_forward)
    outs = jax.block_until_ready(fwd(x, packed_params))

    assert outs[0].shape == (B, T, C * 4, H // 2, W // 2)
    assert outs[1].shape == (B, T, C * 16, H // 4, W // 4)

    ref_outs = encoder_forward_ref(x, raw_params)
    for o, r in zip(outs, ref_outs):
        assert bool(jnp.all(jnp.isfinite(o)))
        max_err = float(jnp.max(jnp.abs(o - r)))
        assert max_err < 0.15, max_err   # bf16-MXU operands vs f32 reference

    print("KERNEL_OK")
</pallas_src>

<mosaic_0001>
module attributes {stable_mosaic.version = 11 : i64} {
  func.func @_convgru_fused_kernel(%arg0: i32, %arg1: i32, %arg2: memref<1x1x4x531xf32, #tpu.memory_space<vmem>>, %arg3: memref<12x36xbf16, #tpu.memory_space<vmem>>, %arg4: memref<8x36xbf16, #tpu.memory_space<vmem>>, %arg5: memref<4x36xbf16, #tpu.memory_space<vmem>>, %arg6: memref<12x1xf32, #tpu.memory_space<vmem>>, %arg7: memref<1x384xf32, #tpu.memory_space<vmem>>, %arg8: memref<1x1x4x384xf32, #tpu.memory_space<vmem>>, %arg9: memref<4x531xf32, #tpu.memory_space<vmem>>, %arg10: memref<36x384xbf16, #tpu.memory_space<vmem>>) attributes {dimension_semantics = [#tpu.dimension_semantics<parallel>, #tpu.dimension_semantics<arbitrary>], iteration_bounds = array<i64: 2, 4>, scalar_prefetch = 0 : i64, scratch_operands = 2 : i64, tpu.core_type = #tpu.core_type<tc>, window_params = [{transform_indices = @transform_0, window_bounds = array<i64: 1, 1, 4, 531>}, {pipeline_mode = #tpu.pipeline_mode<synchronous>, transform_indices = @transform_1, window_bounds = array<i64: 12, 36>}, {pipeline_mode = #tpu.pipeline_mode<synchronous>, transform_indices = @transform_2, window_bounds = array<i64: 8, 36>}, {pipeline_mode = #tpu.pipeline_mode<synchronous>, transform_indices = @transform_3, window_bounds = array<i64: 4, 36>}, {pipeline_mode = #tpu.pipeline_mode<synchronous>, transform_indices = @transform_4, window_bounds = array<i64: 12, 1>}, {pipeline_mode = #tpu.pipeline_mode<synchronous>, transform_indices = @transform_5, window_bounds = array<i64: 1, 384>}, {transform_indices = @transform_6, window_bounds = array<i64: 1, 1, 4, 384>}]} {
    %c0_i32 = arith.constant 0 : i32
    %0 = arith.cmpi eq, %arg1, %c0_i32 : i32
    %1 = arith.extui %0 : i1 to i32
    %c0_i32_0 = arith.constant 0 : i32
    %2 = arith.cmpi ne, %1, %c0_i32_0 : i32
    scf.if %2 {
      %cst_139 = arith.constant 0.000000e+00 : f32
      %132 = vector.broadcast %cst_139 : f32 to vector<4x531xf32>
      %c0_140 = arith.constant 0 : index
      %c0_141 = arith.constant 0 : index
      %133 = vector.load %arg9[%c0_140, %c0_141] : memref<4x531xf32, #tpu.memory_space<vmem>>, vector<4x531xf32>
      tpu.vector_store %arg9[%c0_140, %c0_141], %132 {strides = array<i32>} : memref<4x531xf32, #tpu.memory_space<vmem>>, vector<4x531xf32>,
    } else {
    }
    %c0 = arith.constant 0 : index
    %c0_1 = arith.constant 0 : index
    %c0_2 = arith.constant 0 : index
    %c109 = arith.constant 109 : index
    %3 = vector.load %arg2[%c0, %c0_1, %c0_2, %c109] : memref<1x1x4x531xf32, #tpu.memory_space<vmem>>, vector<1x1x4x384xf32>
    %4 = vector.shape_cast %3 : vector<1x1x4x384xf32> to vector<4x384xf32>
    %5 = arith.truncf %4 : vector<4x384xf32> to vector<4x384xbf16>
    %c0_3 = arith.constant 0 : index
    %c0_4 = arith.constant 0 : index
    %6 = vector.load %arg10[%c0_3, %c0_4] : memref<36x384xbf16, #tpu.memory_space<vmem>>, vector<4x384xbf16>
    tpu.vector_store %arg10[%c0_3, %c0_4], %5 {strides = array<i32>} : memref<36x384xbf16, #tpu.memory_space<vmem>>, vector<4x384xbf16>,
    %c0_5 = arith.constant 0 : index
    %c0_6 = arith.constant 0 : index
    %c0_7 = arith.constant 0 : index
    %c110 = arith.constant 110 : index
    %7 = vector.load %arg2[%c0_5, %c0_6, %c0_7, %c110] : memref<1x1x4x531xf32, #tpu.memory_space<vmem>>, vector<1x1x4x384xf32>
    %8 = vector.shape_cast %7 : vector<1x1x4x384xf32> to vector<4x384xf32>
    %9 = arith.truncf %8 : vector<4x384xf32> to vector<4x384xbf16>
    %c4 = arith.constant 4 : index
    %c0_8 = arith.constant 0 : index
    %10 = vector.load %arg10[%c4, %c0_8] : memref<36x384xbf16, #tpu.memory_space<vmem>>, vector<4x384xbf16>
    tpu.vector_store %arg10[%c4, %c0_8], %9 {strides = array<i32>} : memref<36x384xbf16, #tpu.memory_space<vmem>>, vector<4x384xbf16>,
    %c0_9 = arith.constant 0 : index
    %c0_10 = arith.constant 0 : index
    %c0_11 = arith.constant 0 : index
    %c111 = arith.constant 111 : index
    %11 = vector.load %arg2[%c0_9, %c0_10, %c0_11, %c111] : memref<1x1x4x531xf32, #tpu.memory_space<vmem>>, vector<1x1x4x384xf32>
    %12 = vector.shape_cast %11 : vector<1x1x4x384xf32> to vector<4x384xf32>
    %13 = arith.truncf %12 : vector<4x384xf32> to vector<4x384xbf16>
    %c8 = arith.constant 8 : index
    %c0_12 = arith.constant 0 : index
    %14 = vector.load %arg10[%c8, %c0_12] : memref<36x384xbf16, #tpu.memory_space<vmem>>, vector<4x384xbf16>
    tpu.vector_store %arg10[%c8, %c0_12], %13 {strides = array<i32>} : memref<36x384xbf16, #tpu.memory_space<vmem>>, vector<4x384xbf16>,
    %c0_13 = arith.constant 0 : index
    %c0_14 = arith.constant 0 : index
    %c0_15 = arith.constant 0 : index
    %c127 = arith.constant 127 : index
    %15 = vector.load %arg2[%c0_13, %c0_14, %c0_15, %c127] : memref<1x1x4x531xf32, #tpu.memory_space<vmem>>, vector<1x1x4x384xf32>
    %16 = vector.shape_cast %15 : vector<1x1x4x384xf32> to vector<4x384xf32>
    %17 = arith.truncf %16 : vector<4x384xf32> to vector<4x384xbf16>
    %c12 = arith.constant 12 : index
    %c0_16 = arith.constant 0 : index
    %18 = vector.load %arg10[%c12, %c0_16] : memref<36x384xbf16, #tpu.memory_space<vmem>>, vector<4x384xbf16>
    tpu.vector_store %arg10[%c12, %c0_16], %17 {strides = array<i32>} : memref<36x384xbf16, #tpu.memory_space<vmem>>, vector<4x384xbf16>,
    %c0_17 = arith.constant 0 : index
    %c0_18 = arith.constant 0 : index
    %c0_19 = arith.constant 0 : index
    %c128 = arith.constant 128 : index
    %19 = vector.load %arg2[%c0_17, %c0_18, %c0_19, %c128] : memref<1x1x4x531xf32, #tpu.memory_space<vmem>>, vector<1x1x4x384xf32>
    %20 = vector.shape_cast %19 : vector<1x1x4x384xf32> to vector<4x384xf32>
    %21 = arith.truncf %20 : vector<4x384xf32> to vector<4x384xbf16>
    %c16 = arith.constant 16 : index
    %c0_20 = arith.constant 0 : index
    %22 = vector.load %arg10[%c16, %c0_20] : memref<36x384xbf16, #tpu.memory_space<vmem>>, vector<4x384xbf16>
    tpu.vector_store %arg10[%c16, %c0_20], %21 {strides = array<i32>} : memref<36x384xbf16, #tpu.memory_space<vmem>>, vector<4x384xbf16>,
    %c0_21 = arith.constant 0 : index
    %c0_22 = arith.constant 0 : index
    %c0_23 = arith.constant 0 : index
    %c129 = arith.constant 129 : index
    %23 = vector.load %arg2[%c0_21, %c0_22, %c0_23, %c129] : memref<1x1x4x531xf32, #tpu.memory_space<vmem>>, vector<1x1x4x384xf32>
    %24 = vector.shape_cast %23 : vector<1x1x4x384xf32> to vector<4x384xf32>
    %25 = arith.truncf %24 : vector<4x384xf32> to vector<4x384xbf16>
    %c20 = arith.constant 20 : index
    %c0_24 = arith.constant 0 : index
    %26 = vector.load %arg10[%c20, %c0_24] : memref<36x384xbf16, #tpu.memory_space<vmem>>, vector<4x384xbf16>
    tpu.vector_store %arg10[%c20, %c0_24], %25 {strides = array<i32>} : memref<36x384xbf16, #tpu.memory_space<vmem>>, vector<4x384xbf16>,
    %c0_25 = arith.constant 0 : index
    %c0_26 = arith.constant 0 : index
    %c0_27 = arith.constant 0 : index
    %c145 = arith.constant 145 : index
    %27 = vector.load %arg2[%c0_25, %c0_26, %c0_27, %c145] : memref<1x1x4x531xf32, #tpu.memory_space<vmem>>, vector<1x1x4x384xf32>
    %28 = vector.shape_cast %27 : vector<1x1x4x384xf32> to vector<4x384xf32>
    %29 = arith.truncf %28 : vector<4x384xf32> to vector<4x384xbf16>
    %c24 = arith.constant 24 : index
    %c0_28 = arith.constant 0 : index
    %30 = vector.load %arg10[%c24, %c0_28] : memref<36x384xbf16, #tpu.memory_space<vmem>>, vector<4x384xbf16>
    tpu.vector_store %arg10[%c24, %c0_28], %29 {strides = array<i32>} : memref<36x384xbf16, #tpu.memory_space<vmem>>, vector<4x384xbf16>,
    %c0_29 = arith.constant 0 : index
    %c0_30 = arith.constant 0 : index
    %c0_31 = arith.constant 0 : index
    %c146 = arith.constant 146 : index
    %31 = vector.load %arg2[%c0_29, %c0_30, %c0_31, %c146] : memref<1x1x4x531xf32, #tpu.memory_space<vmem>>, vector<1x1x4x384xf32>
    %32 = vector.shape_cast %31 : vector<1x1x4x384xf32> to vector<4x384xf32>
    %33 = arith.truncf %32 : vector<4x384xf32> to vector<4x384xbf16>
    %c28 = arith.constant 28 : index
    %c0_32 = arith.constant 0 : index
    %34 = vector.load %arg10[%c28, %c0_32] : memref<36x384xbf16, #tpu.memory_space<vmem>>, vector<4x384xbf16>
    tpu.vector_store %arg10[%c28, %c0_32], %33 {strides = array<i32>} : memref<36x384xbf16, #tpu.memory_space<vmem>>, vector<4x384xbf16>,
    %c0_33 = arith.constant 0 : index
    %c0_34 = arith.constant 0 : index
    %c0_35 = arith.constant 0 : index
    %c147 = arith.constant 147 : index
    %35 = vector.load %arg2[%c0_33, %c0_34, %c0_35, %c147] : memref<1x1x4x531xf32, #tpu.memory_space<vmem>>, vector<1x1x4x384xf32>
    %36 = vector.shape_cast %35 : vector<1x1x4x384xf32> to vector<4x384xf32>
    %37 = arith.truncf %36 : vector<4x384xf32> to vector<4x384xbf16>
    %c32 = arith.constant 32 : index
    %c0_36 = arith.constant 0 : index
    %38 = vector.load %arg10[%c32, %c0_36] : memref<36x384xbf16, #tpu.memory_space<vmem>>, vector<4x384xbf16>
    tpu.vector_store %arg10[%c32, %c0_36], %37 {strides = array<i32>} : memref<36x384xbf16, #tpu.memory_space<vmem>>, vector<4x384xbf16>,
    %c0_37 = arith.constant 0 : index
    %c0_38 = arith.constant 0 : index
    %39 = vector.load %arg3[%c0_37, %c0_38] : memref<12x36xbf16, #tpu.memory_space<vmem>>, vector<12x36xbf16>
    %c0_39 = arith.constant 0 : index
    %c0_40 = arith.constant 0 : index
    %40 = vector.load %arg10[%c0_39, %c0_40] : memref<36x384xbf16, #tpu.memory_space<vmem>>, vector<36x384xbf16>
    %cst = arith.constant dense<0.000000e+00> : vector<12x384xf32>
    %41 = tpu.matmul %39, %40, %cst {dimension_numbers = #tpu.dot_dimension_numbers<[1], [0], [0], [1], [0, 0, 1, 1], [], []>} : vector<12x36xbf16>, vector<36x384xbf16>, vector<12x384xf32> -> vector<12x384xf32>
    %c0_41 = arith.constant 0 : index
    %c0_42 = arith.constant 0 : index
    %42 = vector.load %arg6[%c0_41, %c0_42] : memref<12x1xf32, #tpu.memory_space<vmem>>, vector<12x1xf32>
    %43 = vector.broadcast %42 : vector<12x1xf32> to vector<12x384xf32>
    %44 = arith.addf %41, %43 : vector<12x384xf32>
    %c0_43 = arith.constant 0 : index
    %c128_44 = arith.constant 128 : index
    %45 = vector.load %arg9[%c0_43, %c128_44] : memref<4x531xf32, #tpu.memory_space<vmem>>, vector<4x384xf32>
    %c0_45 = arith.constant 0 : index
    %c109_46 = arith.constant 109 : index
    %46 = vector.load %arg9[%c0_45, %c109_46] : memref<4x531xf32, #tpu.memory_space<vmem>>, vector<4x384xf32>
    %47 = arith.truncf %46 : vector<4x384xf32> to vector<4x384xbf16>
    %c0_47 = arith.constant 0 : index
    %c0_48 = arith.constant 0 : index
    %48 = vector.load %arg10[%c0_47, %c0_48] : memref<36x384xbf16, #tpu.memory_space<vmem>>, vector<4x384xbf16>
    tpu.vector_store %arg10[%c0_47, %c0_48], %47 {strides = array<i32>} : memref<36x384xbf16, #tpu.memory_space<vmem>>, vector<4x384xbf16>,
    %c0_49 = arith.constant 0 : index
    %c110_50 = arith.constant 110 : index
    %49 = vector.load %arg9[%c0_49, %c110_50] : memref<4x531xf32, #tpu.memory_space<vmem>>, vector<4x384xf32>
    %50 = arith.truncf %49 : vector<4x384xf32> to vector<4x384xbf16>
    %c4_51 = arith.constant 4 : index
    %c0_52 = arith.constant 0 : index
    %51 = vector.load %arg10[%c4_51, %c0_52] : memref<36x384xbf16, #tpu.memory_space<vmem>>, vector<4x384xbf16>
    tpu.vector_store %arg10[%c4_51, %c0_52], %50 {strides = array<i32>} : memref<36x384xbf16, #tpu.memory_space<vmem>>, vector<4x384xbf16>,
    %c0_53 = arith.constant 0 : index
    %c111_54 = arith.constant 111 : index
    %52 = vector.load %arg9[%c0_53, %c111_54] : memref<4x531xf32, #tpu.memory_space<vmem>>, vector<4x384xf32>
    %53 = arith.truncf %52 : vector<4x384xf32> to vector<4x384xbf16>
    %c8_55 = arith.constant 8 : index
    %c0_56 = arith.constant 0 : index
    %54 = vector.load %arg10[%c8_55, %c0_56] : memref<36x384xbf16, #tpu.memory_space<vmem>>, vector<4x384xbf16>
    tpu.vector_store %arg10[%c8_55, %c0_56], %53 {strides = array<i32>} : memref<36x384xbf16, #tpu.memory_space<vmem>>, vector<4x384xbf16>,
    %c0_57 = arith.constant 0 : index
    %c127_58 = arith.constant 127 : index
    %55 = vector.load %arg9[%c0_57, %c127_58] : memref<4x531xf32, #tpu.memory_space<vmem>>, vector<4x384xf32>
    %56 = arith.truncf %55 : vector<4x384xf32> to vector<4x384xbf16>
    %c12_59 = arith.constant 12 : index
    %c0_60 = arith.constant 0 : index
    %57 = vector.load %arg10[%c12_59, %c0_60] : memref<36x384xbf16, #tpu.memory_space<vmem>>, vector<4x384xbf16>
    tpu.vector_store %arg10[%c12_59, %c0_60], %56 {strides = array<i32>} : memref<36x384xbf16, #tpu.memory_space<vmem>>, vector<4x384xbf16>,
    %c0_61 = arith.constant 0 : index
    %c128_62 = arith.constant 128 : index
    %58 = vector.load %arg9[%c0_61, %c128_62] : memref<4x531xf32, #tpu.memory_space<vmem>>, vector<4x384xf32>
    %59 = arith.truncf %58 : vector<4x384xf32> to vector<4x384xbf16>
    %c16_63 = arith.constant 16 : index
    %c0_64 = arith.constant 0 : index
    %60 = vector.load %arg10[%c16_63, %c0_64] : memref<36x384xbf16, #tpu.memory_space<vmem>>, vector<4x384xbf16>
    tpu.vector_store %arg10[%c16_63, %c0_64], %59 {strides = array<i32>} : memref<36x384xbf16, #tpu.memory_space<vmem>>, vector<4x384xbf16>,
    %c0_65 = arith.constant 0 : index
    %c129_66 = arith.constant 129 : index
    %61 = vector.load %arg9[%c0_65, %c129_66] : memref<4x531xf32, #tpu.memory_space<vmem>>, vector<4x384xf32>
    %62 = arith.truncf %61 : vector<4x384xf32> to vector<4x384xbf16>
    %c20_67 = arith.constant 20 : index
    %c0_68 = arith.constant 0 : index
    %63 = vector.load %arg10[%c20_67, %c0_68] : memref<36x384xbf16, #tpu.memory_space<vmem>>, vector<4x384xbf16>
    tpu.vector_store %arg10[%c20_67, %c0_68], %62 {strides = array<i32>} : memref<36x384xbf16, #tpu.memory_space<vmem>>, vector<4x384xbf16>,
    %c0_69 = arith.constant 0 : index
    %c145_70 = arith.constant 145 : index
    %64 = vector.load %arg9[%c0_69, %c145_70] : memref<4x531xf32, #tpu.memory_space<vmem>>, vector<4x384xf32>
    %65 = arith.truncf %64 : vector<4x384xf32> to vector<4x384xbf16>
    %c24_71 = arith.constant 24 : index
    %c0_72 = arith.constant 0 : index
    %66 = vector.load %arg10[%c24_71, %c0_72] : memref<36x384xbf16, #tpu.memory_space<vmem>>, vector<4x384xbf16>
    tpu.vector_store %arg10[%c24_71, %c0_72], %65 {strides = array<i32>} : memref<36x384xbf16, #tpu.memory_space<vmem>>, vector<4x384xbf16>,
    %c0_73 = arith.constant 0 : index
    %c146_74 = arith.constant 146 : index
    %67 = vector.load %arg9[%c0_73, %c146_74] : memref<4x531xf32, #tpu.memory_space<vmem>>, vector<4x384xf32>
    %68 = arith.truncf %67 : vector<4x384xf32> to vector<4x384xbf16>
    %c28_75 = arith.constant 28 : index
    %c0_76 = arith.constant 0 : index
    %69 = vector.load %arg10[%c28_75, %c0_76] : memref<36x384xbf16, #tpu.memory_space<vmem>>, vector<4x384xbf16>
    tpu.vector_store %arg10[%c28_75, %c0_76], %68 {strides = array<i32>} : memref<36x384xbf16, #tpu.memory_space<vmem>>, vector<4x384xbf16>,
    %c0_77 = arith.constant 0 : index
    %c147_78 = arith.constant 147 : index
    %70 = vector.load %arg9[%c0_77, %c147_78] : memref<4x531xf32, #tpu.memory_space<vmem>>, vector<4x384xf32>
    %71 = arith.truncf %70 : vector<4x384xf32> to vector<4x384xbf16>
    %c32_79 = arith.constant 32 : index
    %c0_80 = arith.constant 0 : index
    %72 = vector.load %arg10[%c32_79, %c0_80] : memref<36x384xbf16, #tpu.memory_space<vmem>>, vector<4x384xbf16>
    tpu.vector_store %arg10[%c32_79, %c0_80], %71 {strides = array<i32>} : memref<36x384xbf16, #tpu.memory_space<vmem>>, vector<4x384xbf16>,
    %73 = vector.extract_strided_slice %44 {offsets = [0, 0], sizes = [8, 384], strides = [1, 1]} : vector<12x384xf32> to vector<8x384xf32>
    %c0_81 = arith.constant 0 : index
    %c0_82 = arith.constant 0 : index
    %74 = vector.load %arg4[%c0_81, %c0_82] : memref<8x36xbf16, #tpu.memory_space<vmem>>, vector<8x36xbf16>
    %c0_83 = arith.constant 0 : index
    %c0_84 = arith.constant 0 : index
    %75 = vector.load %arg10[%c0_83, %c0_84] : memref<36x384xbf16, #tpu.memory_space<vmem>>, vector<36x384xbf16>
    %cst_85 = arith.constant dense<0.000000e+00> : vector<8x384xf32>
    %76 = tpu.matmul %74, %75, %cst_85 {dimension_numbers = #tpu.dot_dimension_numbers<[1], [0], [0], [1], [0, 0, 1, 1], [], []>} : vector<8x36xbf16>, vector<36x384xbf16>, vector<8x384xf32> -> vector<8x384xf32>
    %77 = arith.addf %73, %76 : vector<8x384xf32>
    %78 = arith.negf %77 : vector<8x384xf32>
    %79 = math.exp %78 : vector<8x384xf32>
    %cst_86 = arith.constant 1.000000e+00 : f32
    %80 = vector.broadcast %cst_86 : f32 to vector<8x384xf32>
    %81 = arith.addf %80, %79 : vector<8x384xf32>
    %82 = arith.divf %80, %81 : vector<8x384xf32>
    %83 = vector.extract_strided_slice %82 {offsets = [0, 0], sizes = [4, 384], strides = [1, 1]} : vector<8x384xf32> to vector<4x384xf32>
    %84 = vector.extract_strided_slice %82 {offsets = [4, 0], sizes = [4, 384], strides = [1, 1]} : vector<8x384xf32> to vector<4x384xf32>
    %85 = arith.mulf %45, %84 : vector<4x384xf32>
    %c0_87 = arith.constant 0 : index
    %c128_88 = arith.constant 128 : index
    %86 = vector.load %arg9[%c0_87, %c128_88] : memref<4x531xf32, #tpu.memory_space<vmem>>, vector<4x384xf32>
    tpu.vector_store %arg9[%c0_87, %c128_88], %85 {strides = array<i32>} : memref<4x531xf32, #tpu.memory_space<vmem>>, vector<4x384xf32>,
    %c0_89 = arith.constant 0 : index
    %c109_90 = arith.constant 109 : index
    %87 = vector.load %arg9[%c0_89, %c109_90] : memref<4x531xf32, #tpu.memory_space<vmem>>, vector<4x384xf32>
    %88 = arith.truncf %87 : vector<4x384xf32> to vector<4x384xbf16>
    %c0_91 = arith.constant 0 : index
    %c0_92 = arith.constant 0 : index
    %89 = vector.load %arg10[%c0_91, %c0_92] : memref<36x384xbf16, #tpu.memory_space<vmem>>, vector<4x384xbf16>
    tpu.vector_store %arg10[%c0_91, %c0_92], %88 {strides = array<i32>} : memref<36x384xbf16, #tpu.memory_space<vmem>>, vector<4x384xbf16>,
    %c0_93 = arith.constant 0 : index
    %c110_94 = arith.constant 110 : index
    %90 = vector.load %arg9[%c0_93, %c110_94] : memref<4x531xf32, #tpu.memory_space<vmem>>, vector<4x384xf32>
    %91 = arith.truncf %90 : vector<4x384xf32> to vector<4x384xbf16>
    %c4_95 = arith.constant 4 : index
    %c0_96 = arith.constant 0 : index
    %92 = vector.load %arg10[%c4_95, %c0_96] : memref<36x384xbf16, #tpu.memory_space<vmem>>, vector<4x384xbf16>
    tpu.vector_store %arg10[%c4_95, %c0_96], %91 {strides = array<i32>} : memref<36x384xbf16, #tpu.memory_space<vmem>>, vector<4x384xbf16>,
    %c0_97 = arith.constant 0 : index
    %c111_98 = arith.constant 111 : index
    %93 = vector.load %arg9[%c0_97, %c111_98] : memref<4x531xf32, #tpu.memory_space<vmem>>, vector<4x384xf32>
    %94 = arith.truncf %93 : vector<4x384xf32> to vector<4x384xbf16>
    %c8_99 = arith.constant 8 : index
    %c0_100 = arith.constant 0 : index
    %95 = vector.load %arg10[%c8_99, %c0_100] : memref<36x384xbf16, #tpu.memory_space<vmem>>, vector<4x384xbf16>
    tpu.vector_store %arg10[%c8_99, %c0_100], %94 {strides = array<i32>} : memref<36x384xbf16, #tpu.memory_space<vmem>>, vector<4x384xbf16>,
    %c0_101 = arith.constant 0 : index
    %c127_102 = arith.constant 127 : index
    %96 = vector.load %arg9[%c0_101, %c127_102] : memref<4x531xf32, #tpu.memory_space<vmem>>, vector<4x384xf32>
    %97 = arith.truncf %96 : vector<4x384xf32> to vector<4x384xbf16>
    %c12_103 = arith.constant 12 : index
    %c0_104 = arith.constant 0 : index
    %98 = vector.load %arg10[%c12_103, %c0_104] : memref<36x384xbf16, #tpu.memory_space<vmem>>, vector<4x384xbf16>
    tpu.vector_store %arg10[%c12_103, %c0_104], %97 {strides = array<i32>} : memref<36x384xbf16, #tpu.memory_space<vmem>>, vector<4x384xbf16>,
    %c0_105 = arith.constant 0 : index
    %c128_106 = arith.constant 128 : index
    %99 = vector.load %arg9[%c0_105, %c128_106] : memref<4x531xf32, #tpu.memory_space<vmem>>, vector<4x384xf32>
    %100 = arith.truncf %99 : vector<4x384xf32> to vector<4x384xbf16>
    %c16_107 = arith.constant 16 : index
    %c0_108 = arith.constant 0 : index
    %101 = vector.load %arg10[%c16_107, %c0_108] : memref<36x384xbf16, #tpu.memory_space<vmem>>, vector<4x384xbf16>
    tpu.vector_store %arg10[%c16_107, %c0_108], %100 {strides = array<i32>} : memref<36x384xbf16, #tpu.memory_space<vmem>>, vector<4x384xbf16>,
    %c0_109 = arith.constant 0 : index
    %c129_110 = arith.constant 129 : index
    %102 = vector.load %arg9[%c0_109, %c129_110] : memref<4x531xf32, #tpu.memory_space<vmem>>, vector<4x384xf32>
    %103 = arith.truncf %102 : vector<4x384xf32> to vector<4x384xbf16>
    %c20_111 = arith.constant 20 : index
    %c0_112 = arith.constant 0 : index
    %104 = vector.load %arg10[%c20_111, %c0_112] : memref<36x384xbf16, #tpu.memory_space<vmem>>, vector<4x384xbf16>
    tpu.vector_store %arg10[%c20_111, %c0_112], %103 {strides = array<i32>} : memref<36x384xbf16, #tpu.memory_space<vmem>>, vector<4x384xbf16>,
    %c0_113 = arith.constant 0 : index
    %c145_114 = arith.constant 145 : index
    %105 = vector.load %arg9[%c0_113, %c145_114] : memref<4x531xf32, #tpu.memory_space<vmem>>, vector<4x384xf32>
    %106 = arith.truncf %105 : vector<4x384xf32> to vector<4x384xbf16>
    %c24_115 = arith.constant 24 : index
    %c0_116 = arith.constant 0 : index
    %107 = vector.load %arg10[%c24_115, %c0_116] : memref<36x384xbf16, #tpu.memory_space<vmem>>, vector<4x384xbf16>
    tpu.vector_store %arg10[%c24_115, %c0_116], %106 {strides = array<i32>} : memref<36x384xbf16, #tpu.memory_space<vmem>>, vector<4x384xbf16>,
    %c0_117 = arith.constant 0 : index
    %c146_118 = arith.constant 146 : index
    %108 = vector.load %arg9[%c0_117, %c146_118] : memref<4x531xf32, #tpu.memory_space<vmem>>, vector<4x384xf32>
    %109 = arith.truncf %108 : vector<4x384xf32> to vector<4x384xbf16>
    %c28_119 = arith.constant 28 : index
    %c0_120 = arith.constant 0 : index
    %110 = vector.load %arg10[%c28_119, %c0_120] : memref<36x384xbf16, #tpu.memory_space<vmem>>, vector<4x384xbf16>
    tpu.vector_store %arg10[%c28_119, %c0_120], %109 {strides = array<i32>} : memref<36x384xbf16, #tpu.memory_space<vmem>>, vector<4x384xbf16>,
    %c0_121 = arith.constant 0 : index
    %c147_122 = arith.constant 147 : index
    %111 = vector.load %arg9[%c0_121, %c147_122] : memref<4x531xf32, #tpu.memory_space<vmem>>, vector<4x384xf32>
    %112 = arith.truncf %111 : vector<4x384xf32> to vector<4x384xbf16>
    %c32_123 = arith.constant 32 : index
    %c0_124 = arith.constant 0 : index
    %113 = vector.load %arg10[%c32_123, %c0_124] : memref<36x384xbf16, #tpu.memory_space<vmem>>, vector<4x384xbf16>
    tpu.vector_store %arg10[%c32_123, %c0_124], %112 {strides = array<i32>} : memref<36x384xbf16, #tpu.memory_space<vmem>>, vector<4x384xbf16>,
    %114 = vector.extract_strided_slice %44 {offsets = [8, 0], sizes = [4, 384], strides = [1, 1]} : vector<12x384xf32> to vector<4x384xf32>
    %c0_125 = arith.constant 0 : index
    %c0_126 = arith.constant 0 : index
    %115 = vector.load %arg5[%c0_125, %c0_126] : memref<4x36xbf16, #tpu.memory_space<vmem>>, vector<4x36xbf16>
    %c0_127 = arith.constant 0 : index
    %c0_128 = arith.constant 0 : index
    %116 = vector.load %arg10[%c0_127, %c0_128] : memref<36x384xbf16, #tpu.memory_space<vmem>>, vector<36x384xbf16>
    %cst_129 = arith.constant dense<0.000000e+00> : vector<4x384xf32>
    %117 = tpu.matmul %115, %116, %cst_129 {dimension_numbers = #tpu.dot_dimension_numbers<[1], [0], [0], [1], [0, 0, 1, 1], [], []>} : vector<4x36xbf16>, vector<36x384xbf16>, vector<4x384xf32> -> vector<4x384xf32>
    %118 = arith.addf %114, %117 : vector<4x384xf32>
    %119 = math.tanh %118 : vector<4x384xf32>
    %cst_130 = arith.constant 1.000000e+00 : f32
    %120 = vector.broadcast %cst_130 : f32 to vector<4x384xf32>
    %121 = arith.subf %120, %83 : vector<4x384xf32>
    %122 = arith.mulf %45, %121 : vector<4x384xf32>
    %123 = arith.mulf %119, %83 : vector<4x384xf32>
    %124 = arith.addf %122, %123 : vector<4x384xf32>
    %c0_131 = arith.constant 0 : index
    %c0_132 = arith.constant 0 : index
    %125 = vector.load %arg7[%c0_131, %c0_132] : memref<1x384xf32, #tpu.memory_space<vmem>>, vector<1x384xf32>
    %126 = vector.broadcast %125 : vector<1x384xf32> to vector<4x384xf32>
    %127 = arith.mulf %124, %126 : vector<4x384xf32>
    %c0_133 = arith.constant 0 : index
    %c0_134 = arith.constant 0 : index
    %c0_135 = arith.constant 0 : index
    %c0_136 = arith.constant 0 : index
    %128 = vector.load %arg8[%c0_133, %c0_134, %c0_135, %c0_136] : memref<1x1x4x384xf32, #tpu.memory_space<vmem>>, vector<1x1x4x384xf32>
    %129 = vector.shape_cast %128 : vector<1x1x4x384xf32> to vector<4x384xf32>
    %130 = vector.shape_cast %127 : vector<4x384xf32> to vector<1x1x4x384xf32>
    tpu.vector_store %arg8[%c0_133, %c0_134, %c0_135, %c0_136], %130 {strides = array<i32>} : memref<1x1x4x384xf32, #tpu.memory_space<vmem>>, vector<1x1x4x384xf32>,
    %c0_137 = arith.constant 0 : index
    %c128_138 = arith.constant 128 : index
    %131 = vector.load %arg9[%c0_137, %c128_138] : memref<4x531xf32, #tpu.memory_space<vmem>>, vector<4x384xf32>
    tpu.vector_store %arg9[%c0_137, %c128_138], %127 {strides = array<i32>} : memref<4x531xf32, #tpu.memory_space<vmem>>, vector<4x384xf32>,
    return
  }
  func.func @transform_0(%arg0: i32, %arg1: i32) -> (i32, i32, i32, i32) {
    %c0_i32 = arith.constant 0 : i32
    %c0_i32_0 = arith.constant 0 : i32
    %c0_i32_1 = arith.constant 0 : i32
    return %arg0, %arg1, %c0_i32, %c0_i32_0 : i32, i32, i32, i32
  }
  func.func @transform_1(%arg0: i32, %arg1: i32) -> (i32, i32) {
    %c0_i32 = arith.constant 0 : i32
    %c0_i32_0 = arith.constant 0 : i32
    %c0_i32_1 = arith.constant 0 : i32
    return %c0_i32, %c0_i32_0 : i32, i32
  }
  func.func @transform_2(%arg0: i32, %arg1: i32) -> (i32, i32) {
    %c0_i32 = arith.constant 0 : i32
    %c0_i32_0 = arith.constant 0 : i32
    %c0_i32_1 = arith.constant 0 : i32
    return %c0_i32, %c0_i32_0 : i32, i32
  }
  func.func @transform_3(%arg0: i32, %arg1: i32) -> (i32, i32) {
    %c0_i32 = arith.constant 0 : i32
    %c0_i32_0 = arith.constant 0 : i32
    %c0_i32_1 = arith.constant 0 : i32
    return %c0_i32, %c0_i32_0 : i32, i32
  }
  func.func @transform_4(%arg0: i32, %arg1: i32) -> (i32, i32) {
    %c0_i32 = arith.constant 0 : i32
    %c0_i32_0 = arith.constant 0 : i32
    %c0_i32_1 = arith.constant 0 : i32
    return %c0_i32, %c0_i32_0 : i32, i32
  }
  func.func @transform_5(%arg0: i32, %arg1: i32) -> (i32, i32) {
    %c0_i32 = arith.constant 0 : i32
    %c0_i32_0 = arith.constant 0 : i32
    %c0_i32_1 = arith.constant 0 : i32
    return %c0_i32, %c0_i32_0 : i32, i32
  }
  func.func @transform_6(%arg0: i32, %arg1: i32) -> (i32, i32, i32, i32) {
    %c0_i32 = arith.constant 0 : i32
    %c0_i32_0 = arith.constant 0 : i32
    %c0_i32_1 = arith.constant 0 : i32
    return %arg0, %arg1, %c0_i32, %c0_i32_0 : i32, i32, i32, i32
  }
}

module attributes {stable_mosaic.version = 11 : i64} {
  func.func @_convgru_fused_kernel(%arg0: i32, %arg1: i32, %arg2: memref<1x1x16x267xf32, #tpu.memory_space<vmem>>, %arg3: memref<48x144xbf16, #tpu.memory_space<vmem>>, %arg4: memref<32x144xbf16, #tpu.memory_space<vmem>>, %arg5: memref<16x144xbf16, #tpu.memory_space<vmem>>, %arg6: memref<48x1xf32, #tpu.memory_space<vmem>>, %arg7: memref<1x128xf32, #tpu.memory_space<vmem>>, %arg8: memref<1x1x16x128xf32, #tpu.memory_space<vmem>>, %arg9: memref<16x267xf32, #tpu.memory_space<vmem>>, %arg10: memref<144x128xbf16, #tpu.memory_space<vmem>>) attributes {dimension_semantics = [#tpu.dimension_semantics<parallel>, #tpu.dimension_semantics<arbitrary>], iteration_bounds = array<i64: 2, 4>, scalar_prefetch = 0 : i64, scratch_operands = 2 : i64, tpu.core_type = #tpu.core_type<tc>, window_params = [{transform_indices = @transform_0, window_bounds = array<i64: 1, 1, 16, 267>}, {pipeline_mode = #tpu.pipeline_mode<synchronous>, transform_indices = @transform_1, window_bounds = array<i64: 48, 144>}, {pipeline_mode = #tpu.pipeline_mode<synchronous>, transform_indices = @transform_2, window_bounds = array<i64: 32, 144>}, {pipeline_mode = #tpu.pipeline_mode<synchronous>, transform_indices = @transform_3, window_bounds = array<i64: 16, 144>}, {pipeline_mode = #tpu.pipeline_mode<synchronous>, transform_indices = @transform_4, window_bounds = array<i64: 48, 1>}, {pipeline_mode = #tpu.pipeline_mode<synchronous>, transform_indices = @transform_5, window_bounds = array<i64: 1, 128>}, {transform_indices = @transform_6, window_bounds = array<i64: 1, 1, 16, 128>}]} {
    %c0_i32 = arith.constant 0 : i32
    %0 = arith.cmpi eq, %arg1, %c0_i32 : i32
    %1 = arith.extui %0 : i1 to i32
    %c0_i32_0 = arith.constant 0 : i32
    %2 = arith.cmpi ne, %1, %c0_i32_0 : i32
    scf.if %2 {
      %cst_140 = arith.constant 0.000000e+00 : f32
      %132 = vector.broadcast %cst_140 : f32 to vector<16x267xf32>
      %c0_141 = arith.constant 0 : index
      %c0_142 = arith.constant 0 : index
      %133 = vector.load %arg9[%c0_141, %c0_142] : memref<16x267xf32, #tpu.memory_space<vmem>>, vector<16x267xf32>
      tpu.vector_store %arg9[%c0_141, %c0_142], %132 {strides = array<i32>} : memref<16x267xf32, #tpu.memory_space<vmem>>, vector<16x267xf32>,
    } else {
    }
    %c0 = arith.constant 0 : index
    %c0_1 = arith.constant 0 : index
    %c0_2 = arith.constant 0 : index
    %c117 = arith.constant 117 : index
    %3 = vector.load %arg2[%c0, %c0_1, %c0_2, %c117] : memref<1x1x16x267xf32, #tpu.memory_space<vmem>>, vector<1x1x16x128xf32>
    %4 = vector.shape_cast %3 : vector<1x1x16x128xf32> to vector<16x128xf32>
    %5 = arith.truncf %4 : vector<16x128xf32> to vector<16x128xbf16>
    %c0_3 = arith.constant 0 : index
    %c0_4 = arith.constant 0 : index
    %6 = vector.load %arg10[%c0_3, %c0_4] : memref<144x128xbf16, #tpu.memory_space<vmem>>, vector<16x128xbf16>
    tpu.vector_store %arg10[%c0_3, %c0_4], %5 {strides = array<i32>} : memref<144x128xbf16, #tpu.memory_space<vmem>>, vector<16x128xbf16>,
    %c0_5 = arith.constant 0 : index
    %c0_6 = arith.constant 0 : index
    %c0_7 = arith.constant 0 : index
    %c118 = arith.constant 118 : index
    %7 = vector.load %arg2[%c0_5, %c0_6, %c0_7, %c118] : memref<1x1x16x267xf32, #tpu.memory_space<vmem>>, vector<1x1x16x128xf32>
    %8 = vector.shape_cast %7 : vector<1x1x16x128xf32> to vector<16x128xf32>
    %9 = arith.truncf %8 : vector<16x128xf32> to vector<16x128xbf16>
    %c16 = arith.constant 16 : index
    %c0_8 = arith.constant 0 : index
    %10 = vector.load %arg10[%c16, %c0_8] : memref<144x128xbf16, #tpu.memory_space<vmem>>, vector<16x128xbf16>
    tpu.vector_store %arg10[%c16, %c0_8], %9 {strides = array<i32>} : memref<144x128xbf16, #tpu.memory_space<vmem>>, vector<16x128xbf16>,
    %c0_9 = arith.constant 0 : index
    %c0_10 = arith.constant 0 : index
    %c0_11 = arith.constant 0 : index
    %c119 = arith.constant 119 : index
    %11 = vector.load %arg2[%c0_9, %c0_10, %c0_11, %c119] : memref<1x1x16x267xf32, #tpu.memory_space<vmem>>, vector<1x1x16x128xf32>
    %12 = vector.shape_cast %11 : vector<1x1x16x128xf32> to vector<16x128xf32>
    %13 = arith.truncf %12 : vector<16x128xf32> to vector<16x128xbf16>
    %c32 = arith.constant 32 : index
    %c0_12 = arith.constant 0 : index
    %14 = vector.load %arg10[%c32, %c0_12] : memref<144x128xbf16, #tpu.memory_space<vmem>>, vector<16x128xbf16>
    tpu.vector_store %arg10[%c32, %c0_12], %13 {strides = array<i32>} : memref<144x128xbf16, #tpu.memory_space<vmem>>, vector<16x128xbf16>,
    %c0_13 = arith.constant 0 : index
    %c0_14 = arith.constant 0 : index
    %c0_15 = arith.constant 0 : index
    %c127 = arith.constant 127 : index
    %15 = vector.load %arg2[%c0_13, %c0_14, %c0_15, %c127] : memref<1x1x16x267xf32, #tpu.memory_space<vmem>>, vector<1x1x16x128xf32>
    %16 = vector.shape_cast %15 : vector<1x1x16x128xf32> to vector<16x128xf32>
    %17 = arith.truncf %16 : vector<16x128xf32> to vector<16x128xbf16>
    %c48 = arith.constant 48 : index
    %c0_16 = arith.constant 0 : index
    %18 = vector.load %arg10[%c48, %c0_16] : memref<144x128xbf16, #tpu.memory_space<vmem>>, vector<16x128xbf16>
    tpu.vector_store %arg10[%c48, %c0_16], %17 {strides = array<i32>} : memref<144x128xbf16, #tpu.memory_space<vmem>>, vector<16x128xbf16>,
    %c0_17 = arith.constant 0 : index
    %c0_18 = arith.constant 0 : index
    %c0_19 = arith.constant 0 : index
    %c128 = arith.constant 128 : index
    %19 = vector.load %arg2[%c0_17, %c0_18, %c0_19, %c128] : memref<1x1x16x267xf32, #tpu.memory_space<vmem>>, vector<1x1x16x128xf32>
    %20 = vector.shape_cast %19 : vector<1x1x16x128xf32> to vector<16x128xf32>
    %21 = arith.truncf %20 : vector<16x128xf32> to vector<16x128xbf16>
    %c64 = arith.constant 64 : index
    %c0_20 = arith.constant 0 : index
    %22 = vector.load %arg10[%c64, %c0_20] : memref<144x128xbf16, #tpu.memory_space<vmem>>, vector<16x128xbf16>
    tpu.vector_store %arg10[%c64, %c0_20], %21 {strides = array<i32>} : memref<144x128xbf16, #tpu.memory_space<vmem>>, vector<16x128xbf16>,
    %c0_21 = arith.constant 0 : index
    %c0_22 = arith.constant 0 : index
    %c0_23 = arith.constant 0 : index
    %c129 = arith.constant 129 : index
    %23 = vector.load %arg2[%c0_21, %c0_22, %c0_23, %c129] : memref<1x1x16x267xf32, #tpu.memory_space<vmem>>, vector<1x1x16x128xf32>
    %24 = vector.shape_cast %23 : vector<1x1x16x128xf32> to vector<16x128xf32>
    %25 = arith.truncf %24 : vector<16x128xf32> to vector<16x128xbf16>
    %c80 = arith.constant 80 : index
    %c0_24 = arith.constant 0 : index
    %26 = vector.load %arg10[%c80, %c0_24] : memref<144x128xbf16, #tpu.memory_space<vmem>>, vector<16x128xbf16>
    tpu.vector_store %arg10[%c80, %c0_24], %25 {strides = array<i32>} : memref<144x128xbf16, #tpu.memory_space<vmem>>, vector<16x128xbf16>,
    %c0_25 = arith.constant 0 : index
    %c0_26 = arith.constant 0 : index
    %c0_27 = arith.constant 0 : index
    %c137 = arith.constant 137 : index
    %27 = vector.load %arg2[%c0_25, %c0_26, %c0_27, %c137] : memref<1x1x16x267xf32, #tpu.memory_space<vmem>>, vector<1x1x16x128xf32>
    %28 = vector.shape_cast %27 : vector<1x1x16x128xf32> to vector<16x128xf32>
    %29 = arith.truncf %28 : vector<16x128xf32> to vector<16x128xbf16>
    %c96 = arith.constant 96 : index
    %c0_28 = arith.constant 0 : index
    %30 = vector.load %arg10[%c96, %c0_28] : memref<144x128xbf16, #tpu.memory_space<vmem>>, vector<16x128xbf16>
    tpu.vector_store %arg10[%c96, %c0_28], %29 {strides = array<i32>} : memref<144x128xbf16, #tpu.memory_space<vmem>>, vector<16x128xbf16>,
    %c0_29 = arith.constant 0 : index
    %c0_30 = arith.constant 0 : index
    %c0_31 = arith.constant 0 : index
    %c138 = arith.constant 138 : index
    %31 = vector.load %arg2[%c0_29, %c0_30, %c0_31, %c138] : memref<1x1x16x267xf32, #tpu.memory_space<vmem>>, vector<1x1x16x128xf32>
    %32 = vector.shape_cast %31 : vector<1x1x16x128xf32> to vector<16x128xf32>
    %33 = arith.truncf %32 : vector<16x128xf32> to vector<16x128xbf16>
    %c112 = arith.constant 112 : index
    %c0_32 = arith.constant 0 : index
    %34 = vector.load %arg10[%c112, %c0_32] : memref<144x128xbf16, #tpu.memory_space<vmem>>, vector<16x128xbf16>
    tpu.vector_store %arg10[%c112, %c0_32], %33 {strides = array<i32>} : memref<144x128xbf16, #tpu.memory_space<vmem>>, vector<16x128xbf16>,
    %c0_33 = arith.constant 0 : index
    %c0_34 = arith.constant 0 : index
    %c0_35 = arith.constant 0 : index
    %c139 = arith.constant 139 : index
    %35 = vector.load %arg2[%c0_33, %c0_34, %c0_35, %c139] : memref<1x1x16x267xf32, #tpu.memory_space<vmem>>, vector<1x1x16x128xf32>
    %36 = vector.shape_cast %35 : vector<1x1x16x128xf32> to vector<16x128xf32>
    %37 = arith.truncf %36 : vector<16x128xf32> to vector<16x128xbf16>
    %c128_36 = arith.constant 128 : index
    %c0_37 = arith.constant 0 : index
    %38 = vector.load %arg10[%c128_36, %c0_37] : memref<144x128xbf16, #tpu.memory_space<vmem>>, vector<16x128xbf16>
    tpu.vector_store %arg10[%c128_36, %c0_37], %37 {strides = array<i32>} : memref<144x128xbf16, #tpu.memory_space<vmem>>, vector<16x128xbf16>,
    %c0_38 = arith.constant 0 : index
    %c0_39 = arith.constant 0 : index
    %39 = vector.load %arg3[%c0_38, %c0_39] : memref<48x144xbf16, #tpu.memory_space<vmem>>, vector<48x144xbf16>
    %c0_40 = arith.constant 0 : index
    %c0_41 = arith.constant 0 : index
    %40 = vector.load %arg10[%c0_40, %c0_41] : memref<144x128xbf16, #tpu.memory_space<vmem>>, vector<144x128xbf16>
    %cst = arith.constant dense<0.000000e+00> : vector<48x128xf32>
    %41 = tpu.matmul %39, %40, %cst {dimension_numbers = #tpu.dot_dimension_numbers<[1], [0], [0], [1], [0, 0, 1, 1], [], []>} : vector<48x144xbf16>, vector<144x128xbf16>, vector<48x128xf32> -> vector<48x128xf32>
    %c0_42 = arith.constant 0 : index
    %c0_43 = arith.constant 0 : index
    %42 = vector.load %arg6[%c0_42, %c0_43] : memref<48x1xf32, #tpu.memory_space<vmem>>, vector<48x1xf32>
    %43 = vector.broadcast %42 : vector<48x1xf32> to vector<48x128xf32>
    %44 = arith.addf %41, %43 : vector<48x128xf32>
    %c0_44 = arith.constant 0 : index
    %c128_45 = arith.constant 128 : index
    %45 = vector.load %arg9[%c0_44, %c128_45] : memref<16x267xf32, #tpu.memory_space<vmem>>, vector<16x128xf32>
    %c0_46 = arith.constant 0 : index
    %c117_47 = arith.constant 117 : index
    %46 = vector.load %arg9[%c0_46, %c117_47] : memref<16x267xf32, #tpu.memory_space<vmem>>, vector<16x128xf32>
    %47 = arith.truncf %46 : vector<16x128xf32> to vector<16x128xbf16>
    %c0_48 = arith.constant 0 : index
    %c0_49 = arith.constant 0 : index
    %48 = vector.load %arg10[%c0_48, %c0_49] : memref<144x128xbf16, #tpu.memory_space<vmem>>, vector<16x128xbf16>
    tpu.vector_store %arg10[%c0_48, %c0_49], %47 {strides = array<i32>} : memref<144x128xbf16, #tpu.memory_space<vmem>>, vector<16x128xbf16>,
    %c0_50 = arith.constant 0 : index
    %c118_51 = arith.constant 118 : index
    %49 = vector.load %arg9[%c0_50, %c118_51] : memref<16x267xf32, #tpu.memory_space<vmem>>, vector<16x128xf32>
    %50 = arith.truncf %49 : vector<16x128xf32> to vector<16x128xbf16>
    %c16_52 = arith.constant 16 : index
    %c0_53 = arith.constant 0 : index
    %51 = vector.load %arg10[%c16_52, %c0_53] : memref<144x128xbf16, #tpu.memory_space<vmem>>, vector<16x128xbf16>
    tpu.vector_store %arg10[%c16_52, %c0_53], %50 {strides = array<i32>} : memref<144x128xbf16, #tpu.memory_space<vmem>>, vector<16x128xbf16>,
    %c0_54 = arith.constant 0 : index
    %c119_55 = arith.constant 119 : index
    %52 = vector.load %arg9[%c0_54, %c119_55] : memref<16x267xf32, #tpu.memory_space<vmem>>, vector<16x128xf32>
    %53 = arith.truncf %52 : vector<16x128xf32> to vector<16x128xbf16>
    %c32_56 = arith.constant 32 : index
    %c0_57 = arith.constant 0 : index
    %54 = vector.load %arg10[%c32_56, %c0_57] : memref<144x128xbf16, #tpu.memory_space<vmem>>, vector<16x128xbf16>
    tpu.vector_store %arg10[%c32_56, %c0_57], %53 {strides = array<i32>} : memref<144x128xbf16, #tpu.memory_space<vmem>>, vector<16x128xbf16>,
    %c0_58 = arith.constant 0 : index
    %c127_59 = arith.constant 127 : index
    %55 = vector.load %arg9[%c0_58, %c127_59] : memref<16x267xf32, #tpu.memory_space<vmem>>, vector<16x128xf32>
    %56 = arith.truncf %55 : vector<16x128xf32> to vector<16x128xbf16>
    %c48_60 = arith.constant 48 : index
    %c0_61 = arith.constant 0 : index
    %57 = vector.load %arg10[%c48_60, %c0_61] : memref<144x128xbf16, #tpu.memory_space<vmem>>, vector<16x128xbf16>
    tpu.vector_store %arg10[%c48_60, %c0_61], %56 {strides = array<i32>} : memref<144x128xbf16, #tpu.memory_space<vmem>>, vector<16x128xbf16>,
    %c0_62 = arith.constant 0 : index
    %c128_63 = arith.constant 128 : index
    %58 = vector.load %arg9[%c0_62, %c128_63] : memref<16x267xf32, #tpu.memory_space<vmem>>, vector<16x128xf32>
    %59 = arith.truncf %58 : vector<16x128xf32> to vector<16x128xbf16>
    %c64_64 = arith.constant 64 : index
    %c0_65 = arith.constant 0 : index
    %60 = vector.load %arg10[%c64_64, %c0_65] : memref<144x128xbf16, #tpu.memory_space<vmem>>, vector<16x128xbf16>
    tpu.vector_store %arg10[%c64_64, %c0_65], %59 {strides = array<i32>} : memref<144x128xbf16, #tpu.memory_space<vmem>>, vector<16x128xbf16>,
    %c0_66 = arith.constant 0 : index
    %c129_67 = arith.constant 129 : index
    %61 = vector.load %arg9[%c0_66, %c129_67] : memref<16x267xf32, #tpu.memory_space<vmem>>, vector<16x128xf32>
    %62 = arith.truncf %61 : vector<16x128xf32> to vector<16x128xbf16>
    %c80_68 = arith.constant 80 : index
    %c0_69 = arith.constant 0 : index
    %63 = vector.load %arg10[%c80_68, %c0_69] : memref<144x128xbf16, #tpu.memory_space<vmem>>, vector<16x128xbf16>
    tpu.vector_store %arg10[%c80_68, %c0_69], %62 {strides = array<i32>} : memref<144x128xbf16, #tpu.memory_space<vmem>>, vector<16x128xbf16>,
    %c0_70 = arith.constant 0 : index
    %c137_71 = arith.constant 137 : index
    %64 = vector.load %arg9[%c0_70, %c137_71] : memref<16x267xf32, #tpu.memory_space<vmem>>, vector<16x128xf32>
    %65 = arith.truncf %64 : vector<16x128xf32> to vector<16x128xbf16>
    %c96_72 = arith.constant 96 : index
    %c0_73 = arith.constant 0 : index
    %66 = vector.load %arg10[%c96_72, %c0_73] : memref<144x128xbf16, #tpu.memory_space<vmem>>, vector<16x128xbf16>
    tpu.vector_store %arg10[%c96_72, %c0_73], %65 {strides = array<i32>} : memref<144x128xbf16, #tpu.memory_space<vmem>>, vector<16x128xbf16>,
    %c0_74 = arith.constant 0 : index
    %c138_75 = arith.constant 138 : index
    %67 = vector.load %arg9[%c0_74, %c138_75] : memref<16x267xf32, #tpu.memory_space<vmem>>, vector<16x128xf32>
    %68 = arith.truncf %67 : vector<16x128xf32> to vector<16x128xbf16>
    %c112_76 = arith.constant 112 : index
    %c0_77 = arith.constant 0 : index
    %69 = vector.load %arg10[%c112_76, %c0_77] : memref<144x128xbf16, #tpu.memory_space<vmem>>, vector<16x128xbf16>
    tpu.vector_store %arg10[%c112_76, %c0_77], %68 {strides = array<i32>} : memref<144x128xbf16, #tpu.memory_space<vmem>>, vector<16x128xbf16>,
    %c0_78 = arith.constant 0 : index
    %c139_79 = arith.constant 139 : index
    %70 = vector.load %arg9[%c0_78, %c139_79] : memref<16x267xf32, #tpu.memory_space<vmem>>, vector<16x128xf32>
    %71 = arith.truncf %70 : vector<16x128xf32> to vector<16x128xbf16>
    %c128_80 = arith.constant 128 : index
    %c0_81 = arith.constant 0 : index
    %72 = vector.load %arg10[%c128_80, %c0_81] : memref<144x128xbf16, #tpu.memory_space<vmem>>, vector<16x128xbf16>
    tpu.vector_store %arg10[%c128_80, %c0_81], %71 {strides = array<i32>} : memref<144x128xbf16, #tpu.memory_space<vmem>>, vector<16x128xbf16>,
    %73 = vector.extract_strided_slice %44 {offsets = [0, 0], sizes = [32, 128], strides = [1, 1]} : vector<48x128xf32> to vector<32x128xf32>
    %c0_82 = arith.constant 0 : index
    %c0_83 = arith.constant 0 : index
    %74 = vector.load %arg4[%c0_82, %c0_83] : memref<32x144xbf16, #tpu.memory_space<vmem>>, vector<32x144xbf16>
    %c0_84 = arith.constant 0 : index
    %c0_85 = arith.constant 0 : index
    %75 = vector.load %arg10[%c0_84, %c0_85] : memref<144x128xbf16, #tpu.memory_space<vmem>>, vector<144x128xbf16>
    %cst_86 = arith.constant dense<0.000000e+00> : vector<32x128xf32>
    %76 = tpu.matmul %74, %75, %cst_86 {dimension_numbers = #tpu.dot_dimension_numbers<[1], [0], [0], [1], [0, 0, 1, 1], [], []>} : vector<32x144xbf16>, vector<144x128xbf16>, vector<32x128xf32> -> vector<32x128xf32>
    %77 = arith.addf %73, %76 : vector<32x128xf32>
    %78 = arith.negf %77 : vector<32x128xf32>
    %79 = math.exp %78 : vector<32x128xf32>
    %cst_87 = arith.constant 1.000000e+00 : f32
    %80 = vector.broadcast %cst_87 : f32 to vector<32x128xf32>
    %81 = arith.addf %80, %79 : vector<32x128xf32>
    %82 = arith.divf %80, %81 : vector<32x128xf32>
    %83 = vector.extract_strided_slice %82 {offsets = [0, 0], sizes = [16, 128], strides = [1, 1]} : vector<32x128xf32> to vector<16x128xf32>
    %84 = vector.extract_strided_slice %82 {offsets = [16, 0], sizes = [16, 128], strides = [1, 1]} : vector<32x128xf32> to vector<16x128xf32>
    %85 = arith.mulf %45, %84 : vector<16x128xf32>
    %c0_88 = arith.constant 0 : index
    %c128_89 = arith.constant 128 : index
    %86 = vector.load %arg9[%c0_88, %c128_89] : memref<16x267xf32, #tpu.memory_space<vmem>>, vector<16x128xf32>
    tpu.vector_store %arg9[%c0_88, %c128_89], %85 {strides = array<i32>} : memref<16x267xf32, #tpu.memory_space<vmem>>, vector<16x128xf32>,
    %c0_90 = arith.constant 0 : index
    %c117_91 = arith.constant 117 : index
    %87 = vector.load %arg9[%c0_90, %c117_91] : memref<16x267xf32, #tpu.memory_space<vmem>>, vector<16x128xf32>
    %88 = arith.truncf %87 : vector<16x128xf32> to vector<16x128xbf16>
    %c0_92 = arith.constant 0 : index
    %c0_93 = arith.constant 0 : index
    %89 = vector.load %arg10[%c0_92, %c0_93] : memref<144x128xbf16, #tpu.memory_space<vmem>>, vector<16x128xbf16>
    tpu.vector_store %arg10[%c0_92, %c0_93], %88 {strides = array<i32>} : memref<144x128xbf16, #tpu.memory_space<vmem>>, vector<16x128xbf16>,
    %c0_94 = arith.constant 0 : index
    %c118_95 = arith.constant 118 : index
    %90 = vector.load %arg9[%c0_94, %c118_95] : memref<16x267xf32, #tpu.memory_space<vmem>>, vector<16x128xf32>
    %91 = arith.truncf %90 : vector<16x128xf32> to vector<16x128xbf16>
    %c16_96 = arith.constant 16 : index
    %c0_97 = arith.constant 0 : index
    %92 = vector.load %arg10[%c16_96, %c0_97] : memref<144x128xbf16, #tpu.memory_space<vmem>>, vector<16x128xbf16>
    tpu.vector_store %arg10[%c16_96, %c0_97], %91 {strides = array<i32>} : memref<144x128xbf16, #tpu.memory_space<vmem>>, vector<16x128xbf16>,
    %c0_98 = arith.constant 0 : index
    %c119_99 = arith.constant 119 : index
    %93 = vector.load %arg9[%c0_98, %c119_99] : memref<16x267xf32, #tpu.memory_space<vmem>>, vector<16x128xf32>
    %94 = arith.truncf %93 : vector<16x128xf32> to vector<16x128xbf16>
    %c32_100 = arith.constant 32 : index
    %c0_101 = arith.constant 0 : index
    %95 = vector.load %arg10[%c32_100, %c0_101] : memref<144x128xbf16, #tpu.memory_space<vmem>>, vector<16x128xbf16>
    tpu.vector_store %arg10[%c32_100, %c0_101], %94 {strides = array<i32>} : memref<144x128xbf16, #tpu.memory_space<vmem>>, vector<16x128xbf16>,
    %c0_102 = arith.constant 0 : index
    %c127_103 = arith.constant 127 : index
    %96 = vector.load %arg9[%c0_102, %c127_103] : memref<16x267xf32, #tpu.memory_space<vmem>>, vector<16x128xf32>
    %97 = arith.truncf %96 : vector<16x128xf32> to vector<16x128xbf16>
    %c48_104 = arith.constant 48 : index
    %c0_105 = arith.constant 0 : index
    %98 = vector.load %arg10[%c48_104, %c0_105] : memref<144x128xbf16, #tpu.memory_space<vmem>>, vector<16x128xbf16>
    tpu.vector_store %arg10[%c48_104, %c0_105], %97 {strides = array<i32>} : memref<144x128xbf16, #tpu.memory_space<vmem>>, vector<16x128xbf16>,
    %c0_106 = arith.constant 0 : index
    %c128_107 = arith.constant 128 : index
    %99 = vector.load %arg9[%c0_106, %c128_107] : memref<16x267xf32, #tpu.memory_space<vmem>>, vector<16x128xf32>
    %100 = arith.truncf %99 : vector<16x128xf32> to vector<16x128xbf16>
    %c64_108 = arith.constant 64 : index
    %c0_109 = arith.constant 0 : index
    %101 = vector.load %arg10[%c64_108, %c0_109] : memref<144x128xbf16, #tpu.memory_space<vmem>>, vector<16x128xbf16>
    tpu.vector_store %arg10[%c64_108, %c0_109], %100 {strides = array<i32>} : memref<144x128xbf16, #tpu.memory_space<vmem>>, vector<16x128xbf16>,
    %c0_110 = arith.constant 0 : index
    %c129_111 = arith.constant 129 : index
    %102 = vector.load %arg9[%c0_110, %c129_111] : memref<16x267xf32, #tpu.memory_space<vmem>>, vector<16x128xf32>
    %103 = arith.truncf %102 : vector<16x128xf32> to vector<16x128xbf16>
    %c80_112 = arith.constant 80 : index
    %c0_113 = arith.constant 0 : index
    %104 = vector.load %arg10[%c80_112, %c0_113] : memref<144x128xbf16, #tpu.memory_space<vmem>>, vector<16x128xbf16>
    tpu.vector_store %arg10[%c80_112, %c0_113], %103 {strides = array<i32>} : memref<144x128xbf16, #tpu.memory_space<vmem>>, vector<16x128xbf16>,
    %c0_114 = arith.constant 0 : index
    %c137_115 = arith.constant 137 : index
    %105 = vector.load %arg9[%c0_114, %c137_115] : memref<16x267xf32, #tpu.memory_space<vmem>>, vector<16x128xf32>
    %106 = arith.truncf %105 : vector<16x128xf32> to vector<16x128xbf16>
    %c96_116 = arith.constant 96 : index
    %c0_117 = arith.constant 0 : index
    %107 = vector.load %arg10[%c96_116, %c0_117] : memref<144x128xbf16, #tpu.memory_space<vmem>>, vector<16x128xbf16>
    tpu.vector_store %arg10[%c96_116, %c0_117], %106 {strides = array<i32>} : memref<144x128xbf16, #tpu.memory_space<vmem>>, vector<16x128xbf16>,
    %c0_118 = arith.constant 0 : index
    %c138_119 = arith.constant 138 : index
    %108 = vector.load %arg9[%c0_118, %c138_119] : memref<16x267xf32, #tpu.memory_space<vmem>>, vector<16x128xf32>
    %109 = arith.truncf %108 : vector<16x128xf32> to vector<16x128xbf16>
    %c112_120 = arith.constant 112 : index
    %c0_121 = arith.constant 0 : index
    %110 = vector.load %arg10[%c112_120, %c0_121] : memref<144x128xbf16, #tpu.memory_space<vmem>>, vector<16x128xbf16>
    tpu.vector_store %arg10[%c112_120, %c0_121], %109 {strides = array<i32>} : memref<144x128xbf16, #tpu.memory_space<vmem>>, vector<16x128xbf16>,
    %c0_122 = arith.constant 0 : index
    %c139_123 = arith.constant 139 : index
    %111 = vector.load %arg9[%c0_122, %c139_123] : memref<16x267xf32, #tpu.memory_space<vmem>>, vector<16x128xf32>
    %112 = arith.truncf %111 : vector<16x128xf32> to vector<16x128xbf16>
    %c128_124 = arith.constant 128 : index
    %c0_125 = arith.constant 0 : index
    %113 = vector.load %arg10[%c128_124, %c0_125] : memref<144x128xbf16, #tpu.memory_space<vmem>>, vector<16x128xbf16>
    tpu.vector_store %arg10[%c128_124, %c0_125], %112 {strides = array<i32>} : memref<144x128xbf16, #tpu.memory_space<vmem>>, vector<16x128xbf16>,
    %114 = vector.extract_strided_slice %44 {offsets = [32, 0], sizes = [16, 128], strides = [1, 1]} : vector<48x128xf32> to vector<16x128xf32>
    %c0_126 = arith.constant 0 : index
    %c0_127 = arith.constant 0 : index
    %115 = vector.load %arg5[%c0_126, %c0_127] : memref<16x144xbf16, #tpu.memory_space<vmem>>, vector<16x144xbf16>
    %c0_128 = arith.constant 0 : index
    %c0_129 = arith.constant 0 : index
    %116 = vector.load %arg10[%c0_128, %c0_129] : memref<144x128xbf16, #tpu.memory_space<vmem>>, vector<144x128xbf16>
    %cst_130 = arith.constant dense<0.000000e+00> : vector<16x128xf32>
    %117 = tpu.matmul %115, %116, %cst_130 {dimension_numbers = #tpu.dot_dimension_numbers<[1], [0], [0], [1], [0, 0, 1, 1], [], []>} : vector<16x144xbf16>, vector<144x128xbf16>, vector<16x128xf32> -> vector<16x128xf32>
    %118 = arith.addf %114, %117 : vector<16x128xf32>
    %119 = math.tanh %118 : vector<16x128xf32>
    %cst_131 = arith.constant 1.000000e+00 : f32
    %120 = vector.broadcast %cst_131 : f32 to vector<16x128xf32>
    %121 = arith.subf %120, %83 : vector<16x128xf32>
    %122 = arith.mulf %45, %121 : vector<16x128xf32>
    %123 = arith.mulf %119, %83 : vector<16x128xf32>
    %124 = arith.addf %122, %123 : vector<16x128xf32>
    %c0_132 = arith.constant 0 : index
    %c0_133 = arith.constant 0 : index
    %125 = vector.load %arg7[%c0_132, %c0_133] : memref<1x128xf32, #tpu.memory_space<vmem>>, vector<1x128xf32>
    %126 = vector.broadcast %125 : vector<1x128xf32> to vector<16x128xf32>
    %127 = arith.mulf %124, %126 : vector<16x128xf32>
    %c0_134 = arith.constant 0 : index
    %c0_135 = arith.constant 0 : index
    %c0_136 = arith.constant 0 : index
    %c0_137 = arith.constant 0 : index
    %128 = vector.load %arg8[%c0_134, %c0_135, %c0_136, %c0_137] : memref<1x1x16x128xf32, #tpu.memory_space<vmem>>, vector<1x1x16x128xf32>
    %129 = vector.shape_cast %128 : vector<1x1x16x128xf32> to vector<16x128xf32>
    %130 = vector.shape_cast %127 : vector<16x128xf32> to vector<1x1x16x128xf32>
    tpu.vector_store %arg8[%c0_134, %c0_135, %c0_136, %c0_137], %130 {strides = array<i32>} : memref<1x1x16x128xf32, #tpu.memory_space<vmem>>, vector<1x1x16x128xf32>,
    %c0_138 = arith.constant 0 : index
    %c128_139 = arith.constant 128 : index
    %131 = vector.load %arg9[%c0_138, %c128_139] : memref<16x267xf32, #tpu.memory_space<vmem>>, vector<16x128xf32>
    tpu.vector_store %arg9[%c0_138, %c128_139], %127 {strides = array<i32>} : memref<16x267xf32, #tpu.memory_space<vmem>>, vector<16x128xf32>,
    return
  }
  func.func @transform_0(%arg0: i32, %arg1: i32) -> (i32, i32, i32, i32) {
    %c0_i32 = arith.constant 0 : i32
    %c0_i32_0 = arith.constant 0 : i32
    %c0_i32_1 = arith.constant 0 : i32
    return %arg0, %arg1, %c0_i32, %c0_i32_0 : i32, i32, i32, i32
  }
  func.func @transform_1(%arg0: i32, %arg1: i32) -> (i32, i32) {
    %c0_i32 = arith.constant 0 : i32
    %c0_i32_0 = arith.constant 0 : i32
    %c0_i32_1 = arith.constant 0 : i32
    return %c0_i32, %c0_i32_0 : i32, i32
  }
  func.func @transform_2(%arg0: i32, %arg1: i32) -> (i32, i32) {
    %c0_i32 = arith.constant 0 : i32
    %c0_i32_0 = arith.constant 0 : i32
    %c0_i32_1 = arith.constant 0 : i32
    return %c0_i32, %c0_i32_0 : i32, i32
  }
  func.func @transform_3(%arg0: i32, %arg1: i32) -> (i32, i32) {
    %c0_i32 = arith.constant 0 : i32
    %c0_i32_0 = arith.constant 0 : i32
    %c0_i32_1 = arith.constant 0 : i32
    return %c0_i32, %c0_i32_0 : i32, i32
  }
  func.func @transform_4(%arg0: i32, %arg1: i32) -> (i32, i32) {
    %c0_i32 = arith.constant 0 : i32
    %c0_i32_0 = arith.constant 0 : i32
    %c0_i32_1 = arith.constant 0 : i32
    return %c0_i32, %c0_i32_0 : i32, i32
  }
  func.func @transform_5(%arg0: i32, %arg1: i32) -> (i32, i32) {
    %c0_i32 = arith.constant 0 : i32
    %c0_i32_0 = arith.constant 0 : i32
    %c0_i32_1 = arith.constant 0 : i32
    return %c0_i32, %c0_i32_0 : i32, i32
  }
  func.func @transform_6(%arg0: i32, %arg1: i32) -> (i32, i32, i32, i32) {
    %c0_i32 = arith.constant 0 : i32
    %c0_i32_0 = arith.constant 0 : i32
    %c0_i32_1 = arith.constant 0 : i32
    return %arg0, %arg1, %c0_i32, %c0_i32_0 : i32, i32, i32, i32
  }
}

</mosaic_0001>

<llo_original>
// kernel: encoder_forward.2
$region0: #{encoder_forward.2}
  #allocation0 [shape = 'u32[]', space=smem, size = 0x4, offset = 0x4, fixed_abs, tag = 'smem constant byte address 0x4 - core index']
  #allocation1 [shape = 'u32[144,128]{1,0:T(1,128)}', space=vmem, size = 0x12000, scoped, tag = 'internal scratch']
  #allocation2 [shape = 'f32[4,531]{1,0:T(4,128)}', space=vmem, size = 0x2800, scoped, tag = 'scratch operand']
  #allocation3 [shape = 'bf16[36,384]{1,0:T(8,128)(2,1)}', space=vmem, size = 0x7800, scoped, tag = 'scratch operand']
  %s0 = inlined_call_operand.vmem [shape: f32[2,4,4,531], index: 0, kind: input, shape index: {}]
  %s1 = inlined_call_operand.vmem [shape: bf16[12,36], index: 1, kind: input, shape index: {}]
  %s2 = inlined_call_operand.vmem [shape: bf16[8,36], index: 2, kind: input, shape index: {}]
  %s3 = inlined_call_operand.vmem [shape: bf16[4,36], index: 3, kind: input, shape index: {}]
  %s4 = inlined_call_operand.vmem [shape: f32[12,1], index: 4, kind: input, shape index: {}]
  %s5 = inlined_call_operand.vmem [shape: f32[1,384], index: 5, kind: input, shape index: {}]
  %s6 = inlined_call_operand.vmem [shape: f32[2,4,4,384], index: 6, kind: output, shape index: {}]
  %s7 = sld [smem:[#allocation0]]
  $region61: #{encoder_forward.2} parent=0
    _
  %s9 = ssub.s32 1, %s7
  %s10 = scalar_select 0, %s9, %s7
  loop: start=0, step=1, limit=10
  $region2: #{encoder_forward.2} parent=0 // loop_pre_header
    _
  $region3: #{encoder_forward.2} parent=0 // loop_header
    %s12 = sphi 0, %s16
    %p13 = scmp.ge.s32.totalorder %s12, 10
    %s19 = sphi 0, %s31
    %s20 = sphi 0, %s27
    %s21 = sphi 0, %s19
    %s22 = sphi 0, %s20
    %s23 = sphi 0, %s21
    %s24 = sphi 0, %s22
    %s36 = sphi 0, %s38
    %s39 = sphi 0, %s36
    %s40 = sphi 0, %s39
    %s56 = sphi 0, %s40
    %s60 = sphi 0, %s60
    %s62 = sphi 0, %s60
    %s63 = sphi 0, %s62
    %s77 = sphi 0, %s63
    %s81 = sphi 0, %s81
    %s83 = sphi 0, %s81
    %s84 = sphi 0, %s83
    %s98 = sphi 0, %s84
    %s102 = sphi 0, %s102
    %s104 = sphi 0, %s102
    %s105 = sphi 0, %s104
    %s119 = sphi 0, %s105
    %s123 = sphi 0, %s123
    %s125 = sphi 0, %s123
    %s126 = sphi 0, %s125
    %s140 = sphi 0, %s126
    %s144 = sphi 0, %s144
    %s146 = sphi 0, %s144
    %s147 = sphi 0, %s146
    %s161 = sphi 0, %s147
    %s169 = sphi 0, %s171
    %s172 = sphi 0, %s169
    %s173 = sphi 0, %s172
    %s189 = sphi 0, %s173
  $region4: #{encoder_forward.2} parent=0 // loop_header_branch
    %15 = sbr.rel (%p13) target = $region8
  $region5: #{encoder_forward.2} parent=0 // loop_body
    %s17 = ssub.s32 %s12, 1
    %s18 = ssub.s32 %s12, 2
    %s25 = sadd.s32 1, %s20
    %p26 = scmp.ge.s32.totalorder %s25, 4
    %s27 = scalar_select %p26, 0, %s25
    %s28 = sadd.s32 1, %s19
    %s29 = scalar_select %p26, %s28, %s19
    %p30 = scmp.ge.s32.totalorder %s29, 2
    %s31 = scalar_select %p30, 0, %s29
    %s32 = ssub.s32 %s19, %s31
    %s33 = ssub.s32 %s20, %s27
    %s34 = sor.u32 %s32, %s33
    %p35 = scmp.eq.s32.totalorder %s34, 0
    %s37 = sadd.s32 %s36, 1
    %s38 = scalar_select %p35, %s36, %s37
    %p41 = pneg %p35
    %p42 = scmp.eq.s32.totalorder %s12, 7
    %p43 = por %p41, %p42
    %p44 = scmp.ne.s32.totalorder %s36, %s39
    %p45 = scmp.eq.s32.totalorder %s12, 0
    %p46 = por %p44, %p45
    %p47 = scmp.ne.s32.totalorder %s36, %s39
    %p48 = scmp.eq.s32.totalorder %s17, 7
    %p49 = por %p47, %p48
    %p50 = scmp.ne.s32.totalorder %s39, %s40
    %p51 = scmp.eq.s32.totalorder %s17, 0
    %p52 = por %p50, %p51
    %p53 = scmp.ne.s32.totalorder %s39, %s40
    %p54 = scmp.eq.s32.totalorder %s18, 7
    %p55 = por %p53, %p54
    %p57 = scmp.ne.s32.totalorder %s40, %s56
    %p58 = scmp.eq.s32.totalorder %s18, 0
    %p59 = por %p57, %p58
    %s61 = sadd.s32 %s60, 1
    %p64 = scmp.eq.s32.totalorder %s12, 7
    %p65 = scmp.ne.s32.totalorder %s60, %s62
    %p66 = scmp.eq.s32.totalorder %s12, 0
    %p67 = por %p65, %p66
    %p68 = scmp.ne.s32.totalorder %s60, %s62
    %p69 = scmp.eq.s32.totalorder %s17, 7
    %p70 = por %p68, %p69
    %p71 = scmp.ne.s32.totalorder %s62, %s63
    %p72 = scmp.eq.s32.totalorder %s17, 0
    %p73 = por %p71, %p72
    %p74 = scmp.ne.s32.totalorder %s62, %s63
    %p75 = scmp.eq.s32.totalorder %s18, 7
    %p76 = por %p74, %p75
    %p78 = scmp.ne.s32.totalorder %s63, %s77
    %p79 = scmp.eq.s32.totalorder %s18, 0
    %p80 = por %p78, %p79
    %s82 = sadd.s32 %s81, 1
    %p85 = scmp.eq.s32.totalorder %s12, 7
    %p86 = scmp.ne.s32.totalorder %s81, %s83
    %p87 = scmp.eq.s32.totalorder %s12, 0
    %p88 = por %p86, %p87
    %p89 = scmp.ne.s32.totalorder %s81, %s83
    %p90 = scmp.eq.s32.totalorder %s17, 7
    %p91 = por %p89, %p90
    %p92 = scmp.ne.s32.totalorder %s83, %s84
    %p93 = scmp.eq.s32.totalorder %s17, 0
    %p94 = por %p92, %p93
    %p95 = scmp.ne.s32.totalorder %s83, %s84
    %p96 = scmp.eq.s32.totalorder %s18, 7
    %p97 = por %p95, %p96
    %p99 = scmp.ne.s32.totalorder %s84, %s98
    %p100 = scmp.eq.s32.totalorder %s18, 0
    %p101 = por %p99, %p100
    %s103 = sadd.s32 %s102, 1
    %p106 = scmp.eq.s32.totalorder %s12, 7
    %p107 = scmp.ne.s32.totalorder %s102, %s104
    %p108 = scmp.eq.s32.totalorder %s12, 0
    %p109 = por %p107, %p108
    %p110 = scmp.ne.s32.totalorder %s102, %s104
    %p111 = scmp.eq.s32.totalorder %s17, 7
    %p112 = por %p110, %p111
    %p113 = scmp.ne.s32.totalorder %s104, %s105
    %p114 = scmp.eq.s32.totalorder %s17, 0
    %p115 = por %p113, %p114
    %p116 = scmp.ne.s32.totalorder %s104, %s105
    %p117 = scmp.eq.s32.totalorder %s18, 7
    %p118 = por %p116, %p117
    %p120 = scmp.ne.s32.totalorder %s105, %s119
    %p121 = scmp.eq.s32.totalorder %s18, 0
    %p122 = por %p120, %p121
    %s124 = sadd.s32 %s123, 1
    %p127 = scmp.eq.s32.totalorder %s12, 7
    %p128 = scmp.ne.s32.totalorder %s123, %s125
    %p129 = scmp.eq.s32.totalorder %s12, 0
    %p130 = por %p128, %p129
    %p131 = scmp.ne.s32.totalorder %s123, %s125
    %p132 = scmp.eq.s32.totalorder %s17, 7
    %p133 = por %p131, %p132
    %p134 = scmp.ne.s32.totalorder %s125, %s126
    %p135 = scmp.eq.s32.totalorder %s17, 0
    %p136 = por %p134, %p135
    %p137 = scmp.ne.s32.totalorder %s125, %s126
    %p138 = scmp.eq.s32.totalorder %s18, 7
    %p139 = por %p137, %p138
    %p141 = scmp.ne.s32.totalorder %s126, %s140
    %p142 = scmp.eq.s32.totalorder %s18, 0
    %p143 = por %p141, %p142
    %s145 = sadd.s32 %s144, 1
    %p148 = scmp.eq.s32.totalorder %s12, 7
    %p149 = scmp.ne.s32.totalorder %s144, %s146
    %p150 = scmp.eq.s32.totalorder %s12, 0
    %p151 = por %p149, %p150
    %p152 = scmp.ne.s32.totalorder %s144, %s146
    %p153 = scmp.eq.s32.totalorder %s17, 7
    %p154 = por %p152, %p153
    %p155 = scmp.ne.s32.totalorder %s146, %s147
    %p156 = scmp.eq.s32.totalorder %s17, 0
    %p157 = por %p155, %p156
    %p158 = scmp.ne.s32.totalorder %s146, %s147
    %p159 = scmp.eq.s32.totalorder %s18, 7
    %p160 = por %p158, %p159
    %p162 = scmp.ne.s32.totalorder %s147, %s161
    %p163 = scmp.eq.s32.totalorder %s18, 0
    %p164 = por %p162, %p163
    %s165 = ssub.s32 %s19, %s31
    %s166 = ssub.s32 %s20, %s27
    %s167 = sor.u32 %s165, %s166
    %p168 = scmp.eq.s32.totalorder %s167, 0
    %s170 = sadd.s32 %s169, 1
    %s171 = scalar_select %p168, %s169, %s170
    %p174 = pneg %p168
    %p175 = scmp.eq.s32.totalorder %s12, 7
    %p176 = por %p174, %p175
    %p177 = scmp.ne.s32.totalorder %s169, %s172
    %p178 = scmp.eq.s32.totalorder %s12, 0
    %p179 = por %p177, %p178
    %p180 = scmp.ne.s32.totalorder %s169, %s172
    %p181 = scmp.eq.s32.totalorder %s17, 7
    %p182 = por %p180, %p181
    %p183 = scmp.ne.s32.totalorder %s172, %s173
    %p184 = scmp.eq.s32.totalorder %s17, 0
    %p185 = por %p183, %p184
    %p186 = scmp.ne.s32.totalorder %s172, %s173
    %p187 = scmp.eq.s32.totalorder %s18, 7
    %p188 = por %p186, %p187
    %p190 = scmp.ne.s32.totalorder %s173, %s189
    %p191 = scmp.eq.s32.totalorder %s18, 0
    %p192 = por %p190, %p191
    %p193 = scmp.le.s32.totalorder 1, %s12
    %p194 = scmp.lt.s32.totalorder %s12, 9
    %p195 = pnand %p193, %p194
    %p196 = pneg %p195
    // Predicated region
    $region9: #{encoder_forward.2} parent=5 // pred_check
      _
    $region10: #{encoder_forward.2} parent=5 // pred_check_branch
      %198 = sbr.rel (%p195) target = $region12
    $region11: #{encoder_forward.2} parent=5 // pred_region
      %s199 = ssub.s32 %s12, 1
      // Predicated region
      $region13: #{encoder_forward.2} parent=11 // pred_check
        %p200 = pneg %p73
      $region14: #{encoder_forward.2} parent=11 // pred_check_branch
        %202 = sbr.rel (%p200) target = $region16
      $region15: #{encoder_forward.2} parent=11 // pred_region
        _
      $region16: #{encoder_forward.2} parent=11 // pred_fallthru
        _
      // Predicated region
      $region17: #{encoder_forward.2} parent=11 // pred_check
        %p203 = pneg %p94
      $region18: #{encoder_forward.2} parent=11 // pred_check_branch
        %205 = sbr.rel (%p203) target = $region20
      $region19: #{encoder_forward.2} parent=11 // pred_region
        _
      $region20: #{encoder_forward.2} parent=11 // pred_fallthru
        _
      // Predicated region
      $region21: #{encoder_forward.2} parent=11 // pred_check
        %p206 = pneg %p115
      $region22: #{encoder_forward.2} parent=11 // pred_check_branch
        %208 = sbr.rel (%p206) target = $region24
      $region23: #{encoder_forward.2} parent=11 // pred_region
        _
      $region24: #{encoder_forward.2} parent=11 // pred_fallthru
        _
      // Predicated region
      $region25: #{encoder_forward.2} parent=11 // pred_check
        %p209 = pneg %p136
      $region26: #{encoder_forward.2} parent=11 // pred_check_branch
        %211 = sbr.rel (%p209) target = $region28
      $region27: #{encoder_forward.2} parent=11 // pred_region
        _
      $region28: #{encoder_forward.2} parent=11 // pred_fallthru
        _
      // Predicated region
      $region29: #{encoder_forward.2} parent=11 // pred_check
        %p212 = pneg %p157
      $region30: #{encoder_forward.2} parent=11 // pred_check_branch
        %214 = sbr.rel (%p212) target = $region32
      $region31: #{encoder_forward.2} parent=11 // pred_region
        _
      $region32: #{encoder_forward.2} parent=11 // pred_fallthru
        _
    $region12: #{encoder_forward.2} parent=5 // pred_fallthru
      _
    %p215 = scmp.lt.s32.totalorder %s12, 8
    // Predicated region
    $region33: #{encoder_forward.2} parent=5 // pred_check
      %p216 = pneg %p215
    $region34: #{encoder_forward.2} parent=5 // pred_check_branch
      %218 = sbr.rel (%p216) target = $region36
    $region35: #{encoder_forward.2} parent=5 // pred_region
      // Predicated region
      $region37: #{encoder_forward.2} parent=35 // pred_check
        %p219 = pneg %p46
      $region38: #{encoder_forward.2} parent=35 // pred_check_branch
        %221 = sbr.rel (%p219) target = $region40
      $region39: #{encoder_forward.2} parent=35 // pred_region
        %p222 = scmp.lt.s32.totalorder %s19, 1
        %s223 = scalar_select %p222, %s19, 1
        %p224 = scmp.lt.s32.totalorder %s20, 3
        %s225 = scalar_select %p224, %s20, 3
        %s226 = smul.addr %s225, 5
        %s227 = smul.addr %s223, 20
        %s228 = sadd.s32 %s226, %s227
        %s229 = smul.addr %s228, 4
        %s230 = scalar_lea.vmem %s0, %s229
      $region40: #{encoder_forward.2} parent=35 // pred_fallthru
        _
    $region36: #{encoder_forward.2} parent=5 // pred_fallthru
      _
    %p231 = scmp.le.s32.totalorder 1, %s12
    %p232 = scmp.lt.s32.totalorder %s12, 9
    %p233 = pnand %p231, %p232
    %p234 = pneg %p233
    // Predicated region
    $region41: #{encoder_forward.2} parent=5 // pred_check
      _
    $region42: #{encoder_forward.2} parent=5 // pred_check_branch
      %236 = sbr.rel (%p233) target = $region44
    $region43: #{encoder_forward.2} parent=5 // pred_region
      %s237 = ssub.s32 %s12, 1
      %p238 = scmp.lt.s32.totalorder %s21, 1
      %s239 = scalar_select %p238, %s21, 1
      %p240 = scmp.lt.s32.totalorder %s22, 3
      %s241 = scalar_select %p240, %s22, 3
      %s242 = smul.addr %s241, 5
      %s243 = smul.addr %s239, 20
      %s244 = sadd.s32 %s242, %s243
      %s245 = smul.addr %s244, 4
      %s246 = scalar_lea.vmem %s0, %s245
      %p247 = pneg %p52
      %p248 = pneg %p49
      %p249 = pneg %p73
      %p250 = pneg %p70
      %p251 = pneg %p94
      %p252 = pneg %p91
      %p253 = pneg %p115
      %p254 = pneg %p112
      %p255 = pneg %p136
      %p256 = pneg %p133
      %p257 = pneg %p157
      %p258 = pneg %p154
      %p259 = pneg %p185
      %p260 = pneg %p182
      %p261 = scmp.lt.s32.totalorder %s21, 1
      %s262 = scalar_select %p261, %s21, 1
      %p263 = scmp.lt.s32.totalorder %s22, 3
      %s264 = scalar_select %p263, %s22, 3
      %s265 = smul.addr %s264, 3
      %s266 = smul.addr %s262, 12
      %s267 = sadd.s32 %s265, %s266
      %s268 = smul.addr %s267, 4
      %s269 = scalar_lea.vmem %s6, %s268
      %p270 = scmp.lt.s32.totalorder %s21, 1
      %s271 = scalar_select %p270, %s21, 1
      %p272 = scmp.lt.s32.totalorder %s22, 3
      %s273 = scalar_select %p272, %s22, 3
      %s274 = smul.addr %s273, 5
      %s275 = smul.addr %s271, 20
      %s276 = sadd.s32 %s274, %s275
      %s277 = smul.addr %s276, 4
      %s278 = scalar_lea.vmem %s0, %s277
      %p279 = scmp.lt.s32.totalorder %s21, 1
      %s280 = scalar_select %p279, %s21, 1
      %p281 = scmp.lt.s32.totalorder %s22, 3
      %s282 = scalar_select %p281, %s22, 3
      %s283 = smul.addr %s282, 3
      %s284 = smul.addr %s280, 12
      %s285 = sadd.s32 %s283, %s284
      %s286 = smul.addr %s285, 4
      %s287 = scalar_lea.vmem %s6, %s286
      %p289 = scmp.eq.s32.totalorder %s22, 0
      // Predicated region
      $region45: #{encoder_forward.2} parent=43 // pred_check
        %p290 = pneg %p289
      $region46: #{encoder_forward.2} parent=43 // pred_check_branch
        %292 = sbr.rel (%p290) target = $region48
      $region47: #{encoder_forward.2} parent=43 // pred_region
        %293 = vst [vmem:[#allocation2] sm:$0xff] 0.0
        %294 = vst [vmem:[#allocation2 + $0x8] sm:$0xff] 0.0
        %vm295 = vcmask 150528
        %296 = vst.msk [vmem:[#allocation2 + $0x10] sm:$0xf] %vm295, 0.0
      $region48: #{encoder_forward.2} parent=43 // pred_fallthru
        _
      %v297 = vld [vmem:[%s278] sm:$0xff]
      %v298 = vld [vmem:[%s278 + $0x8] sm:$0xff]
      %v301 = vcombine.high %v297, %v297
      %v302 = vcombine.high %v298, %v298
      %v305 = vpack.c.bf16 %v297, %v297
      %v306 = vpack.c.bf16 %v301, %v301
      %v307 = vpack.c.bf16 %v298, %v298
      %v308 = vpack.c.bf16 %v302, %v302
      %v313 = vunpack.c.l.b16 %v305
      %v314 = vunpack.c.l.b16 %v306
      %v315 = vunpack.c.l.b16 %v307
      %v316 = vunpack.c.l.b16 %v308
      %v317 = vpack.c.b16 %v314, %v313
      %v318 = vpack.c.b16 %v316, %v315
      %319 = vrot.lane.b32.xlu0 %v317, 19
      %v320 = vpop.permute.xlu0 %319
      %321 = vrot.lane.b32.xlu0 %v318, 19
      %v322 = vpop.permute.xlu0 %321
      %v323 = vrot.slane %v320, 4
      %v324 = vrot.slane %v322, 4
      %vm325 = vcmask 1043456
      %v326 = vsel %vm325, %v323, %v324
      %vm327 = vcmask 154624
      %v328 = vsel %vm327, %v320, %v326
      %v329 = vsel %vm327, %v322, %v324
      %332 = vst [vmem:[#allocation3] sm:$0x33] %v328
      %333 = vst [vmem:[#allocation3 + $0x8] sm:$0x3] %v329
      %v334 = vld [vmem:[%s278] sm:$0xff]
      %v335 = vld [vmem:[%s278 + $0x8] sm:$0xff]
      %v338 = vcombine.high %v334, %v334
      %v339 = vcombine.high %v335, %v335
      %v342 = vpack.c.bf16 %v334, %v334
      %v343 = vpack.c.bf16 %v338, %v338
      %v344 = vpack.c.bf16 %v335, %v335
      %v345 = vpack.c.bf16 %v339, %v339
      %v350 = vunpack.c.l.b16 %v342
      %v351 = vunpack.c.l.b16 %v343
      %v352 = vunpack.c.l.b16 %v344
      %v353 = vunpack.c.l.b16 %v345
      %v354 = vpack.c.b16 %v351, %v350
      %v355 = vpack.c.b16 %v353, %v352
      %v356 = vrot.slane %v354, 6
      %v357 = vrot.slane %v355, 6
      %358 = vrot.lane.b32.xlu0 %v356, 18
      %v359 = vpop.permute.xlu0 %358
      %360 = vrot.lane.b32.xlu0 %v357, 18
      %v361 = vpop.permute.xlu0 %360
      %v362 = vrot.slane %v359, 4
      %v363 = vrot.slane %v361, 4
      %v364 = vsel %vm325, %v362, %v363
      %vm365 = vcmask 146432
      %v366 = vsel %vm365, %v359, %v364
      %v367 = vsel %vm365, %v361, %v363
      %370 = vst [vmem:[#allocation3] sm:$0xcc] %v366
      %371 = vst [vmem:[#allocation3 + $0x8] sm:$0xc] %v367
      %v372 = vld [vmem:[%s278] sm:$0xff]
      %v373 = vld [vmem:[%s278 + $0x8] sm:$0xff]
      %v376 = vcombine.high %v372, %v372
      %v377 = vcombine.high %v373, %v373
      %v380 = vpack.c.bf16 %v372, %v372
      %v381 = vpack.c.bf16 %v376, %v376
      %v382 = vpack.c.bf16 %v373, %v373
      %v383 = vpack.c.bf16 %v377, %v377
      %v388 = vunpack.c.l.b16 %v380
      %v389 = vunpack.c.l.b16 %v381
      %v390 = vunpack.c.l.b16 %v382
      %v391 = vunpack.c.l.b16 %v383
      %v392 = vpack.c.b16 %v389, %v388
      %v393 = vpack.c.b16 %v391, %v390
      %394 = vrot.lane.b32.xlu0 %v392, 17
      %v395 = vpop.permute.xlu0 %394
      %396 = vrot.lane.b32.xlu0 %v393, 17
      %v397 = vpop.permute.xlu0 %396
      %v398 = vrot.slane %v395, 4
      %v399 = vrot.slane %v397, 4
      %v400 = vsel %vm325, %v398, %v399
      %vm401 = vcmask 138240
      %v402 = vsel %vm401, %v395, %v400
      %v403 = vsel %vm401, %v397, %v399
      %406 = vst [vmem:[#allocation3 + $0xc] sm:$0x33] %v402
      %407 = vst [vmem:[#allocation3 + $0x14] sm:$0x3] %v403
      %v408 = vld [vmem:[%s278] sm:$0xff]
      %v409 = vld [vmem:[%s278 + $0x8] sm:$0xff]
      %v412 = vcombine.high %v408, %v408
      %v413 = vcombine.high %v409, %v409
      %v416 = vpack.c.bf16 %v408, %v408
      %v417 = vpack.c.bf16 %v412, %v412
      %v418 = vpack.c.bf16 %v409, %v409
      %v419 = vpack.c.bf16 %v413, %v413
      %v424 = vunpack.c.l.b16 %v416
      %v425 = vunpack.c.l.b16 %v417
      %v426 = vunpack.c.l.b16 %v418
      %v427 = vunpack.c.l.b16 %v419
      %v428 = vpack.c.b16 %v425, %v424
      %v429 = vpack.c.b16 %v427, %v426
      %v430 = vrot.slane %v428, 6
      %v431 = vrot.slane %v429, 6
      %432 = vrot.lane.b32.xlu0 %v430, 1
      %v433 = vpop.permute.xlu0 %432
      %434 = vrot.lane.b32.xlu0 %v431, 1
      %v435 = vpop.permute.xlu0 %434
      %v436 = vrot.slane %v433, 4
      %v437 = vrot.slane %v435, 4
      %v438 = vsel %vm325, %v436, %v437
      %vm439 = vcmask 7168
      %v440 = vsel %vm439, %v433, %v438
      %v441 = vsel %vm439, %v435, %v437
      %444 = vst [vmem:[#allocation3 + $0xc] sm:$0xcc] %v440
      %445 = vst [vmem:[#allocation3 + $0x14] sm:$0xc] %v441
      %v446 = vld [vmem:[%s278 + $0x4] sm:$0xff]
      %v447 = vld [vmem:[%s278 + $0xc] sm:$0xf]
      %v449 = vcombine.high %v446, %v446
      %v451 = vpack.c.bf16 %v446, %v446
      %v452 = vpack.c.bf16 %v449, %v449
      %v453 = vpack.c.bf16 %v447, %v447
      %v457 = vunpack.c.l.b16 %v451
      %v458 = vunpack.c.l.b16 %v452
      %v459 = vunpack.c.l.b16 %v453
      %v460 = vpack.c.b16 %v458, %v457
      %v461 = vpack.c.b16 %v459, %v459
      %464 = vst [vmem:[#allocation3 + $0x18] sm:$0x33] %v460
      %465 = vst [vmem:[#allocation3 + $0x20] sm:$0x3] %v461
      %v466 = vld [vmem:[%s278 + $0x4] sm:$0xff]
      %v467 = vld [vmem:[%s278 + $0xc] sm:$0xff]
      %v470 = vcombine.high %v466, %v466
      %v471 = vcombine.high %v467, %v467
      %v474 = vpack.c.bf16 %v466, %v466
      %v475 = vpack.c.bf16 %v470, %v470
      %v476 = vpack.c.bf16 %v467, %v467
      %v477 = vpack.c.bf16 %v471, %v471
      %v482 = vunpack.c.l.b16 %v474
      %v483 = vunpack.c.l.b16 %v475
      %v484 = vunpack.c.l.b16 %v476
      %v485 = vunpack.c.l.b16 %v477
      %v486 = vpack.c.b16 %v483, %v482
      %v487 = vpack.c.b16 %v485, %v484
      %v488 = vrot.slane %v486, 6
      %v489 = vrot.slane %v487, 6
      %490 = vrot.lane.b32.xlu0 %v488, 127
      %v491 = vpop.permute.xlu0 %490
      %492 = vrot.lane.b32.xlu0 %v489, 127
      %v493 = vpop.permute.xlu0 %492
      %v494 = vrot.slane %v491, 4
      %v495 = vrot.slane %v493, 4
      %v496 = vsel %vm325, %v494, %v495
      %vm497 = vcmask 1039360
      %v498 = vsel %vm497, %v491, %v496
      %v499 = vsel %vm497, %v493, %v495
      %502 = vst [vmem:[#allocation3 + $0x18] sm:$0xcc] %v498
      %503 = vst [vmem:[#allocation3 + $0x20] sm:$0xc] %v499
      %v504 = vld [vmem:[%s278 + $0x4] sm:$0xff]
      %v505 = vld [vmem:[%s278 + $0xc] sm:$0xff]
      %v508 = vcombine.high %v504, %v504
      %v509 = vcombine.high %v505, %v505
      %v512 = vpack.c.bf16 %v504, %v504
      %v513 = vpack.c.bf16 %v508, %v508
      %v514 = vpack.c.bf16 %v505, %v505
      %v515 = vpack.c.bf16 %v509, %v509
      %v520 = vunpack.c.l.b16 %v512
      %v521 = vunpack.c.l.b16 %v513
      %v522 = vunpack.c.l.b16 %v514
      %v523 = vunpack.c.l.b16 %v515
      %v524 = vpack.c.b16 %v521, %v520
      %v525 = vpack.c.b16 %v523, %v522
      %526 = vrot.lane.b32.xlu0 %v524, 111
      %v527 = vpop.permute.xlu0 %526
      %528 = vrot.lane.b32.xlu0 %v525, 111
      %v529 = vpop.permute.xlu0 %528
      %v530 = vrot.slane %v527, 4
      %v531 = vrot.slane %v529, 4
      %v532 = vsel %vm325, %v530, %v531
      %vm533 = vcmask 908288
      %v534 = vsel %vm533, %v527, %v532
      %v535 = vsel %vm533, %v529, %v531
      %538 = vst [vmem:[#allocation3 + $0x24] sm:$0x33] %v534
      %539 = vst [vmem:[#allocation3 + $0x2c] sm:$0x3] %v535
      %v540 = vld [vmem:[%s278 + $0x4] sm:$0xff]
      %v541 = vld [vmem:[%s278 + $0xc] sm:$0xff]
      %v544 = vcombine.high %v540, %v540
      %v545 = vcombine.high %v541, %v541
      %v548 = vpack.c.bf16 %v540, %v540
      %v549 = vpack.c.bf16 %v544, %v544
      %v550 = vpack.c.bf16 %v541, %v541
      %v551 = vpack.c.bf16 %v545, %v545
      %v556 = vunpack.c.l.b16 %v548
      %v557 = vunpack.c.l.b16 %v549
      %v558 = vunpack.c.l.b16 %v550
      %v559 = vunpack.c.l.b16 %v551
      %v560 = vpack.c.b16 %v557, %v556
      %v561 = vpack.c.b16 %v559, %v558
      %v562 = vrot.slane %v560, 6
      %v563 = vrot.slane %v561, 6
      %564 = vrot.lane.b32.xlu0 %v562, 110
      %v565 = vpop.permute.xlu0 %564
      %566 = vrot.lane.b32.xlu0 %v563, 110
      %v567 = vpop.permute.xlu0 %566
      %v568 = vrot.slane %v565, 4
      %v569 = vrot.slane %v567, 4
      %v570 = vsel %vm325, %v568, %v569
      %vm571 = vcmask 900096
      %v572 = vsel %vm571, %v565, %v570
      %v573 = vsel %vm571, %v567, %v569
      %576 = vst [vmem:[#allocation3 + $0x24] sm:$0xcc] %v572
      %577 = vst [vmem:[#allocation3 + $0x2c] sm:$0xc] %v573
      %v578 = vld [vmem:[%s278 + $0x4] sm:$0xff]
      %v579 = vld [vmem:[%s278 + $0xc] sm:$0xff]
      %v582 = vcombine.high %v578, %v578
      %v583 = vcombine.high %v579, %v579
      %v586 = vpack.c.bf16 %v578, %v578
      %v587 = vpack.c.bf16 %v582, %v582
      %v588 = vpack.c.bf16 %v579, %v579
      %v589 = vpack.c.bf16 %v583, %v583
      %v594 = vunpack.c.l.b16 %v586
      %v595 = vunpack.c.l.b16 %v587
      %v596 = vunpack.c.l.b16 %v588
      %v597 = vunpack.c.l.b16 %v589
      %v598 = vpack.c.b16 %v595, %v594
      %v599 = vpack.c.b16 %v597, %v596
      %600 = vrot.lane.b32.xlu0 %v598, 109
      %v601 = vpop.permute.xlu0 %600
      %602 = vrot.lane.b32.xlu0 %v599, 109
      %v603 = vpop.permute.xlu0 %602
      %v604 = vrot.slane %v601, 4
      %v605 = vrot.slane %v603, 4
      %v606 = vsel %vm325, %v604, %v605
      %vm607 = vcmask 891904
      %v608 = vsel %vm607, %v601, %v606
      %v609 = vsel %vm607, %v603, %v605
      %612 = vst [vmem:[#allocation3 + $0x30] sm:$0x33] %v608
      %613 = vst [vmem:[#allocation3 + $0x38] sm:$0x3] %v609
      %v614 = vld [vmem:[%s1] sm:$0xf]
      %v615 = vld [vmem:[%s1 + $0x4] sm:$0x3]
      %v616 = vld [vmem:[#allocation3] sm:$0xff]
      %v617 = vld [vmem:[#allocation3 + $0x8] sm:$0xf]
      %v618 = vld [vmem:[#allocation3 + $0xc] sm:$0xff]
      %v619 = vld [vmem:[#allocation3 + $0x14] sm:$0xf]
      %v620 = vld [vmem:[#allocation3 + $0x18] sm:$0xff]
      %v621 = vld [vmem:[#allocation3 + $0x20] sm:$0xf]
      %v622 = vld [vmem:[#allocation3 + $0x24] sm:$0xff]
      %v623 = vld [vmem:[#allocation3 + $0x2c] sm:$0xf]
      %v624 = vld [vmem:[#allocation3 + $0x30] sm:$0x33]
      %v625 = vld [vmem:[#allocation3 + $0x38] sm:$0x3]
      %v626 = vld [vmem:[%s4] sm:$0xff]
      %v627 = vld [vmem:[%s4 + $0x8] sm:$0xf]
      %629 = vset.pattern.permute.xlu0 0
      %630 = vperm.xlu0 %629, %v626
      %v631 = vpop.permute.xlu0 %630
      %634 = vset.pattern.permute.xlu0 0
      %635 = vperm.xlu0 %634, %v627
      %v636 = vpop.permute.xlu0 %635
      %v640 = vunpack.c.l.b16 %v614
      %v641 = vunpack.c.l.b16 %v615
      %v642 = vpack.c.b16 %v641, %v640
      %v653 = vunpack.c.l.b16 %v616
      %v654 = vunpack.c.h.b16 %v616
      %v655 = vunpack.c.l.b16 %v617
      %v656 = vunpack.c.l.b16 %v618
      %v657 = vunpack.c.h.b16 %v618
      %v658 = vunpack.c.l.b16 %v619
      %v659 = vunpack.c.l.b16 %v620
      %v660 = vunpack.c.h.b16 %v620
      %v661 = vunpack.c.l.b16 %v621
      %v662 = vunpack.c.l.b16 %v622
      %v663 = vunpack.c.h.b16 %v622
      %v664 = vunpack.c.l.b16 %v623
      %v665 = vunpack.c.l.b16 %v624
      %v666 = vunpack.c.h.b16 %v624
      %v667 = vunpack.c.l.b16 %v625
      %v668 = vpack.c.b16 %v656, %v653
      %v669 = vpack.c.b16 %v657, %v654
      %v670 = vpack.c.b16 %v658, %v655
      %v671 = vpack.c.b16 %v662, %v659
      %v672 = vpack.c.b16 %v663, %v660
      %v673 = vpack.c.b16 %v664, %v661
      %v674 = vpack.c.b16 %v665, %v665
      %v675 = vpack.c.b16 %v666, %v666
      %v676 = vpack.c.b16 %v667, %v667
      %vm683 = vcmask 293888
      %v685 = vsel %vm683, %v642, 0
      %vm687 = vcmask 1041408
      %v689 = vsel %vm687, %v674, 0
      %v692 = vsel %vm687, %v675, 0
      %v695 = vsel %vm687, %v676, 0
      %697 = vmatprep.subr.bf16.mxu0 0
      %698 = vmatpush1.bf16.msra.mxu0 0
      %699 = vmatprep.subr.bf16.mxu0 0
      %700 = vmatpush1.bf16.msra.mxu0 0
      %701 = vmatprep.subr.bf16.mxu0 0
      %702 = vmatpush1.bf16.msra.mxu0 0
      %703 = vmatprep.subr.bf16.mxu0 0
      %704 = vmatpush1.bf16.msra.mxu0 0
      %705 = vmatprep.subr.bf16.mxu0 0
      %706 = vmatpush1.bf16.msra.mxu0 0
      %707 = vmatprep.subr.bf16.mxu0 %v692
      %708 = vmatpush1.bf16.msra.mxu0 %v689
      %709 = vmatprep.subr.bf16.mxu0 %v672
      %710 = vmatpush1.bf16.msra.mxu0 %v671
      %711 = vmatprep.subr.bf16.mxu0 %v669
      %712 = vmatpush1.bf16.msra.mxu0 %v668
      %713 = vmatprep.subr.bf16.mxu0 0
      %714 = vmatpush2.bf16.msra.mxu0 0
      %715 = vmatprep.subr.bf16.mxu0 0
      %716 = vmatpush2.bf16.msra.mxu0 0
      %717 = vmatprep.subr.bf16.mxu0 0
      %718 = vmatpush2.bf16.msra.mxu0 0
      %719 = vmatprep.subr.bf16.mxu0 0
      %720 = vmatpush2.bf16.msra.mxu0 0
      %721 = vmatprep.subr.bf16.mxu0 0
      %722 = vmatpush2.bf16.msra.mxu0 0
      %723 = vmatprep.subr.bf16.mxu0 0
      %724 = vmatpush2.bf16.msra.mxu0 0
      %725 = vmatprep.subr.bf16.mxu0 0
      %726 = vmatpush2.bf16.msra.mxu0 0
      %727 = vmatprep.subr.bf16.mxu0 0
      %728 = vmatpush2.bf16.msra.mxu0 0
      %729 = vmatprep.mubr.bf16.mxu0 0
      %730 = vmatmul.mubr.bf16.gmra.mxu0 %v685
      %v731 = vpop.f32.mrf.mxu0
      %v732 = vadd.f32 %v631, %v731
      %v733 = vpop.f32.mrf.mxu0
      %v734 = vadd.f32 %v631, %v733
      %v735 = vpop.f32.mrf.mxu0
      %v736 = vadd.f32 %v636, %v735
      %v737 = vpop.f32.mrf.mxu0
      %v738 = vadd.f32 %v636, %v737
      %739 = vdwg.mxu0
      %740 = vmatprep.subr.bf16.mxu0 0
      %741 = vmatpush1.bf16.msra.mxu0 0
      %742 = vmatprep.subr.bf16.mxu0 0
      %743 = vmatpush1.bf16.msra.mxu0 0
      %744 = vmatprep.subr.bf16.mxu0 0
      %745 = vmatpush1.bf16.msra.mxu0 0
      %746 = vmatprep.subr.bf16.mxu0 0
      %747 = vmatpush1.bf16.msra.mxu0 0
      %748 = vmatprep.subr.bf16.mxu0 0
      %749 = vmatpush1.bf16.msra.mxu0 0
      %750 = vmatprep.subr.bf16.mxu0 0
      %751 = vmatpush1.bf16.msra.mxu0 %v695
      %752 = vmatprep.subr.bf16.mxu0 0
      %753 = vmatpush1.bf16.msra.mxu0 %v673
      %754 = vmatprep.subr.bf16.mxu0 0
      %755 = vmatpush1.bf16.msra.mxu0 %v670
      %756 = vmatprep.subr.bf16.mxu0 0
      %757 = vmatpush2.bf16.msra.mxu0 0
      %758 = vmatprep.subr.bf16.mxu0 0
      %759 = vmatpush2.bf16.msra.mxu0 0
      %760 = vmatprep.subr.bf16.mxu0 0
      %761 = vmatpush2.bf16.msra.mxu0 0
      %762 = vmatprep.subr.bf16.mxu0 0
      %763 = vmatpush2.bf16.msra.mxu0 0
      %764 = vmatprep.subr.bf16.mxu0 0
      %765 = vmatpush2.bf16.msra.mxu0 0
      %766 = vmatprep.subr.bf16.mxu0 0
      %767 = vmatpush2.bf16.msra.mxu0 0
      %768 = vmatprep.subr.bf16.mxu0 0
      %769 = vmatpush2.bf16.msra.mxu0 0
      %770 = vmatprep.subr.bf16.mxu0 0
      %771 = vmatpush2.bf16.msra.mxu0 0
      %772 = vmatprep.mubr.bf16.mxu0 0
      %773 = vmatmul.mubr.bf16.gmra.mxu0 %v685
      %v774 = vpop.f32.mrf.mxu0
      %v775 = vadd.f32 %v631, %v774
      %v776 = vpop.f32.mrf.mxu0
      %v777 = vpop.f32.mrf.mxu0
      %v778 = vadd.f32 %v636, %v777
      %v779 = vpop.f32.mrf.mxu0
      %780 = vdwg.mxu0
      %v781 = vld [vmem:[#allocation2 + $0x4] sm:$0xff]
      %v782 = vld [vmem:[#allocation2 + $0xc] sm:$0xf]
      %v783 = vld [vmem:[#allocation2] sm:$0xff]
      %v784 = vld [vmem:[#allocation2 + $0x8] sm:$0xff]
      %v787 = vcombine.high %v783, %v783
      %v788 = vcombine.high %v784, %v784
      %v791 = vpack.c.bf16 %v783, %v783
      %v792 = vpack.c.bf16 %v787, %v787
      %v793 = vpack.c.bf16 %v784, %v784
      %v794 = vpack.c.bf16 %v788, %v788
      %v799 = vunpack.c.l.b16 %v791
      %v800 = vunpack.c.l.b16 %v792
      %v801 = vunpack.c.l.b16 %v793
      %v802 = vunpack.c.l.b16 %v794
      %v803 = vpack.c.b16 %v800, %v799
      %v804 = vpack.c.b16 %v802, %v801
      %805 = vrot.lane.b32.xlu0 %v803, 19
      %v806 = vpop.permute.xlu0 %805
      %807 = vrot.lane.b32.xlu0 %v804, 19
      %v808 = vpop.permute.xlu0 %807
      %v809 = vrot.slane %v806, 4
      %v810 = vrot.slane %v808, 4
      %v811 = vsel %vm325, %v809, %v810
      %v812 = vsel %vm327, %v806, %v811
      %v813 = vsel %vm327, %v808, %v810
      %816 = vst [vmem:[#allocation3] sm:$0x33] %v812
      %817 = vst [vmem:[#allocation3 + $0x8] sm:$0x3] %v813
      %v818 = vld [vmem:[#allocation2] sm:$0xff]
      %v819 = vld [vmem:[#allocation2 + $0x8] sm:$0xff]
      %v822 = vcombine.high %v818, %v818
      %v823 = vcombine.high %v819, %v819
      %v826 = vpack.c.bf16 %v818, %v818
      %v827 = vpack.c.bf16 %v822, %v822
      %v828 = vpack.c.bf16 %v819, %v819
      %v829 = vpack.c.bf16 %v823, %v823
      %v834 = vunpack.c.l.b16 %v826
      %v835 = vunpack.c.l.b16 %v827
      %v836 = vunpack.c.l.b16 %v828
      %v837 = vunpack.c.l.b16 %v829
      %v838 = vpack.c.b16 %v835, %v834
      %v839 = vpack.c.b16 %v837, %v836
      %v840 = vrot.slane %v838, 6
      %v841 = vrot.slane %v839, 6
      %842 = vrot.lane.b32.xlu0 %v840, 18
      %v843 = vpop.permute.xlu0 %842
      %844 = vrot.lane.b32.xlu0 %v841, 18
      %v845 = vpop.permute.xlu0 %844
      %v846 = vrot.slane %v843, 4
      %v847 = vrot.slane %v845, 4
      %v848 = vsel %vm325, %v846, %v847
      %v849 = vsel %vm365, %v843, %v848
      %v850 = vsel %vm365, %v845, %v847
      %853 = vst [vmem:[#allocation3] sm:$0xcc] %v849
      %854 = vst [vmem:[#allocation3 + $0x8] sm:$0xc] %v850
      %v855 = vld [vmem:[#allocation2] sm:$0xff]
      %v856 = vld [vmem:[#allocation2 + $0x8] sm:$0xff]
      %v859 = vcombine.high %v855, %v855
      %v860 = vcombine.high %v856, %v856
      %v863 = vpack.c.bf16 %v855, %v855
      %v864 = vpack.c.bf16 %v859, %v859
      %v865 = vpack.c.bf16 %v856, %v856
      %v866 = vpack.c.bf16 %v860, %v860
      %v871 = vunpack.c.l.b16 %v863
      %v872 = vunpack.c.l.b16 %v864
      %v873 = vunpack.c.l.b16 %v865
      %v874 = vunpack.c.l.b16 %v866
      %v875 = vpack.c.b16 %v872, %v871
      %v876 = vpack.c.b16 %v874, %v873
      %877 = vrot.lane.b32.xlu0 %v875, 17
      %v878 = vpop.permute.xlu0 %877
      %879 = vrot.lane.b32.xlu0 %v876, 17
      %v880 = vpop.permute.xlu0 %879
      %v881 = vrot.slane %v878, 4
      %v882 = vrot.slane %v880, 4
      %v883 = vsel %vm325, %v881, %v882
      %v884 = vsel %vm401, %v878, %v883
      %v885 = vsel %vm401, %v880, %v882
      %888 = vst [vmem:[#allocation3 + $0xc] sm:$0x33] %v884
      %889 = vst [vmem:[#allocation3 + $0x14] sm:$0x3] %v885
      %v890 = vld [vmem:[#allocation2] sm:$0xff]
      %v891 = vld [vmem:[#allocation2 + $0x8] sm:$0xff]
      %v894 = vcombine.high %v890, %v890
      %v895 = vcombine.high %v891, %v891
      %v898 = vpack.c.bf16 %v890, %v890
      %v899 = vpack.c.bf16 %v894, %v894
      %v900 = vpack.c.bf16 %v891, %v891
      %v901 = vpack.c.bf16 %v895, %v895
      %v906 = vunpack.c.l.b16 %v898
      %v907 = vunpack.c.l.b16 %v899
      %v908 = vunpack.c.l.b16 %v900
      %v909 = vunpack.c.l.b16 %v901
      %v910 = vpack.c.b16 %v907, %v906
      %v911 = vpack.c.b16 %v909, %v908
      %v912 = vrot.slane %v910, 6
      %v913 = vrot.slane %v911, 6
      %914 = vrot.lane.b32.xlu0 %v912, 1
      %v915 = vpop.permute.xlu0 %914
      %916 = vrot.lane.b32.xlu0 %v913, 1
      %v917 = vpop.permute.xlu0 %916
      %v918 = vrot.slane %v915, 4
      %v919 = vrot.slane %v917, 4
      %v920 = vsel %vm325, %v918, %v919
      %v921 = vsel %vm439, %v915, %v920
      %v922 = vsel %vm439, %v917, %v919
      %925 = vst [vmem:[#allocation3 + $0xc] sm:$0xcc] %v921
      %926 = vst [vmem:[#allocation3 + $0x14] sm:$0xc] %v922
      %v927 = vld [vmem:[#allocation2 + $0x4] sm:$0xff]
      %v928 = vld [vmem:[#allocation2 + $0xc] sm:$0xf]
      %v930 = vcombine.high %v927, %v927
      %v932 = vpack.c.bf16 %v927, %v927
      %v933 = vpack.c.bf16 %v930, %v930
      %v934 = vpack.c.bf16 %v928, %v928
      %v938 = vunpack.c.l.b16 %v932
      %v939 = vunpack.c.l.b16 %v933
      %v940 = vunpack.c.l.b16 %v934
      %v941 = vpack.c.b16 %v939, %v938
      %v942 = vpack.c.b16 %v940, %v940
      %945 = vst [vmem:[#allocation3 + $0x18] sm:$0x33] %v941
      %946 = vst [vmem:[#allocation3 + $0x20] sm:$0x3] %v942
      %v947 = vld [vmem:[#allocation2 + $0x4] sm:$0xff]
      %v948 = vld [vmem:[#allocation2 + $0xc] sm:$0xff]
      %v951 = vcombine.high %v947, %v947
      %v952 = vcombine.high %v948, %v948
      %v955 = vpack.c.bf16 %v947, %v947
      %v956 = vpack.c.bf16 %v951, %v951
      %v957 = vpack.c.bf16 %v948, %v948
      %v958 = vpack.c.bf16 %v952, %v952
      %v963 = vunpack.c.l.b16 %v955
      %v964 = vunpack.c.l.b16 %v956
      %v965 = vunpack.c.l.b16 %v957
      %v966 = vunpack.c.l.b16 %v958
      %v967 = vpack.c.b16 %v964, %v963
      %v968 = vpack.c.b16 %v966, %v965
      %v969 = vrot.slane %v967, 6
      %v970 = vrot.slane %v968, 6
      %971 = vrot.lane.b32.xlu0 %v969, 127
      %v972 = vpop.permute.xlu0 %971
      %973 = vrot.lane.b32.xlu0 %v970, 127
      %v974 = vpop.permute.xlu0 %973
      %v975 = vrot.slane %v972, 4
      %v976 = vrot.slane %v974, 4
      %v977 = vsel %vm325, %v975, %v976
      %v978 = vsel %vm497, %v972, %v977
      %v979 = vsel %vm497, %v974, %v976
      %982 = vst [vmem:[#allocation3 + $0x18] sm:$0xcc] %v978
      %983 = vst [vmem:[#allocation3 + $0x20] sm:$0xc] %v979
      %v984 = vld [vmem:[#allocation2 + $0x4] sm:$0xff]
      %v985 = vld [vmem:[#allocation2 + $0xc] sm:$0xff]
      %v988 = vcombine.high %v984, %v984
      %v989 = vcombine.high %v985, %v985
      %v992 = vpack.c.bf16 %v984, %v984
      %v993 = vpack.c.bf16 %v988, %v988
      %v994 = vpack.c.bf16 %v985, %v985
      %v995 = vpack.c.bf16 %v989, %v989
      %v1000 = vunpack.c.l.b16 %v992
      %v1001 = vunpack.c.l.b16 %v993
      %v1002 = vunpack.c.l.b16 %v994
      %v1003 = vunpack.c.l.b16 %v995
      %v1004 = vpack.c.b16 %v1001, %v1000
      %v1005 = vpack.c.b16 %v1003, %v1002
      %1006 = vrot.lane.b32.xlu0 %v1004, 111
      %v1007 = vpop.permute.xlu0 %1006
      %1008 = vrot.lane.b32.xlu0 %v1005, 111
      %v1009 = vpop.permute.xlu0 %1008
      %v1010 = vrot.slane %v1007, 4
      %v1011 = vrot.slane %v1009, 4
      %v1012 = vsel %vm325, %v1010, %v1011
      %v1013 = vsel %vm533, %v1007, %v1012
      %v1014 = vsel %vm533, %v1009, %v1011
      %1017 = vst [vmem:[#allocation3 + $0x24] sm:$0x33] %v1013
      %1018 = vst [vmem:[#allocation3 + $0x2c] sm:$0x3] %v1014
      %v1019 = vld [vmem:[#allocation2 + $0x4] sm:$0xff]
      %v1020 = vld [vmem:[#allocation2 + $0xc] sm:$0xff]
      %v1023 = vcombine.high %v1019, %v1019
      %v1024 = vcombine.high %v1020, %v1020
      %v1027 = vpack.c.bf16 %v1019, %v1019
      %v1028 = vpack.c.bf16 %v1023, %v1023
      %v1029 = vpack.c.bf16 %v1020, %v1020
      %v1030 = vpack.c.bf16 %v1024, %v1024
      %v1035 = vunpack.c.l.b16 %v1027
      %v1036 = vunpack.c.l.b16 %v1028
      %v1037 = vunpack.c.l.b16 %v1029
      %v1038 = vunpack.c.l.b16 %v1030
      %v1039 = vpack.c.b16 %v1036, %v1035
      %v1040 = vpack.c.b16 %v1038, %v1037
      %v1041 = vrot.slane %v1039, 6
      %v1042 = vrot.slane %v1040, 6
      %1043 = vrot.lane.b32.xlu0 %v1041, 110
      %v1044 = vpop.permute.xlu0 %1043
      %1045 = vrot.lane.b32.xlu0 %v1042, 110
      %v1046 = vpop.permute.xlu0 %1045
      %v1047 = vrot.slane %v1044, 4
      %v1048 = vrot.slane %v1046, 4
      %v1049 = vsel %vm325, %v1047, %v1048
      %v1050 = vsel %vm571, %v1044, %v1049
      %v1051 = vsel %vm571, %v1046, %v1048
      %1054 = vst [vmem:[#allocation3 + $0x24] sm:$0xcc] %v1050
      %1055 = vst [vmem:[#allocation3 + $0x2c] sm:$0xc] %v1051
      %v1056 = vld [vmem:[#allocation2 + $0x4] sm:$0xff]
      %v1057 = vld [vmem:[#allocation2 + $0xc] sm:$0xff]
      %v1060 = vcombine.high %v1056, %v1056
      %v1061 = vcombine.high %v1057, %v1057
      %v1064 = vpack.c.bf16 %v1056, %v1056
      %v1065 = vpack.c.bf16 %v1060, %v1060
      %v1066 = vpack.c.bf16 %v1057, %v1057
      %v1067 = vpack.c.bf16 %v1061, %v1061
      %v1072 = vunpack.c.l.b16 %v1064
      %v1073 = vunpack.c.l.b16 %v1065
      %v1074 = vunpack.c.l.b16 %v1066
      %v1075 = vunpack.c.l.b16 %v1067
      %v1076 = vpack.c.b16 %v1073, %v1072
      %v1077 = vpack.c.b16 %v1075, %v1074
      %1078 = vrot.lane.b32.xlu0 %v1076, 109
      %v1079 = vpop.permute.xlu0 %1078
      %1080 = vrot.lane.b32.xlu0 %v1077, 109
      %v1081 = vpop.permute.xlu0 %1080
      %v1082 = vrot.slane %v1079, 4
      %v1083 = vrot.slane %v1081, 4
      %v1084 = vsel %vm325, %v1082, %v1083
      %v1085 = vsel %vm607, %v1079, %v1084
      %v1086 = vsel %vm607, %v1081, %v1083
      %1089 = vst [vmem:[#allocation3 + $0x30] sm:$0x33] %v1085
      %1090 = vst [vmem:[#allocation3 + $0x38] sm:$0x3] %v1086
      %v1091 = vld [vmem:[%s2] sm:$0xf]
      %v1092 = vld [vmem:[#allocation3] sm:$0xff]
      %v1093 = vld [vmem:[#allocation3 + $0x8] sm:$0xf]
      %v1094 = vld [vmem:[#allocation3 + $0xc] sm:$0xff]
      %v1095 = vld [vmem:[#allocation3 + $0x14] sm:$0xf]
      %v1096 = vld [vmem:[#allocation3 + $0x18] sm:$0xff]
      %v1097 = vld [vmem:[#allocation3 + $0x20] sm:$0xf]
      %v1098 = vld [vmem:[#allocation3 + $0x24] sm:$0xff]
      %v1099 = vld [vmem:[#allocation3 + $0x2c] sm:$0xf]
      %v1100 = vld [vmem:[#allocation3 + $0x30] sm:$0x33]
      %v1101 = vld [vmem:[#allocation3 + $0x38] sm:$0x3]
      %v1112 = vunpack.c.l.b16 %v1092
      %v1113 = vunpack.c.h.b16 %v1092
      %v1114 = vunpack.c.l.b16 %v1093
      %v1115 = vunpack.c.l.b16 %v1094
      %v1116 = vunpack.c.h.b16 %v1094
      %v1117 = vunpack.c.l.b16 %v1095
      %v1118 = vunpack.c.l.b16 %v1096
      %v1119 = vunpack.c.h.b16 %v1096
      %v1120 = vunpack.c.l.b16 %v1097
      %v1121 = vunpack.c.l.b16 %v1098
      %v1122 = vunpack.c.h.b16 %v1098
      %v1123 = vunpack.c.l.b16 %v1099
      %v1124 = vunpack.c.l.b16 %v1100
      %v1125 = vunpack.c.h.b16 %v1100
      %v1126 = vunpack.c.l.b16 %v1101
      %v1127 = vpack.c.b16 %v1115, %v1112
      %v1128 = vpack.c.b16 %v1116, %v1113
      %v1129 = vpack.c.b16 %v1117, %v1114
      %v1130 = vpack.c.b16 %v1121, %v1118
      %v1131 = vpack.c.b16 %v1122, %v1119
      %v1132 = vpack.c.b16 %v1123, %v1120
      %v1133 = vpack.c.b16 %v1124, %v1124
      %v1134 = vpack.c.b16 %v1125, %v1125
      %v1135 = vpack.c.b16 %v1126, %v1126
      %v1143 = vsel %vm683, %v1091, 0
      %v1146 = vsel %vm687, %v1133, 0
      %v1149 = vsel %vm687, %v1134, 0
      %v1152 = vsel %vm687, %v1135, 0
      %1154 = vmatprep.subr.bf16.mxu0 0
      %1155 = vmatpush1.bf16.msra.mxu0 0
      %1156 = vmatprep.subr.bf16.mxu0 0
      %1157 = vmatpush1.bf16.msra.mxu0 0
      %1158 = vmatprep.subr.bf16.mxu0 0
      %1159 = vmatpush1.bf16.msra.mxu0 0
      %1160 = vmatprep.subr.bf16.mxu0 0
      %1161 = vmatpush1.bf16.msra.mxu0 0
      %1162 = vmatprep.subr.bf16.mxu0 0
      %1163 = vmatpush1.bf16.msra.mxu0 0
      %1164 = vmatprep.subr.bf16.mxu0 %v1149
      %1165 = vmatpush1.bf16.msra.mxu0 %v1146
      %1166 = vmatprep.subr.bf16.mxu0 %v1131
      %1167 = vmatpush1.bf16.msra.mxu0 %v1130
      %1168 = vmatprep.subr.bf16.mxu0 %v1128
      %1169 = vmatpush1.bf16.msra.mxu0 %v1127
      %1170 = vmatprep.subr.bf16.mxu0 0
      %1171 = vmatpush2.bf16.msra.mxu0 0
      %1172 = vmatprep.subr.bf16.mxu0 0
      %1173 = vmatpush2.bf16.msra.mxu0 0
      %1174 = vmatprep.subr.bf16.mxu0 0
      %1175 = vmatpush2.bf16.msra.mxu0 0
      %1176 = vmatprep.subr.bf16.mxu0 0
      %1177 = vmatpush2.bf16.msra.mxu0 0
      %1178 = vmatprep.subr.bf16.mxu0 0
      %1179 = vmatpush2.bf16.msra.mxu0 0
      %1180 = vmatprep.subr.bf16.mxu0 0
      %1181 = vmatpush2.bf16.msra.mxu0 0
      %1182 = vmatprep.subr.bf16.mxu0 0
      %1183 = vmatpush2.bf16.msra.mxu0 0
      %1184 = vmatprep.subr.bf16.mxu0 0
      %1185 = vmatpush2.bf16.msra.mxu0 0
      %1186 = vmatprep.mubr.bf16.mxu0 0
      %1187 = vmatmul.mubr.bf16.gmra.mxu0 %v1143
      %v1188 = vpop.f32.mrf.mxu0
      %v1189 = vadd.f32 0.0, %v1188
      %v1190 = vpop.f32.mrf.mxu0
      %v1191 = vadd.f32 0.0, %v1190
      %v1192 = vpop.f32.mrf.mxu0
      %v1193 = vpop.f32.mrf.mxu0
      %1194 = vdwg.mxu0
      %1195 = vmatprep.subr.bf16.mxu0 0
      %1196 = vmatpush1.bf16.msra.mxu0 0
      %1197 = vmatprep.subr.bf16.mxu0 0
      %1198 = vmatpush1.bf16.msra.mxu0 0
      %1199 = vmatprep.subr.bf16.mxu0 0
      %1200 = vmatpush1.bf16.msra.mxu0 0
      %1201 = vmatprep.subr.bf16.mxu0 0
      %1202 = vmatpush1.bf16.msra.mxu0 0
      %1203 = vmatprep.subr.bf16.mxu0 0
      %1204 = vmatpush1.bf16.msra.mxu0 0
      %1205 = vmatprep.subr.bf16.mxu0 0
      %1206 = vmatpush1.bf16.msra.mxu0 %v1152
      %1207 = vmatprep.subr.bf16.mxu0 0
      %1208 = vmatpush1.bf16.msra.mxu0 %v1132
      %1209 = vmatprep.subr.bf16.mxu0 0
      %1210 = vmatpush1.bf16.msra.mxu0 %v1129
      %1211 = vmatprep.subr.bf16.mxu0 0
      %1212 = vmatpush2.bf16.msra.mxu0 0
      %1213 = vmatprep.subr.bf16.mxu0 0
      %1214 = vmatpush2.bf16.msra.mxu0 0
      %1215 = vmatprep.subr.bf16.mxu0 0
      %1216 = vmatpush2.bf16.msra.mxu0 0
      %1217 = vmatprep.subr.bf16.mxu0 0
      %1218 = vmatpush2.bf16.msra.mxu0 0
      %1219 = vmatprep.subr.bf16.mxu0 0
      %1220 = vmatpush2.bf16.msra.mxu0 0
      %1221 = vmatprep.subr.bf16.mxu0 0
      %1222 = vmatpush2.bf16.msra.mxu0 0
      %1223 = vmatprep.subr.bf16.mxu0 0
      %1224 = vmatpush2.bf16.msra.mxu0 0
      %1225 = vmatprep.subr.bf16.mxu0 0
      %1226 = vmatpush2.bf16.msra.mxu0 0
      %1227 = vmatprep.mubr.bf16.mxu0 0
      %1228 = vmatmul.mubr.bf16.gmra.mxu0 %v1143
      %v1229 = vpop.f32.mrf.mxu0
      %v1230 = vadd.f32 0.0, %v1229
      %v1231 = vpop.f32.mrf.mxu0
      %v1232 = vpop.f32.mrf.mxu0
      %v1233 = vpop.f32.mrf.mxu0
      %1234 = vdwg.mxu0
      %v1235 = vadd.f32 %v732, %v1189
      %v1236 = vadd.f32 %v734, %v1191
      %v1237 = vadd.f32 %v775, %v1230
      %v1238 = vxor.u32 %v1235, 2147483648
      %v1239 = vxor.u32 %v1236, 2147483648
      %v1240 = vxor.u32 %v1237, 2147483648
      %v1241 = vmul.f32 %v1238, 1.442695
      %v1242 = vpow.pop %v1241
      %v1243 = vmul.f32 %v1239, 1.442695
      %v1244 = vpow.pop %v1243
      %v1245 = vmul.f32 %v1240, 1.442695
      %v1246 = vpow.pop %v1245
      %v1247 = vadd.f32 %v1242, 1.0
      %v1248 = vadd.f32 %v1244, 1.0
      %v1249 = vadd.f32 %v1246, 1.0
      %v1250 = vrcp.pop %v1247
      %v1251 = vmul.f32 1.0, %v1250
      %v1252 = vrcp.pop %v1248
      %v1253 = vmul.f32 1.0, %v1252
      %v1254 = vrcp.pop %v1249
      %v1255 = vmul.f32 1.0, %v1254
      %v1259 = vcombine.high %v1251, %v1253
      %v1260 = vcombine.high %v1255, %v1255
      %v1263 = vmul.f32 %v781, %v1259
      %v1264 = vmul.f32 %v782, %v1260
      %1265 = vst [vmem:[#allocation2 + $0x4] sm:$0xff] %v1263
      %1266 = vst [vmem:[#allocation2 + $0xc] sm:$0xf] %v1264
      %v1267 = vld [vmem:[#allocation2] sm:$0xff]
      %v1268 = vld [vmem:[#allocation2 + $0x8] sm:$0xff]
      %v1271 = vcombine.high %v1267, %v1267
      %v1272 = vcombine.high %v1268, %v1268
      %v1275 = vpack.c.bf16 %v1267, %v1267
      %v1276 = vpack.c.bf16 %v1271, %v1271
      %v1277 = vpack.c.bf16 %v1268, %v1268
      %v1278 = vpack.c.bf16 %v1272, %v1272
      %v1283 = vunpack.c.l.b16 %v1275
      %v1284 = vunpack.c.l.b16 %v1276
      %v1285 = vunpack.c.l.b16 %v1277
      %v1286 = vunpack.c.l.b16 %v1278
      %v1287 = vpack.c.b16 %v1284, %v1283
      %v1288 = vpack.c.b16 %v1286, %v1285
      %1289 = vrot.lane.b32.xlu0 %v1287, 19
      %v1290 = vpop.permute.xlu0 %1289
      %1291 = vrot.lane.b32.xlu0 %v1288, 19
      %v1292 = vpop.permute.xlu0 %1291
      %v1293 = vrot.slane %v1290, 4
      %v1294 = vrot.slane %v1292, 4
      %v1295 = vsel %vm325, %v1293, %v1294
      %v1296 = vsel %vm327, %v1290, %v1295
      %v1297 = vsel %vm327, %v1292, %v1294
      %1300 = vst [vmem:[#allocation3] sm:$0x33] %v1296
      %1301 = vst [vmem:[#allocation3 + $0x8] sm:$0x3] %v1297
      %v1302 = vld [vmem:[#allocation2] sm:$0xff]
      %v1303 = vld [vmem:[#allocation2 + $0x8] sm:$0xff]
      %v1306 = vcombine.high %v1302, %v1302
      %v1307 = vcombine.high %v1303, %v1303
      %v1310 = vpack.c.bf16 %v1302, %v1302
      %v1311 = vpack.c.bf16 %v1306, %v1306
      %v1312 = vpack.c.bf16 %v1303, %v1303
      %v1313 = vpack.c.bf16 %v1307, %v1307
      %v1318 = vunpack.c.l.b16 %v1310
      %v1319 = vunpack.c.l.b16 %v1311
      %v1320 = vunpack.c.l.b16 %v1312
      %v1321 = vunpack.c.l.b16 %v1313
      %v1322 = vpack.c.b16 %v1319, %v1318
      %v1323 = vpack.c.b16 %v1321, %v1320
      %v1324 = vrot.slane %v1322, 6
      %v1325 = vrot.slane %v1323, 6
      %1326 = vrot.lane.b32.xlu0 %v1324, 18
      %v1327 = vpop.permute.xlu0 %1326
      %1328 = vrot.lane.b32.xlu0 %v1325, 18
      %v1329 = vpop.permute.xlu0 %1328
      %v1330 = vrot.slane %v1327, 4
      %v1331 = vrot.slane %v1329, 4
      %v1332 = vsel %vm325, %v1330, %v1331
      %v1333 = vsel %vm365, %v1327, %v1332
      %v1334 = vsel %vm365, %v1329, %v1331
      %1337 = vst [vmem:[#allocation3] sm:$0xcc] %v1333
      %1338 = vst [vmem:[#allocation3 + $0x8] sm:$0xc] %v1334
      %v1339 = vld [vmem:[#allocation2] sm:$0xff]
      %v1340 = vld [vmem:[#allocation2 + $0x8] sm:$0xff]
      %v1343 = vcombine.high %v1339, %v1339
      %v1344 = vcombine.high %v1340, %v1340
      %v1347 = vpack.c.bf16 %v1339, %v1339
      %v1348 = vpack.c.bf16 %v1343, %v1343
      %v1349 = vpack.c.bf16 %v1340, %v1340
      %v1350 = vpack.c.bf16 %v1344, %v1344
      %v1355 = vunpack.c.l.b16 %v1347
      %v1356 = vunpack.c.l.b16 %v1348
      %v1357 = vunpack.c.l.b16 %v1349
      %v1358 = vunpack.c.l.b16 %v1350
      %v1359 = vpack.c.b16 %v1356, %v1355
      %v1360 = vpack.c.b16 %v1358, %v1357
      %1361 = vrot.lane.b32.xlu0 %v1359, 17
      %v1362 = vpop.permute.xlu0 %1361
      %1363 = vrot.lane.b32.xlu0 %v1360, 17
      %v1364 = vpop.permute.xlu0 %1363
      %v1365 = vrot.slane %v1362, 4
      %v1366 = vrot.slane %v1364, 4
      %v1367 = vsel %vm325, %v1365, %v1366
      %v1368 = vsel %vm401, %v1362, %v1367
      %v1369 = vsel %vm401, %v1364, %v1366
      %1372 = vst [vmem:[#allocation3 + $0xc] sm:$0x33] %v1368
      %1373 = vst [vmem:[#allocation3 + $0x14] sm:$0x3] %v1369
      %v1374 = vld [vmem:[#allocation2] sm:$0xff]
      %v1375 = vld [vmem:[#allocation2 + $0x8] sm:$0xff]
      %v1378 = vcombine.high %v1374, %v1374
      %v1379 = vcombine.high %v1375, %v1375
      %v1382 = vpack.c.bf16 %v1374, %v1374
      %v1383 = vpack.c.bf16 %v1378, %v1378
      %v1384 = vpack.c.bf16 %v1375, %v1375
      %v1385 = vpack.c.bf16 %v1379, %v1379
      %v1390 = vunpack.c.l.b16 %v1382
      %v1391 = vunpack.c.l.b16 %v1383
      %v1392 = vunpack.c.l.b16 %v1384
      %v1393 = vunpack.c.l.b16 %v1385
      %v1394 = vpack.c.b16 %v1391, %v1390
      %v1395 = vpack.c.b16 %v1393, %v1392
      %v1396 = vrot.slane %v1394, 6
      %v1397 = vrot.slane %v1395, 6
      %1398 = vrot.lane.b32.xlu0 %v1396, 1
      %v1399 = vpop.permute.xlu0 %1398
      %1400 = vrot.lane.b32.xlu0 %v1397, 1
      %v1401 = vpop.permute.xlu0 %1400
      %v1402 = vrot.slane %v1399, 4
      %v1403 = vrot.slane %v1401, 4
      %v1404 = vsel %vm325, %v1402, %v1403
      %v1405 = vsel %vm439, %v1399, %v1404
      %v1406 = vsel %vm439, %v1401, %v1403
      %1409 = vst [vmem:[#allocation3 + $0xc] sm:$0xcc] %v1405
      %1410 = vst [vmem:[#allocation3 + $0x14] sm:$0xc] %v1406
      %v1411 = vld [vmem:[#allocation2 + $0x4] sm:$0xff]
      %v1412 = vld [vmem:[#allocation2 + $0xc] sm:$0xf]
      %v1414 = vcombine.high %v1411, %v1411
      %v1416 = vpack.c.bf16 %v1411, %v1411
      %v1417 = vpack.c.bf16 %v1414, %v1414
      %v1418 = vpack.c.bf16 %v1412, %v1412
      %v1422 = vunpack.c.l.b16 %v1416
      %v1423 = vunpack.c.l.b16 %v1417
      %v1424 = vunpack.c.l.b16 %v1418
      %v1425 = vpack.c.b16 %v1423, %v1422
      %v1426 = vpack.c.b16 %v1424, %v1424
      %1429 = vst [vmem:[#allocation3 + $0x18] sm:$0x33] %v1425
      %1430 = vst [vmem:[#allocation3 + $0x20] sm:$0x3] %v1426
      %v1431 = vld [vmem:[#allocation2 + $0x4] sm:$0xff]
      %v1432 = vld [vmem:[#allocation2 + $0xc] sm:$0xff]
      %v1435 = vcombine.high %v1431, %v1431
      %v1436 = vcombine.high %v1432, %v1432
      %v1439 = vpack.c.bf16 %v1431, %v1431
      %v1440 = vpack.c.bf16 %v1435, %v1435
      %v1441 = vpack.c.bf16 %v1432, %v1432
      %v1442 = vpack.c.bf16 %v1436, %v1436
      %v1447 = vunpack.c.l.b16 %v1439
      %v1448 = vunpack.c.l.b16 %v1440
      %v1449 = vunpack.c.l.b16 %v1441
      %v1450 = vunpack.c.l.b16 %v1442
      %v1451 = vpack.c.b16 %v1448, %v1447
      %v1452 = vpack.c.b16 %v1450, %v1449
      %v1453 = vrot.slane %v1451, 6
      %v1454 = vrot.slane %v1452, 6
      %1455 = vrot.lane.b32.xlu0 %v1453, 127
      %v1456 = vpop.permute.xlu0 %1455
      %1457 = vrot.lane.b32.xlu0 %v1454, 127
      %v1458 = vpop.permute.xlu0 %1457
      %v1459 = vrot.slane %v1456, 4
      %v1460 = vrot.slane %v1458, 4
      %v1461 = vsel %vm325, %v1459, %v1460
      %v1462 = vsel %vm497, %v1456, %v1461
      %v1463 = vsel %vm497, %v1458, %v1460
      %1466 = vst [vmem:[#allocation3 + $0x18] sm:$0xcc] %v1462
      %1467 = vst [vmem:[#allocation3 + $0x20] sm:$0xc] %v1463
      %v1468 = vld [vmem:[#allocation2 + $0x4] sm:$0xff]
      %v1469 = vld [vmem:[#allocation2 + $0xc] sm:$0xff]
      %v1472 = vcombine.high %v1468, %v1468
      %v1473 = vcombine.high %v1469, %v1469
      %v1476 = vpack.c.bf16 %v1468, %v1468
      %v1477 = vpack.c.bf16 %v1472, %v1472
      %v1478 = vpack.c.bf16 %v1469, %v1469
      %v1479 = vpack.c.bf16 %v1473, %v1473
      %v1484 = vunpack.c.l.b16 %v1476
      %v1485 = vunpack.c.l.b16 %v1477
      %v1486 = vunpack.c.l.b16 %v1478
      %v1487 = vunpack.c.l.b16 %v1479
      %v1488 = vpack.c.b16 %v1485, %v1484
      %v1489 = vpack.c.b16 %v1487, %v1486
      %1490 = vrot.lane.b32.xlu0 %v1488, 111
      %v1491 = vpop.permute.xlu0 %1490
      %1492 = vrot.lane.b32.xlu0 %v1489, 111
      %v1493 = vpop.permute.xlu0 %1492
      %v1494 = vrot.slane %v1491, 4
      %v1495 = vrot.slane %v1493, 4
      %v1496 = vsel %vm325, %v1494, %v1495
      %v1497 = vsel %vm533, %v1491, %v1496
      %v1498 = vsel %vm533, %v1493, %v1495
      %1501 = vst [vmem:[#allocation3 + $0x24] sm:$0x33] %v1497
      %1502 = vst [vmem:[#allocation3 + $0x2c] sm:$0x3] %v1498
      %v1503 = vld [vmem:[#allocation2 + $0x4] sm:$0xff]
      %v1504 = vld [vmem:[#allocation2 + $0xc] sm:$0xff]
      %v1507 = vcombine.high %v1503, %v1503
      %v1508 = vcombine.high %v1504, %v1504
      %v1511 = vpack.c.bf16 %v1503, %v1503
      %v1512 = vpack.c.bf16 %v1507, %v1507
      %v1513 = vpack.c.bf16 %v1504, %v1504
      %v1514 = vpack.c.bf16 %v1508, %v1508
      %v1519 = vunpack.c.l.b16 %v1511
      %v1520 = vunpack.c.l.b16 %v1512
      %v1521 = vunpack.c.l.b16 %v1513
      %v1522 = vunpack.c.l.b16 %v1514
      %v1523 = vpack.c.b16 %v1520, %v1519
      %v1524 = vpack.c.b16 %v1522, %v1521
      %v1525 = vrot.slane %v1523, 6
      %v1526 = vrot.slane %v1524, 6
      %1527 = vrot.lane.b32.xlu0 %v1525, 110
      %v1528 = vpop.permute.xlu0 %1527
      %1529 = vrot.lane.b32.xlu0 %v1526, 110
      %v1530 = vpop.permute.xlu0 %1529
      %v1531 = vrot.slane %v1528, 4
      %v1532 = vrot.slane %v1530, 4
      %v1533 = vsel %vm325, %v1531, %v1532
      %v1534 = vsel %vm571, %v1528, %v1533
      %v1535 = vsel %vm571, %v1530, %v1532
      %1538 = vst [vmem:[#allocation3 + $0x24] sm:$0xcc] %v1534
      %1539 = vst [vmem:[#allocation3 + $0x2c] sm:$0xc] %v1535
      %v1540 = vld [vmem:[#allocation2 + $0x4] sm:$0xff]
      %v1541 = vld [vmem:[#allocation2 + $0xc] sm:$0xff]
      %v1544 = vcombine.high %v1540, %v1540
      %v1545 = vcombine.high %v1541, %v1541
      %v1548 = vpack.c.bf16 %v1540, %v1540
      %v1549 = vpack.c.bf16 %v1544, %v1544
      %v1550 = vpack.c.bf16 %v1541, %v1541
      %v1551 = vpack.c.bf16 %v1545, %v1545
      %v1556 = vunpack.c.l.b16 %v1548
      %v1557 = vunpack.c.l.b16 %v1549
      %v1558 = vunpack.c.l.b16 %v1550
      %v1559 = vunpack.c.l.b16 %v1551
      %v1560 = vpack.c.b16 %v1557, %v1556
      %v1561 = vpack.c.b16 %v1559, %v1558
      %1562 = vrot.lane.b32.xlu0 %v1560, 109
      %v1563 = vpop.permute.xlu0 %1562
      %1564 = vrot.lane.b32.xlu0 %v1561, 109
      %v1565 = vpop.permute.xlu0 %1564
      %v1566 = vrot.slane %v1563, 4
      %v1567 = vrot.slane %v1565, 4
      %v1568 = vsel %vm325, %v1566, %v1567
      %v1569 = vsel %vm607, %v1563, %v1568
      %v1570 = vsel %vm607, %v1565, %v1567
      %1573 = vst [vmem:[#allocation3 + $0x30] sm:$0x33] %v1569
      %1574 = vst [vmem:[#allocation3 + $0x38] sm:$0x3] %v1570
      %v1575 = vld [vmem:[%s3] sm:$0x3]
      %v1576 = vld [vmem:[#allocation3] sm:$0xff]
      %v1577 = vld [vmem:[#allocation3 + $0x8] sm:$0xf]
      %v1578 = vld [vmem:[#allocation3 + $0xc] sm:$0xff]
      %v1579 = vld [vmem:[#allocation3 + $0x14] sm:$0xf]
      %v1580 = vld [vmem:[#allocation3 + $0x18] sm:$0xff]
      %v1581 = vld [vmem:[#allocation3 + $0x20] sm:$0xf]
      %v1582 = vld [vmem:[#allocation3 + $0x24] sm:$0xff]
      %v1583 = vld [vmem:[#allocation3 + $0x2c] sm:$0xf]
      %v1584 = vld [vmem:[#allocation3 + $0x30] sm:$0x33]
      %v1585 = vld [vmem:[#allocation3 + $0x38] sm:$0x3]
      %v1596 = vunpack.c.l.b16 %v1576
      %v1597 = vunpack.c.h.b16 %v1576
      %v1598 = vunpack.c.l.b16 %v1577
      %v1599 = vunpack.c.l.b16 %v1578
      %v1600 = vunpack.c.h.b16 %v1578
      %v1601 = vunpack.c.l.b16 %v1579
      %v1602 = vunpack.c.l.b16 %v1580
      %v1603 = vunpack.c.h.b16 %v1580
      %v1604 = vunpack.c.l.b16 %v1581
      %v1605 = vunpack.c.l.b16 %v1582
      %v1606 = vunpack.c.h.b16 %v1582
      %v1607 = vunpack.c.l.b16 %v1583
      %v1608 = vunpack.c.l.b16 %v1584
      %v1609 = vunpack.c.h.b16 %v1584
      %v1610 = vunpack.c.l.b16 %v1585
      %v1611 = vpack.c.b16 %v1599, %v1596
      %v1612 = vpack.c.b16 %v1600, %v1597
      %v1613 = vpack.c.b16 %v1601, %v1598
      %v1614 = vpack.c.b16 %v1605, %v1602
      %v1615 = vpack.c.b16 %v1606, %v1603
      %v1616 = vpack.c.b16 %v1607, %v1604
      %v1617 = vpack.c.b16 %v1608, %v1608
      %v1618 = vpack.c.b16 %v1609, %v1609
      %v1619 = vpack.c.b16 %v1610, %v1610
      %v1627 = vsel %vm683, %v1575, 0
      %v1630 = vsel %vm687, %v1617, 0
      %v1633 = vsel %vm687, %v1618, 0
      %v1636 = vsel %vm687, %v1619, 0
      %1638 = vmatprep.subr.bf16.mxu0 0
      %1639 = vmatpush1.bf16.msra.mxu0 0
      %1640 = vmatprep.subr.bf16.mxu0 0
      %1641 = vmatpush1.bf16.msra.mxu0 0
      %1642 = vmatprep.subr.bf16.mxu0 0
      %1643 = vmatpush1.bf16.msra.mxu0 0
      %1644 = vmatprep.subr.bf16.mxu0 0
      %1645 = vmatpush1.bf16.msra.mxu0 0
      %1646 = vmatprep.subr.bf16.mxu0 0
      %1647 = vmatpush1.bf16.msra.mxu0 0
      %1648 = vmatprep.subr.bf16.mxu0 %v1633
      %1649 = vmatpush1.bf16.msra.mxu0 %v1630
      %1650 = vmatprep.subr.bf16.mxu0 %v1615
      %1651 = vmatpush1.bf16.msra.mxu0 %v1614
      %1652 = vmatprep.subr.bf16.mxu0 %v1612
      %1653 = vmatpush1.bf16.msra.mxu0 %v1611
      %1654 = vmatprep.subr.bf16.mxu0 0
      %1655 = vmatpush2.bf16.msra.mxu0 0
      %1656 = vmatprep.subr.bf16.mxu0 0
      %1657 = vmatpush2.bf16.msra.mxu0 0
      %1658 = vmatprep.subr.bf16.mxu0 0
      %1659 = vmatpush2.bf16.msra.mxu0 0
      %1660 = vmatprep.subr.bf16.mxu0 0
      %1661 = vmatpush2.bf16.msra.mxu0 0
      %1662 = vmatprep.subr.bf16.mxu0 0
      %1663 = vmatpush2.bf16.msra.mxu0 0
      %1664 = vmatprep.subr.bf16.mxu0 0
      %1665 = vmatpush2.bf16.msra.mxu0 0
      %1666 = vmatprep.subr.bf16.mxu0 0
      %1667 = vmatpush2.bf16.msra.mxu0 0
      %1668 = vmatprep.subr.bf16.mxu0 0
      %1669 = vmatpush2.bf16.msra.mxu0 0
      %1670 = vmatprep.mubr.bf16.mxu0 0
      %1671 = vmatmul.mubr.bf16.gmra.mxu0 %v1627
      %v1672 = vpop.f32.mrf.mxu0
      %v1673 = vadd.f32 0.0, %v1672
      %v1674 = vpop.f32.mrf.mxu0
      %v1675 = vadd.f32 0.0, %v1674
      %v1676 = vpop.f32.mrf.mxu0
      %v1677 = vpop.f32.mrf.mxu0
      %1678 = vdwg.mxu0
      %1679 = vmatprep.subr.bf16.mxu0 0
      %1680 = vmatpush1.bf16.msra.mxu0 0
      %1681 = vmatprep.subr.bf16.mxu0 0
      %1682 = vmatpush1.bf16.msra.mxu0 0
      %1683 = vmatprep.subr.bf16.mxu0 0
      %1684 = vmatpush1.bf16.msra.mxu0 0
      %1685 = vmatprep.subr.bf16.mxu0 0
      %1686 = vmatpush1.bf16.msra.mxu0 0
      %1687 = vmatprep.subr.bf16.mxu0 0
      %1688 = vmatpush1.bf16.msra.mxu0 0
      %1689 = vmatprep.subr.bf16.mxu0 0
      %1690 = vmatpush1.bf16.msra.mxu0 %v1636
      %1691 = vmatprep.subr.bf16.mxu0 0
      %1692 = vmatpush1.bf16.msra.mxu0 %v1616
      %1693 = vmatprep.subr.bf16.mxu0 0
      %1694 = vmatpush1.bf16.msra.mxu0 %v1613
      %1695 = vmatprep.subr.bf16.mxu0 0
      %1696 = vmatpush2.bf16.msra.mxu0 0
      %1697 = vmatprep.subr.bf16.mxu0 0
      %1698 = vmatpush2.bf16.msra.mxu0 0
      %1699 = vmatprep.subr.bf16.mxu0 0
      %1700 = vmatpush2.bf16.msra.mxu0 0
      %1701 = vmatprep.subr.bf16.mxu0 0
      %1702 = vmatpush2.bf16.msra.mxu0 0
      %1703 = vmatprep.subr.bf16.mxu0 0
      %1704 = vmatpush2.bf16.msra.mxu0 0
      %1705 = vmatprep.subr.bf16.mxu0 0
      %1706 = vmatpush2.bf16.msra.mxu0 0
      %1707 = vmatprep.subr.bf16.mxu0 0
      %1708 = vmatpush2.bf16.msra.mxu0 0
      %1709 = vmatprep.subr.bf16.mxu0 0
      %1710 = vmatpush2.bf16.msra.mxu0 0
      %1711 = vmatprep.mubr.bf16.mxu0 0
      %1712 = vmatmul.mubr.bf16.gmra.mxu0 %v1627
      %v1713 = vpop.f32.mrf.mxu0
      %v1714 = vadd.f32 0.0, %v1713
      %v1715 = vpop.f32.mrf.mxu0
      %v1716 = vpop.f32.mrf.mxu0
      %v1717 = vpop.f32.mrf.mxu0
      %1718 = vdwg.mxu0
      %v1719 = vadd.f32 %v736, %v1673
      %v1720 = vadd.f32 %v738, %v1675
      %v1721 = vadd.f32 %v778, %v1714
      %v1722 = vtanh.pop %v1719
      %v1723 = vtanh.pop %v1720
      %v1724 = vtanh.pop %v1721
      %v1725 = vsub.f32 1.0, %v1251
      %v1726 = vsub.f32 1.0, %v1253
      %v1727 = vsub.f32 1.0, %v1255
      %v1730 = vcombine.low %v1725, %v1726
      %v1732 = vmul.f32 %v781, %v1730
      %v1733 = vmul.f32 %v782, %v1727
      %v1734 = vmul.f32 %v1722, %v1251
      %v1735 = vmul.f32 %v1723, %v1253
      %v1736 = vmul.f32 %v1724, %v1255
      %v1739 = vcombine.low %v1734, %v1735
      %v1741 = vadd.f32 %v1732, %v1739
      %v1742 = vadd.f32 %v1733, %v1736
      %v1743 = vld [vmem:[%s5] sm:$0x7]
      %v1745 = vlaneseq
      %v1746 = vshrl.u32 %v1745, 7
      %v1747 = vsub.s32 0, %v1746
      %v1748 = vrot.slane %v1743, %v1747
      %v1749 = vlaneseq
      %v1750 = vshrl.u32 %v1749, 7
      %v1751 = vsub.s32 1, %v1750
      %v1752 = vrot.slane %v1743, %v1751
      %v1753 = vlaneseq
      %v1754 = vshrl.u32 %v1753, 7
      %v1755 = vsub.s32 2, %v1754
      %v1756 = vrot.slane %v1743, %v1755
      %v1758 = vcombine.low %v1748, %v1752
      %v1760 = vmul.f32 %v1741, %v1758
      %v1761 = vmul.f32 %v1742, %v1756
      %1762 = vst [vmem:[%s287] sm:$0xff] %v1760
      %1763 = vst [vmem:[%s287 + $0x8] sm:$0xf] %v1761
      %1764 = vst [vmem:[#allocation2 + $0x4] sm:$0xff] %v1760
      %1765 = vst [vmem:[#allocation2 + $0xc] sm:$0xf] %v1761
      %p1766 = scmp.lt.s32.totalorder %s21, 1
      %s1767 = scalar_select %p1766, %s21, 1
      %p1768 = scmp.lt.s32.totalorder %s22, 3
      %s1769 = scalar_select %p1768, %s22, 3
      %s1770 = smul.addr %s1769, 3
      %s1771 = smul.addr %s1767, 12
      %s1772 = sadd.s32 %s1770, %s1771
      %s1773 = smul.addr %s1772, 4
      %s1774 = scalar_lea.vmem %s6, %s1773
      // Predicated region
      $region49: #{encoder_forward.2} parent=43 // pred_check
        %p1775 = pneg %p182
      $region50: #{encoder_forward.2} parent=43 // pred_check_branch
        %1777 = sbr.rel (%p1775) target = $region52
      $region51: #{encoder_forward.2} parent=43 // pred_region
        _
      $region52: #{encoder_forward.2} parent=43 // pred_fallthru
        _
    $region44: #{encoder_forward.2} parent=5 // pred_fallthru
      _
    %p1778 = scmp.le.s32.totalorder 2, %s12
    // Predicated region
    $region53: #{encoder_forward.2} parent=5 // pred_check
      %p1779 = pneg %p1778
    $region54: #{encoder_forward.2} parent=5 // pred_check_branch
      %1781 = sbr.rel (%p1779) target = $region56
    $region55: #{encoder_forward.2} parent=5 // pred_region
      %s1782 = ssub.s32 %s12, 2
      // Predicated region
      $region57: #{encoder_forward.2} parent=55 // pred_check
        %p1783 = pneg %p188
      $region58: #{encoder_forward.2} parent=55 // pred_check_branch
        %1785 = sbr.rel (%p1783) target = $region60
      $region59: #{encoder_forward.2} parent=55 // pred_region
        %p1786 = scmp.lt.s32.totalorder %s23, 1
        %s1787 = scalar_select %p1786, %s23, 1
        %p1788 = scmp.lt.s32.totalorder %s24, 3
        %s1789 = scalar_select %p1788, %s24, 3
        %s1790 = smul.addr %s1789, 3
        %s1791 = smul.addr %s1787, 12
        %s1792 = sadd.s32 %s1790, %s1791
        %s1793 = smul.addr %s1792, 4
        %s1794 = scalar_lea.vmem %s6, %s1793
      $region60: #{encoder_forward.2} parent=55 // pred_fallthru
        _
    $region56: #{encoder_forward.2} parent=5 // pred_fallthru
      _
  $region6: #{encoder_forward.2} parent=0 // loop_footer
    %s16 = sadd.s32 1, %s12
  $region7: #{encoder_forward.2} parent=0 // loop_footer_branch
    %11 = sbr.rel target = $region3
  $region8: #{encoder_forward.2} parent=0 // loop_exit
    _

// kernel: encoder_forward.3
$region0: #{encoder_forward.3}
  #allocation0 [shape = 'u32[]', space=smem, size = 0x4, offset = 0x4, fixed_abs, tag = 'smem constant byte address 0x4 - core index']
  #allocation1 [shape = 'u32[144,128]{1,0:T(1,128)}', space=vmem, size = 0x12000, scoped, tag = 'internal scratch']
  #allocation2 [shape = 'f32[16,267]{1,0:T(8,128)}', space=vmem, size = 0x6000, scoped, tag = 'scratch operand']
  #allocation3 [shape = 'bf16[144,128]{1,0:T(8,128)(2,1)}', space=vmem, size = 0x9000, scoped, tag = 'scratch operand']
  %s0 = inlined_call_operand.vmem [shape: f32[2,4,16,267], index: 0, kind: input, shape index: {}]
  %s1 = inlined_call_operand.vmem [shape: bf16[48,144], index: 1, kind: input, shape index: {}]
  %s2 = inlined_call_operand.vmem [shape: bf16[32,144], index: 2, kind: input, shape index: {}]
  %s3 = inlined_call_operand.vmem [shape: bf16[16,144], index: 3, kind: input, shape index: {}]
  %s4 = inlined_call_operand.vmem [shape: f32[48,1], index: 4, kind: input, shape index: {}]
  %s5 = inlined_call_operand.vmem [shape: f32[1,128], index: 5, kind: input, shape index: {}]
  %s6 = inlined_call_operand.vmem [shape: f32[2,4,16,128], index: 6, kind: output, shape index: {}]
  %s7 = sld [smem:[#allocation0]]
  $region61: #{encoder_forward.3} parent=0
    _
  %s9 = ssub.s32 1, %s7
  %s10 = scalar_select 0, %s9, %s7
  loop: start=0, step=1, limit=10
  $region2: #{encoder_forward.3} parent=0 // loop_pre_header
    _
  $region3: #{encoder_forward.3} parent=0 // loop_header
    %s12 = sphi 0, %s16
    %p13 = scmp.ge.s32.totalorder %s12, 10
    %s19 = sphi 0, %s31
    %s20 = sphi 0, %s27
    %s21 = sphi 0, %s19
    %s22 = sphi 0, %s20
    %s23 = sphi 0, %s21
    %s24 = sphi 0, %s22
    %s36 = sphi 0, %s38
    %s39 = sphi 0, %s36
    %s40 = sphi 0, %s39
    %s56 = sphi 0, %s40
    %s60 = sphi 0, %s60
    %s62 = sphi 0, %s60
    %s63 = sphi 0, %s62
    %s77 = sphi 0, %s63
    %s81 = sphi 0, %s81
    %s83 = sphi 0, %s81
    %s84 = sphi 0, %s83
    %s98 = sphi 0, %s84
    %s102 = sphi 0, %s102
    %s104 = sphi 0, %s102
    %s105 = sphi 0, %s104
    %s119 = sphi 0, %s105
    %s123 = sphi 0, %s123
    %s125 = sphi 0, %s123
    %s126 = sphi 0, %s125
    %s140 = sphi 0, %s126
    %s144 = sphi 0, %s144
    %s146 = sphi 0, %s144
    %s147 = sphi 0, %s146
    %s161 = sphi 0, %s147
    %s169 = sphi 0, %s171
    %s172 = sphi 0, %s169
    %s173 = sphi 0, %s172
    %s189 = sphi 0, %s173
  $region4: #{encoder_forward.3} parent=0 // loop_header_branch
    %15 = sbr.rel (%p13) target = $region8
  $region5: #{encoder_forward.3} parent=0 // loop_body
    %s17 = ssub.s32 %s12, 1
    %s18 = ssub.s32 %s12, 2
    %s25 = sadd.s32 1, %s20
    %p26 = scmp.ge.s32.totalorder %s25, 4
    %s27 = scalar_select %p26, 0, %s25
    %s28 = sadd.s32 1, %s19
    %s29 = scalar_select %p26, %s28, %s19
    %p30 = scmp.ge.s32.totalorder %s29, 2
    %s31 = scalar_select %p30, 0, %s29
    %s32 = ssub.s32 %s19, %s31
    %s33 = ssub.s32 %s20, %s27
    %s34 = sor.u32 %s32, %s33
    %p35 = scmp.eq.s32.totalorder %s34, 0
    %s37 = sadd.s32 %s36, 1
    %s38 = scalar_select %p35, %s36, %s37
    %p41 = pneg %p35
    %p42 = scmp.eq.s32.totalorder %s12, 7
    %p43 = por %p41, %p42
    %p44 = scmp.ne.s32.totalorder %s36, %s39
    %p45 = scmp.eq.s32.totalorder %s12, 0
    %p46 = por %p44, %p45
    %p47 = scmp.ne.s32.totalorder %s36, %s39
    %p48 = scmp.eq.s32.totalorder %s17, 7
    %p49 = por %p47, %p48
    %p50 = scmp.ne.s32.totalorder %s39, %s40
    %p51 = scmp.eq.s32.totalorder %s17, 0
    %p52 = por %p50, %p51
    %p53 = scmp.ne.s32.totalorder %s39, %s40
    %p54 = scmp.eq.s32.totalorder %s18, 7
    %p55 = por %p53, %p54
    %p57 = scmp.ne.s32.totalorder %s40, %s56
    %p58 = scmp.eq.s32.totalorder %s18, 0
    %p59 = por %p57, %p58
    %s61 = sadd.s32 %s60, 1
    %p64 = scmp.eq.s32.totalorder %s12, 7
    %p65 = scmp.ne.s32.totalorder %s60, %s62
    %p66 = scmp.eq.s32.totalorder %s12, 0
    %p67 = por %p65, %p66
    %p68 = scmp.ne.s32.totalorder %s60, %s62
    %p69 = scmp.eq.s32.totalorder %s17, 7
    %p70 = por %p68, %p69
    %p71 = scmp.ne.s32.totalorder %s62, %s63
    %p72 = scmp.eq.s32.totalorder %s17, 0
    %p73 = por %p71, %p72
    %p74 = scmp.ne.s32.totalorder %s62, %s63
    %p75 = scmp.eq.s32.totalorder %s18, 7
    %p76 = por %p74, %p75
    %p78 = scmp.ne.s32.totalorder %s63, %s77
    %p79 = scmp.eq.s32.totalorder %s18, 0
    %p80 = por %p78, %p79
    %s82 = sadd.s32 %s81, 1
    %p85 = scmp.eq.s32.totalorder %s12, 7
    %p86 = scmp.ne.s32.totalorder %s81, %s83
    %p87 = scmp.eq.s32.totalorder %s12, 0
    %p88 = por %p86, %p87
    %p89 = scmp.ne.s32.totalorder %s81, %s83
    %p90 = scmp.eq.s32.totalorder %s17, 7
    %p91 = por %p89, %p90
    %p92 = scmp.ne.s32.totalorder %s83, %s84
    %p93 = scmp.eq.s32.totalorder %s17, 0
    %p94 = por %p92, %p93
    %p95 = scmp.ne.s32.totalorder %s83, %s84
    %p96 = scmp.eq.s32.totalorder %s18, 7
    %p97 = por %p95, %p96
    %p99 = scmp.ne.s32.totalorder %s84, %s98
    %p100 = scmp.eq.s32.totalorder %s18, 0
    %p101 = por %p99, %p100
    %s103 = sadd.s32 %s102, 1
    %p106 = scmp.eq.s32.totalorder %s12, 7
    %p107 = scmp.ne.s32.totalorder %s102, %s104
    %p108 = scmp.eq.s32.totalorder %s12, 0
    %p109 = por %p107, %p108
    %p110 = scmp.ne.s32.totalorder %s102, %s104
    %p111 = scmp.eq.s32.totalorder %s17, 7
    %p112 = por %p110, %p111
    %p113 = scmp.ne.s32.totalorder %s104, %s105
    %p114 = scmp.eq.s32.totalorder %s17, 0
    %p115 = por %p113, %p114
    %p116 = scmp.ne.s32.totalorder %s104, %s105
    %p117 = scmp.eq.s32.totalorder %s18, 7
    %p118 = por %p116, %p117
    %p120 = scmp.ne.s32.totalorder %s105, %s119
    %p121 = scmp.eq.s32.totalorder %s18, 0
    %p122 = por %p120, %p121
    %s124 = sadd.s32 %s123, 1
    %p127 = scmp.eq.s32.totalorder %s12, 7
    %p128 = scmp.ne.s32.totalorder %s123, %s125
    %p129 = scmp.eq.s32.totalorder %s12, 0
    %p130 = por %p128, %p129
    %p131 = scmp.ne.s32.totalorder %s123, %s125
    %p132 = scmp.eq.s32.totalorder %s17, 7
    %p133 = por %p131, %p132
    %p134 = scmp.ne.s32.totalorder %s125, %s126
    %p135 = scmp.eq.s32.totalorder %s17, 0
    %p136 = por %p134, %p135
    %p137 = scmp.ne.s32.totalorder %s125, %s126
    %p138 = scmp.eq.s32.totalorder %s18, 7
    %p139 = por %p137, %p138
    %p141 = scmp.ne.s32.totalorder %s126, %s140
    %p142 = scmp.eq.s32.totalorder %s18, 0
    %p143 = por %p141, %p142
    %s145 = sadd.s32 %s144, 1
    %p148 = scmp.eq.s32.totalorder %s12, 7
    %p149 = scmp.ne.s32.totalorder %s144, %s146
    %p150 = scmp.eq.s32.totalorder %s12, 0
    %p151 = por %p149, %p150
    %p152 = scmp.ne.s32.totalorder %s144, %s146
    %p153 = scmp.eq.s32.totalorder %s17, 7
    %p154 = por %p152, %p153
    %p155 = scmp.ne.s32.totalorder %s146, %s147
    %p156 = scmp.eq.s32.totalorder %s17, 0
    %p157 = por %p155, %p156
    %p158 = scmp.ne.s32.totalorder %s146, %s147
    %p159 = scmp.eq.s32.totalorder %s18, 7
    %p160 = por %p158, %p159
    %p162 = scmp.ne.s32.totalorder %s147, %s161
    %p163 = scmp.eq.s32.totalorder %s18, 0
    %p164 = por %p162, %p163
    %s165 = ssub.s32 %s19, %s31
    %s166 = ssub.s32 %s20, %s27
    %s167 = sor.u32 %s165, %s166
    %p168 = scmp.eq.s32.totalorder %s167, 0
    %s170 = sadd.s32 %s169, 1
    %s171 = scalar_select %p168, %s169, %s170
    %p174 = pneg %p168
    %p175 = scmp.eq.s32.totalorder %s12, 7
    %p176 = por %p174, %p175
    %p177 = scmp.ne.s32.totalorder %s169, %s172
    %p178 = scmp.eq.s32.totalorder %s12, 0
    %p179 = por %p177, %p178
    %p180 = scmp.ne.s32.totalorder %s169, %s172
    %p181 = scmp.eq.s32.totalorder %s17, 7
    %p182 = por %p180, %p181
    %p183 = scmp.ne.s32.totalorder %s172, %s173
    %p184 = scmp.eq.s32.totalorder %s17, 0
    %p185 = por %p183, %p184
    %p186 = scmp.ne.s32.totalorder %s172, %s173
    %p187 = scmp.eq.s32.totalorder %s18, 7
    %p188 = por %p186, %p187
    %p190 = scmp.ne.s32.totalorder %s173, %s189
    %p191 = scmp.eq.s32.totalorder %s18, 0
    %p192 = por %p190, %p191
    %p193 = scmp.le.s32.totalorder 1, %s12
    %p194 = scmp.lt.s32.totalorder %s12, 9
    %p195 = pnand %p193, %p194
    %p196 = pneg %p195
    // Predicated region
    $region9: #{encoder_forward.3} parent=5 // pred_check
      _
    $region10: #{encoder_forward.3} parent=5 // pred_check_branch
      %198 = sbr.rel (%p195) target = $region12
    $region11: #{encoder_forward.3} parent=5 // pred_region
      %s199 = ssub.s32 %s12, 1
      // Predicated region
      $region13: #{encoder_forward.3} parent=11 // pred_check
        %p200 = pneg %p73
      $region14: #{encoder_forward.3} parent=11 // pred_check_branch
        %202 = sbr.rel (%p200) target = $region16
      $region15: #{encoder_forward.3} parent=11 // pred_region
        _
      $region16: #{encoder_forward.3} parent=11 // pred_fallthru
        _
      // Predicated region
      $region17: #{encoder_forward.3} parent=11 // pred_check
        %p203 = pneg %p94
      $region18: #{encoder_forward.3} parent=11 // pred_check_branch
        %205 = sbr.rel (%p203) target = $region20
      $region19: #{encoder_forward.3} parent=11 // pred_region
        _
      $region20: #{encoder_forward.3} parent=11 // pred_fallthru
        _
      // Predicated region
      $region21: #{encoder_forward.3} parent=11 // pred_check
        %p206 = pneg %p115
      $region22: #{encoder_forward.3} parent=11 // pred_check_branch
        %208 = sbr.rel (%p206) target = $region24
      $region23: #{encoder_forward.3} parent=11 // pred_region
        _
      $region24: #{encoder_forward.3} parent=11 // pred_fallthru
        _
      // Predicated region
      $region25: #{encoder_forward.3} parent=11 // pred_check
        %p209 = pneg %p136
      $region26: #{encoder_forward.3} parent=11 // pred_check_branch
        %211 = sbr.rel (%p209) target = $region28
      $region27: #{encoder_forward.3} parent=11 // pred_region
        _
      $region28: #{encoder_forward.3} parent=11 // pred_fallthru
        _
      // Predicated region
      $region29: #{encoder_forward.3} parent=11 // pred_check
        %p212 = pneg %p157
      $region30: #{encoder_forward.3} parent=11 // pred_check_branch
        %214 = sbr.rel (%p212) target = $region32
      $region31: #{encoder_forward.3} parent=11 // pred_region
        _
      $region32: #{encoder_forward.3} parent=11 // pred_fallthru
        _
    $region12: #{encoder_forward.3} parent=5 // pred_fallthru
      _
    %p215 = scmp.lt.s32.totalorder %s12, 8
    // Predicated region
    $region33: #{encoder_forward.3} parent=5 // pred_check
      %p216 = pneg %p215
    $region34: #{encoder_forward.3} parent=5 // pred_check_branch
      %218 = sbr.rel (%p216) target = $region36
    $region35: #{encoder_forward.3} parent=5 // pred_region
      // Predicated region
      $region37: #{encoder_forward.3} parent=35 // pred_check
        %p219 = pneg %p46
      $region38: #{encoder_forward.3} parent=35 // pred_check_branch
        %221 = sbr.rel (%p219) target = $region40
      $region39: #{encoder_forward.3} parent=35 // pred_region
        %p222 = scmp.lt.s32.totalorder %s19, 1
        %s223 = scalar_select %p222, %s19, 1
        %p224 = scmp.lt.s32.totalorder %s20, 3
        %s225 = scalar_select %p224, %s20, 3
        %s226 = smul.addr %s225, 6
        %s227 = smul.addr %s223, 24
        %s228 = sadd.s32 %s226, %s227
        %s229 = smul.addr %s228, 8
        %s230 = scalar_lea.vmem %s0, %s229
      $region40: #{encoder_forward.3} parent=35 // pred_fallthru
        _
    $region36: #{encoder_forward.3} parent=5 // pred_fallthru
      _
    %p231 = scmp.le.s32.totalorder 1, %s12
    %p232 = scmp.lt.s32.totalorder %s12, 9
    %p233 = pnand %p231, %p232
    %p234 = pneg %p233
    // Predicated region
    $region41: #{encoder_forward.3} parent=5 // pred_check
      _
    $region42: #{encoder_forward.3} parent=5 // pred_check_branch
      %236 = sbr.rel (%p233) target = $region44
    $region43: #{encoder_forward.3} parent=5 // pred_region
      %s237 = ssub.s32 %s12, 1
      %p238 = scmp.lt.s32.totalorder %s21, 1
      %s239 = scalar_select %p238, %s21, 1
      %p240 = scmp.lt.s32.totalorder %s22, 3
      %s241 = scalar_select %p240, %s22, 3
      %s242 = smul.addr %s241, 6
      %s243 = smul.addr %s239, 24
      %s244 = sadd.s32 %s242, %s243
      %s245 = smul.addr %s244, 8
      %s246 = scalar_lea.vmem %s0, %s245
      %p247 = pneg %p52
      %p248 = pneg %p49
      %p249 = pneg %p73
      %p250 = pneg %p70
      %p251 = pneg %p94
      %p252 = pneg %p91
      %p253 = pneg %p115
      %p254 = pneg %p112
      %p255 = pneg %p136
      %p256 = pneg %p133
      %p257 = pneg %p157
      %p258 = pneg %p154
      %p259 = pneg %p185
      %p260 = pneg %p182
      %p261 = scmp.lt.s32.totalorder %s21, 1
      %s262 = scalar_select %p261, %s21, 1
      %p263 = scmp.lt.s32.totalorder %s22, 3
      %s264 = scalar_select %p263, %s22, 3
      %s265 = smul.addr %s264, 2
      %s266 = smul.addr %s262, 8
      %s267 = sadd.s32 %s265, %s266
      %s268 = smul.addr %s267, 8
      %s269 = scalar_lea.vmem %s6, %s268
      %p270 = scmp.lt.s32.totalorder %s21, 1
      %s271 = scalar_select %p270, %s21, 1
      %p272 = scmp.lt.s32.totalorder %s22, 3
      %s273 = scalar_select %p272, %s22, 3
      %s274 = smul.addr %s273, 6
      %s275 = smul.addr %s271, 24
      %s276 = sadd.s32 %s274, %s275
      %s277 = smul.addr %s276, 8
      %s278 = scalar_lea.vmem %s0, %s277
      %p279 = scmp.lt.s32.totalorder %s21, 1
      %s280 = scalar_select %p279, %s21, 1
      %p281 = scmp.lt.s32.totalorder %s22, 3
      %s282 = scalar_select %p281, %s22, 3
      %s283 = smul.addr %s282, 2
      %s284 = smul.addr %s280, 8
      %s285 = sadd.s32 %s283, %s284
      %s286 = smul.addr %s285, 8
      %s287 = scalar_lea.vmem %s6, %s286
      %p289 = scmp.eq.s32.totalorder %s22, 0
      // Predicated region
      $region45: #{encoder_forward.3} parent=43 // pred_check
        %p290 = pneg %p289
      $region46: #{encoder_forward.3} parent=43 // pred_check_branch
        %292 = sbr.rel (%p290) target = $region48
      $region47: #{encoder_forward.3} parent=43 // pred_region
        %293 = vst [vmem:[#allocation2] sm:$0xff] 0.0
        %294 = vst [vmem:[#allocation2 + $0x8] sm:$0xff] 0.0
        %vm295 = vcmask 89088
        %296 = vst.msk [vmem:[#allocation2 + $0x10] sm:$0xff] %vm295, 0.0
        %297 = vst [vmem:[#allocation2 + $0x18] sm:$0xff] 0.0
        %298 = vst [vmem:[#allocation2 + $0x20] sm:$0xff] 0.0
        %299 = vst.msk [vmem:[#allocation2 + $0x28] sm:$0xff] %vm295, 0.0
      $region48: #{encoder_forward.3} parent=43 // pred_fallthru
        _
      %v300 = vld [vmem:[%s278] sm:$0xff]
      %v301 = vld [vmem:[%s278 + $0x8] sm:$0xff]
      %v302 = vld [vmem:[%s278 + $0x18] sm:$0xff]
      %v303 = vld [vmem:[%s278 + $0x20] sm:$0xff]
      %v304 = vpack.c.bf16 %v302, %v300
      %v305 = vpack.c.bf16 %v303, %v301
      %v308 = vunpack.c.l.b16 %v304
      %v309 = vunpack.c.l.b16 %v305
      %v310 = vunpack.c.h.b16 %v304
      %v311 = vunpack.c.h.b16 %v305
      %v312 = vpack.c.b16 %v309, %v308
      %v313 = vpack.c.b16 %v311, %v310
      %314 = vrot.lane.b32.xlu0 %v312, 11
      %v315 = vpop.permute.xlu0 %314
      %316 = vrot.lane.b32.xlu0 %v313, 11
      %v317 = vpop.permute.xlu0 %316
      %v318 = vrot.slane %v315, 4
      %v319 = vrot.slane %v317, 4
      %vm320 = vcmask 89088
      %v321 = vsel %vm320, %v315, %v318
      %v322 = vsel %vm320, %v317, %v319
      %325 = vst [vmem:[#allocation3] sm:$0xf] %v321
      %326 = vst [vmem:[#allocation3 + $0x4] sm:$0xf] %v322
      %v327 = vld [vmem:[%s278] sm:$0xff]
      %v328 = vld [vmem:[%s278 + $0x8] sm:$0xff]
      %v329 = vld [vmem:[%s278 + $0x18] sm:$0xff]
      %v330 = vld [vmem:[%s278 + $0x20] sm:$0xff]
      %v331 = vpack.c.bf16 %v329, %v327
      %v332 = vpack.c.bf16 %v330, %v328
      %v335 = vunpack.c.l.b16 %v331
      %v336 = vunpack.c.l.b16 %v332
      %v337 = vunpack.c.h.b16 %v331
      %v338 = vunpack.c.h.b16 %v332
      %v339 = vpack.c.b16 %v336, %v335
      %v340 = vpack.c.b16 %v338, %v337
      %341 = vrot.lane.b32.xlu0 %v339, 10
      %v342 = vpop.permute.xlu0 %341
      %343 = vrot.lane.b32.xlu0 %v340, 10
      %v344 = vpop.permute.xlu0 %343
      %v345 = vrot.slane %v342, 4
      %v346 = vrot.slane %v344, 4
      %vm347 = vcmask 80896
      %v348 = vsel %vm347, %v342, %v345
      %v349 = vsel %vm347, %v344, %v346
      %352 = vst [vmem:[#allocation3 + $0x8] sm:$0xf] %v348
      %353 = vst [vmem:[#allocation3 + $0xc] sm:$0xf] %v349
      %v354 = vld [vmem:[%s278] sm:$0xff]
      %v355 = vld [vmem:[%s278 + $0x8] sm:$0xff]
      %v356 = vld [vmem:[%s278 + $0x18] sm:$0xff]
      %v357 = vld [vmem:[%s278 + $0x20] sm:$0xff]
      %v358 = vpack.c.bf16 %v356, %v354
      %v359 = vpack.c.bf16 %v357, %v355
      %v362 = vunpack.c.l.b16 %v358
      %v363 = vunpack.c.l.b16 %v359
      %v364 = vunpack.c.h.b16 %v358
      %v365 = vunpack.c.h.b16 %v359
      %v366 = vpack.c.b16 %v363, %v362
      %v367 = vpack.c.b16 %v365, %v364
      %368 = vrot.lane.b32.xlu0 %v366, 9
      %v369 = vpop.permute.xlu0 %368
      %370 = vrot.lane.b32.xlu0 %v367, 9
      %v371 = vpop.permute.xlu0 %370
      %v372 = vrot.slane %v369, 4
      %v373 = vrot.slane %v371, 4
      %vm374 = vcmask 72704
      %v375 = vsel %vm374, %v369, %v372
      %v376 = vsel %vm374, %v371, %v373
      %379 = vst [vmem:[#allocation3 + $0x10] sm:$0xf] %v375
      %380 = vst [vmem:[#allocation3 + $0x14] sm:$0xf] %v376
      %v381 = vld [vmem:[%s278] sm:$0xff]
      %v382 = vld [vmem:[%s278 + $0x8] sm:$0xff]
      %v383 = vld [vmem:[%s278 + $0x18] sm:$0xff]
      %v384 = vld [vmem:[%s278 + $0x20] sm:$0xff]
      %v385 = vpack.c.bf16 %v383, %v381
      %v386 = vpack.c.bf16 %v384, %v382
      %v389 = vunpack.c.l.b16 %v385
      %v390 = vunpack.c.l.b16 %v386
      %v391 = vunpack.c.h.b16 %v385
      %v392 = vunpack.c.h.b16 %v386
      %v393 = vpack.c.b16 %v390, %v389
      %v394 = vpack.c.b16 %v392, %v391
      %395 = vrot.lane.b32.xlu0 %v393, 1
      %v396 = vpop.permute.xlu0 %395
      %397 = vrot.lane.b32.xlu0 %v394, 1
      %v398 = vpop.permute.xlu0 %397
      %v399 = vrot.slane %v396, 4
      %v400 = vrot.slane %v398, 4
      %vm401 = vcmask 7168
      %v402 = vsel %vm401, %v396, %v399
      %v403 = vsel %vm401, %v398, %v400
      %406 = vst [vmem:[#allocation3 + $0x18] sm:$0xf] %v402
      %407 = vst [vmem:[#allocation3 + $0x1c] sm:$0xf] %v403
      %v408 = vld [vmem:[%s278 + $0x8] sm:$0xff]
      %v409 = vld [vmem:[%s278 + $0x20] sm:$0xff]
      %v410 = vpack.c.bf16 %v409, %v408
      %v412 = vunpack.c.l.b16 %v410
      %v413 = vunpack.c.h.b16 %v410
      %v414 = vpack.c.b16 %v412, %v412
      %v415 = vpack.c.b16 %v413, %v413
      %418 = vst [vmem:[#allocation3 + $0x20] sm:$0xf] %v414
      %419 = vst [vmem:[#allocation3 + $0x24] sm:$0xf] %v415
      %v420 = vld [vmem:[%s278 + $0x8] sm:$0xff]
      %v421 = vld [vmem:[%s278 + $0x10] sm:$0xff]
      %v422 = vld [vmem:[%s278 + $0x20] sm:$0xff]
      %v423 = vld [vmem:[%s278 + $0x28] sm:$0xff]
      %v424 = vpack.c.bf16 %v422, %v420
      %v425 = vpack.c.bf16 %v423, %v421
      %v428 = vunpack.c.l.b16 %v424
      %v429 = vunpack.c.l.b16 %v425
      %v430 = vunpack.c.h.b16 %v424
      %v431 = vunpack.c.h.b16 %v425
      %v432 = vpack.c.b16 %v429, %v428
      %v433 = vpack.c.b16 %v431, %v430
      %434 = vrot.lane.b32.xlu0 %v432, 127
      %v435 = vpop.permute.xlu0 %434
      %436 = vrot.lane.b32.xlu0 %v433, 127
      %v437 = vpop.permute.xlu0 %436
      %v438 = vrot.slane %v435, 4
      %v439 = vrot.slane %v437, 4
      %vm440 = vcmask 1039360
      %v441 = vsel %vm440, %v435, %v438
      %v442 = vsel %vm440, %v437, %v439
      %445 = vst [vmem:[#allocation3 + $0x28] sm:$0xf] %v441
      %446 = vst [vmem:[#allocation3 + $0x2c] sm:$0xf] %v442
      %v447 = vld [vmem:[%s278 + $0x8] sm:$0xff]
      %v448 = vld [vmem:[%s278 + $0x10] sm:$0xff]
      %v449 = vld [vmem:[%s278 + $0x20] sm:$0xff]
      %v450 = vld [vmem:[%s278 + $0x28] sm:$0xff]
      %v451 = vpack.c.bf16 %v449, %v447
      %v452 = vpack.c.bf16 %v450, %v448
      %v455 = vunpack.c.l.b16 %v451
      %v456 = vunpack.c.l.b16 %v452
      %v457 = vunpack.c.h.b16 %v451
      %v458 = vunpack.c.h.b16 %v452
      %v459 = vpack.c.b16 %v456, %v455
      %v460 = vpack.c.b16 %v458, %v457
      %461 = vrot.lane.b32.xlu0 %v459, 119
      %v462 = vpop.permute.xlu0 %461
      %463 = vrot.lane.b32.xlu0 %v460, 119
      %v464 = vpop.permute.xlu0 %463
      %v465 = vrot.slane %v462, 4
      %v466 = vrot.slane %v464, 4
      %vm467 = vcmask 973824
      %v468 = vsel %vm467, %v462, %v465
      %v469 = vsel %vm467, %v464, %v466
      %472 = vst [vmem:[#allocation3 + $0x30] sm:$0xf] %v468
      %473 = vst [vmem:[#allocation3 + $0x34] sm:$0xf] %v469
      %v474 = vld [vmem:[%s278 + $0x8] sm:$0xff]
      %v475 = vld [vmem:[%s278 + $0x10] sm:$0xff]
      %v476 = vld [vmem:[%s278 + $0x20] sm:$0xff]
      %v477 = vld [vmem:[%s278 + $0x28] sm:$0xff]
      %v478 = vpack.c.bf16 %v476, %v474
      %v479 = vpack.c.bf16 %v477, %v475
      %v482 = vunpack.c.l.b16 %v478
      %v483 = vunpack.c.l.b16 %v479
      %v484 = vunpack.c.h.b16 %v478
      %v485 = vunpack.c.h.b16 %v479
      %v486 = vpack.c.b16 %v483, %v482
      %v487 = vpack.c.b16 %v485, %v484
      %488 = vrot.lane.b32.xlu0 %v486, 118
      %v489 = vpop.permute.xlu0 %488
      %490 = vrot.lane.b32.xlu0 %v487, 118
      %v491 = vpop.permute.xlu0 %490
      %v492 = vrot.slane %v489, 4
      %v493 = vrot.slane %v491, 4
      %vm494 = vcmask 965632
      %v495 = vsel %vm494, %v489, %v492
      %v496 = vsel %vm494, %v491, %v493
      %499 = vst [vmem:[#allocation3 + $0x38] sm:$0xf] %v495
      %500 = vst [vmem:[#allocation3 + $0x3c] sm:$0xf] %v496
      %v501 = vld [vmem:[%s278 + $0x8] sm:$0xff]
      %v502 = vld [vmem:[%s278 + $0x10] sm:$0xff]
      %v503 = vld [vmem:[%s278 + $0x20] sm:$0xff]
      %v504 = vld [vmem:[%s278 + $0x28] sm:$0xff]
      %v505 = vpack.c.bf16 %v503, %v501
      %v506 = vpack.c.bf16 %v504, %v502
      %v509 = vunpack.c.l.b16 %v505
      %v510 = vunpack.c.l.b16 %v506
      %v511 = vunpack.c.h.b16 %v505
      %v512 = vunpack.c.h.b16 %v506
      %v513 = vpack.c.b16 %v510, %v509
      %v514 = vpack.c.b16 %v512, %v511
      %515 = vrot.lane.b32.xlu0 %v513, 117
      %v516 = vpop.permute.xlu0 %515
      %517 = vrot.lane.b32.xlu0 %v514, 117
      %v518 = vpop.permute.xlu0 %517
      %v519 = vrot.slane %v516, 4
      %v520 = vrot.slane %v518, 4
      %vm521 = vcmask 957440
      %v522 = vsel %vm521, %v516, %v519
      %v523 = vsel %vm521, %v518, %v520
      %526 = vst [vmem:[#allocation3 + $0x40] sm:$0xf] %v522
      %527 = vst [vmem:[#allocation3 + $0x44] sm:$0xf] %v523
      %v528 = vld [vmem:[%s1] sm:$0xff]
      %v529 = vld [vmem:[%s1 + $0x8] sm:$0xff]
      %v530 = vld [vmem:[%s1 + $0x10] sm:$0xff]
      %v531 = vld [vmem:[%s1 + $0x18] sm:$0xff]
      %v532 = vld [vmem:[%s1 + $0x20] sm:$0xff]
      %v533 = vld [vmem:[%s1 + $0x28] sm:$0xff]
      %v534 = vld [vmem:[#allocation3] sm:$0xf]
      %v535 = vld [vmem:[#allocation3 + $0x4] sm:$0xf]
      %v536 = vld [vmem:[#allocation3 + $0x8] sm:$0xf]
      %v537 = vld [vmem:[#allocation3 + $0xc] sm:$0xf]
      %v538 = vld [vmem:[#allocation3 + $0x10] sm:$0xf]
      %v539 = vld [vmem:[#allocation3 + $0x14] sm:$0xf]
      %v540 = vld [vmem:[#allocation3 + $0x18] sm:$0xf]
      %v541 = vld [vmem:[#allocation3 + $0x1c] sm:$0xf]
      %v542 = vld [vmem:[#allocation3 + $0x20] sm:$0xf]
      %v543 = vld [vmem:[#allocation3 + $0x24] sm:$0xf]
      %v544 = vld [vmem:[#allocation3 + $0x28] sm:$0xf]
      %v545 = vld [vmem:[#allocation3 + $0x2c] sm:$0xf]
      %v546 = vld [vmem:[#allocation3 + $0x30] sm:$0xf]
      %v547 = vld [vmem:[#allocation3 + $0x34] sm:$0xf]
      %v548 = vld [vmem:[#allocation3 + $0x38] sm:$0xf]
      %v549 = vld [vmem:[#allocation3 + $0x3c] sm:$0xf]
      %v550 = vld [vmem:[#allocation3 + $0x40] sm:$0xf]
      %v551 = vld [vmem:[#allocation3 + $0x44] sm:$0xf]
      %v552 = vld [vmem:[%s4] sm:$0xff]
      %v553 = vld [vmem:[%s4 + $0x8] sm:$0xff]
      %v554 = vld [vmem:[%s4 + $0x10] sm:$0xff]
      %v555 = vld [vmem:[%s4 + $0x18] sm:$0xff]
      %v556 = vld [vmem:[%s4 + $0x20] sm:$0xff]
      %v557 = vld [vmem:[%s4 + $0x28] sm:$0xff]
      %559 = vset.pattern.permute.xlu0 0
      %560 = vperm.xlu0 %559, %v552
      %v561 = vpop.permute.xlu0 %560
      %564 = vset.pattern.permute.xlu0 0
      %565 = vperm.xlu0 %564, %v553
      %v566 = vpop.permute.xlu0 %565
      %569 = vset.pattern.permute.xlu0 0
      %570 = vperm.xlu0 %569, %v554
      %v571 = vpop.permute.xlu0 %570
      %574 = vset.pattern.permute.xlu0 0
      %575 = vperm.xlu0 %574, %v555
      %v576 = vpop.permute.xlu0 %575
      %579 = vset.pattern.permute.xlu0 0
      %580 = vperm.xlu0 %579, %v556
      %v581 = vpop.permute.xlu0 %580
      %584 = vset.pattern.permute.xlu0 0
      %585 = vperm.xlu0 %584, %v557
      %v586 = vpop.permute.xlu0 %585
      %v594 = vunpack.c.l.b16 %v528
      %v595 = vunpack.c.h.b16 %v528
      %v596 = vunpack.c.l.b16 %v529
      %v597 = vunpack.c.h.b16 %v529
      %v598 = vunpack.c.l.b16 %v530
      %v599 = vunpack.c.h.b16 %v530
      %v600 = vunpack.c.l.b16 %v531
      %v601 = vunpack.c.h.b16 %v531
      %v602 = vunpack.c.l.b16 %v532
      %v603 = vunpack.c.h.b16 %v532
      %v604 = vunpack.c.l.b16 %v533
      %v605 = vunpack.c.h.b16 %v533
      %v606 = vpack.c.b16 %v596, %v594
      %v607 = vpack.c.b16 %v597, %v595
      %v608 = vpack.c.b16 %v600, %v598
      %v609 = vpack.c.b16 %v601, %v599
      %v610 = vpack.c.b16 %v604, %v602
      %v611 = vpack.c.b16 %v605, %v603
      %v633 = vunpack.c.l.b16 %v534
      %v634 = vunpack.c.l.b16 %v535
      %v635 = vunpack.c.l.b16 %v536
      %v636 = vunpack.c.l.b16 %v537
      %v637 = vunpack.c.l.b16 %v538
      %v638 = vunpack.c.l.b16 %v539
      %v639 = vunpack.c.l.b16 %v540
      %v640 = vunpack.c.l.b16 %v541
      %v641 = vunpack.c.l.b16 %v542
      %v642 = vunpack.c.l.b16 %v543
      %v643 = vunpack.c.l.b16 %v544
      %v644 = vunpack.c.l.b16 %v545
      %v645 = vunpack.c.l.b16 %v546
      %v646 = vunpack.c.l.b16 %v547
      %v647 = vunpack.c.l.b16 %v548
      %v648 = vunpack.c.l.b16 %v549
      %v649 = vunpack.c.l.b16 %v550
      %v650 = vunpack.c.l.b16 %v551
      %v651 = vpack.c.b16 %v634, %v633
      %v652 = vpack.c.b16 %v636, %v635
      %v653 = vpack.c.b16 %v638, %v637
      %v654 = vpack.c.b16 %v640, %v639
      %v655 = vpack.c.b16 %v642, %v641
      %v656 = vpack.c.b16 %v644, %v643
      %v657 = vpack.c.b16 %v646, %v645
      %v658 = vpack.c.b16 %v648, %v647
      %v659 = vpack.c.b16 %v650, %v649
      %vm669 = vcmask 130048
      %v671 = vsel %vm669, %v607, 0
      %v674 = vsel %vm669, %v609, 0
      %v677 = vsel %vm669, %v611, 0
      %679 = vmatprep.subr.bf16.mxu0 0
      %680 = vmatpush1.bf16.msra.mxu0 %v658
      %681 = vmatprep.subr.bf16.mxu0 0
      %682 = vmatpush1.bf16.msra.mxu0 %v657
      %683 = vmatprep.subr.bf16.mxu0 0
      %684 = vmatpush1.bf16.msra.mxu0 %v656
      %685 = vmatprep.subr.bf16.mxu0 0
      %686 = vmatpush1.bf16.msra.mxu0 %v655
      %687 = vmatprep.subr.bf16.mxu0 0
      %688 = vmatpush1.bf16.msra.mxu0 %v654
      %689 = vmatprep.subr.bf16.mxu0 0
      %690 = vmatpush1.bf16.msra.mxu0 %v653
      %691 = vmatprep.subr.bf16.mxu0 0
      %692 = vmatpush1.bf16.msra.mxu0 %v652
      %693 = vmatprep.subr.bf16.mxu0 0
      %694 = vmatpush1.bf16.msra.mxu0 %v651
      %695 = vmatprep.subr.bf16.mxu0 0
      %696 = vmatpush2.bf16.msra.mxu0 0
      %697 = vmatprep.subr.bf16.mxu0 0
      %698 = vmatpush2.bf16.msra.mxu0 0
      %699 = vmatprep.subr.bf16.mxu0 0
      %700 = vmatpush2.bf16.msra.mxu0 0
      %701 = vmatprep.subr.bf16.mxu0 0
      %702 = vmatpush2.bf16.msra.mxu0 0
      %703 = vmatprep.subr.bf16.mxu0 0
      %704 = vmatpush2.bf16.msra.mxu0 0
      %705 = vmatprep.subr.bf16.mxu0 0
      %706 = vmatpush2.bf16.msra.mxu0 0
      %707 = vmatprep.subr.bf16.mxu0 0
      %708 = vmatpush2.bf16.msra.mxu0 0
      %709 = vmatprep.subr.bf16.mxu0 0
      %710 = vmatpush2.bf16.msra.mxu0 %v659
      %711 = vmatprep.mubr.bf16.mxu0 %v671
      %712 = vmatmul.mubr.bf16.gmra.mxu0 %v606
      %v713 = vpop.f32.mrf.mxu0
      %v714 = vadd.f32 %v561, %v713
      %v715 = vpop.f32.mrf.mxu0
      %v716 = vpop.f32.mrf.mxu0
      %v717 = vadd.f32 %v566, %v716
      %v718 = vpop.f32.mrf.mxu0
      %719 = vmatprep.mubr.bf16.mxu0 %v674
      %720 = vmatmul.mubr.bf16.gmra.mxu0 %v608
      %v721 = vpop.f32.mrf.mxu0
      %v722 = vadd.f32 %v571, %v721
      %v723 = vpop.f32.mrf.mxu0
      %v724 = vpop.f32.mrf.mxu0
      %v725 = vadd.f32 %v576, %v724
      %v726 = vpop.f32.mrf.mxu0
      %727 = vmatprep.mubr.bf16.mxu0 %v677
      %728 = vmatmul.mubr.bf16.gmra.mxu0 %v610
      %v729 = vpop.f32.mrf.mxu0
      %v730 = vadd.f32 %v581, %v729
      %v731 = vpop.f32.mrf.mxu0
      %v732 = vpop.f32.mrf.mxu0
      %v733 = vadd.f32 %v586, %v732
      %v734 = vpop.f32.mrf.mxu0
      %735 = vdwg.mxu0
      %v736 = vld [vmem:[#allocation2 + $0x8] sm:$0xff]
      %v737 = vld [vmem:[#allocation2 + $0x20] sm:$0xff]
      %v738 = vld [vmem:[#allocation2] sm:$0xff]
      %v739 = vld [vmem:[#allocation2 + $0x18] sm:$0xff]
      %v740 = vpack.c.bf16 %v739, %v738
      %v741 = vpack.c.bf16 %v737, %v736
      %v744 = vunpack.c.l.b16 %v740
      %v745 = vunpack.c.l.b16 %v741
      %v746 = vunpack.c.h.b16 %v740
      %v747 = vunpack.c.h.b16 %v741
      %v748 = vpack.c.b16 %v745, %v744
      %v749 = vpack.c.b16 %v747, %v746
      %750 = vrot.lane.b32.xlu0 %v748, 11
      %v751 = vpop.permute.xlu0 %750
      %752 = vrot.lane.b32.xlu0 %v749, 11
      %v753 = vpop.permute.xlu0 %752
      %v754 = vrot.slane %v751, 4
      %v755 = vrot.slane %v753, 4
      %v756 = vsel %vm320, %v751, %v754
      %v757 = vsel %vm320, %v753, %v755
      %760 = vst [vmem:[#allocation3] sm:$0xf] %v756
      %761 = vst [vmem:[#allocation3 + $0x4] sm:$0xf] %v757
      %v762 = vld [vmem:[#allocation2] sm:$0xff]
      %v763 = vld [vmem:[#allocation2 + $0x8] sm:$0xff]
      %v764 = vld [vmem:[#allocation2 + $0x18] sm:$0xff]
      %v765 = vld [vmem:[#allocation2 + $0x20] sm:$0xff]
      %v766 = vpack.c.bf16 %v764, %v762
      %v767 = vpack.c.bf16 %v765, %v763
      %v770 = vunpack.c.l.b16 %v766
      %v771 = vunpack.c.l.b16 %v767
      %v772 = vunpack.c.h.b16 %v766
      %v773 = vunpack.c.h.b16 %v767
      %v774 = vpack.c.b16 %v771, %v770
      %v775 = vpack.c.b16 %v773, %v772
      %776 = vrot.lane.b32.xlu0 %v774, 10
      %v777 = vpop.permute.xlu0 %776
      %778 = vrot.lane.b32.xlu0 %v775, 10
      %v779 = vpop.permute.xlu0 %778
      %v780 = vrot.slane %v777, 4
      %v781 = vrot.slane %v779, 4
      %v782 = vsel %vm347, %v777, %v780
      %v783 = vsel %vm347, %v779, %v781
      %786 = vst [vmem:[#allocation3 + $0x8] sm:$0xf] %v782
      %787 = vst [vmem:[#allocation3 + $0xc] sm:$0xf] %v783
      %v788 = vld [vmem:[#allocation2] sm:$0xff]
      %v789 = vld [vmem:[#allocation2 + $0x8] sm:$0xff]
      %v790 = vld [vmem:[#allocation2 + $0x18] sm:$0xff]
      %v791 = vld [vmem:[#allocation2 + $0x20] sm:$0xff]
      %v792 = vpack.c.bf16 %v790, %v788
      %v793 = vpack.c.bf16 %v791, %v789
      %v796 = vunpack.c.l.b16 %v792
      %v797 = vunpack.c.l.b16 %v793
      %v798 = vunpack.c.h.b16 %v792
      %v799 = vunpack.c.h.b16 %v793
      %v800 = vpack.c.b16 %v797, %v796
      %v801 = vpack.c.b16 %v799, %v798
      %802 = vrot.lane.b32.xlu0 %v800, 9
      %v803 = vpop.permute.xlu0 %802
      %804 = vrot.lane.b32.xlu0 %v801, 9
      %v805 = vpop.permute.xlu0 %804
      %v806 = vrot.slane %v803, 4
      %v807 = vrot.slane %v805, 4
      %v808 = vsel %vm374, %v803, %v806
      %v809 = vsel %vm374, %v805, %v807
      %812 = vst [vmem:[#allocation3 + $0x10] sm:$0xf] %v808
      %813 = vst [vmem:[#allocation3 + $0x14] sm:$0xf] %v809
      %v814 = vld [vmem:[#allocation2] sm:$0xff]
      %v815 = vld [vmem:[#allocation2 + $0x8] sm:$0xff]
      %v816 = vld [vmem:[#allocation2 + $0x18] sm:$0xff]
      %v817 = vld [vmem:[#allocation2 + $0x20] sm:$0xff]
      %v818 = vpack.c.bf16 %v816, %v814
      %v819 = vpack.c.bf16 %v817, %v815
      %v822 = vunpack.c.l.b16 %v818
      %v823 = vunpack.c.l.b16 %v819
      %v824 = vunpack.c.h.b16 %v818
      %v825 = vunpack.c.h.b16 %v819
      %v826 = vpack.c.b16 %v823, %v822
      %v827 = vpack.c.b16 %v825, %v824
      %828 = vrot.lane.b32.xlu0 %v826, 1
      %v829 = vpop.permute.xlu0 %828
      %830 = vrot.lane.b32.xlu0 %v827, 1
      %v831 = vpop.permute.xlu0 %830
      %v832 = vrot.slane %v829, 4
      %v833 = vrot.slane %v831, 4
      %v834 = vsel %vm401, %v829, %v832
      %v835 = vsel %vm401, %v831, %v833
      %838 = vst [vmem:[#allocation3 + $0x18] sm:$0xf] %v834
      %839 = vst [vmem:[#allocation3 + $0x1c] sm:$0xf] %v835
      %v840 = vld [vmem:[#allocation2 + $0x8] sm:$0xff]
      %v841 = vld [vmem:[#allocation2 + $0x20] sm:$0xff]
      %v842 = vpack.c.bf16 %v841, %v840
      %v844 = vunpack.c.l.b16 %v842
      %v845 = vunpack.c.h.b16 %v842
      %v846 = vpack.c.b16 %v844, %v844
      %v847 = vpack.c.b16 %v845, %v845
      %850 = vst [vmem:[#allocation3 + $0x20] sm:$0xf] %v846
      %851 = vst [vmem:[#allocation3 + $0x24] sm:$0xf] %v847
      %v852 = vld [vmem:[#allocation2 + $0x8] sm:$0xff]
      %v853 = vld [vmem:[#allocation2 + $0x10] sm:$0xff]
      %v854 = vld [vmem:[#allocation2 + $0x20] sm:$0xff]
      %v855 = vld [vmem:[#allocation2 + $0x28] sm:$0xff]
      %v856 = vpack.c.bf16 %v854, %v852
      %v857 = vpack.c.bf16 %v855, %v853
      %v860 = vunpack.c.l.b16 %v856
      %v861 = vunpack.c.l.b16 %v857
      %v862 = vunpack.c.h.b16 %v856
      %v863 = vunpack.c.h.b16 %v857
      %v864 = vpack.c.b16 %v861, %v860
      %v865 = vpack.c.b16 %v863, %v862
      %866 = vrot.lane.b32.xlu0 %v864, 127
      %v867 = vpop.permute.xlu0 %866
      %868 = vrot.lane.b32.xlu0 %v865, 127
      %v869 = vpop.permute.xlu0 %868
      %v870 = vrot.slane %v867, 4
      %v871 = vrot.slane %v869, 4
      %v872 = vsel %vm440, %v867, %v870
      %v873 = vsel %vm440, %v869, %v871
      %876 = vst [vmem:[#allocation3 + $0x28] sm:$0xf] %v872
      %877 = vst [vmem:[#allocation3 + $0x2c] sm:$0xf] %v873
      %v878 = vld [vmem:[#allocation2 + $0x8] sm:$0xff]
      %v879 = vld [vmem:[#allocation2 + $0x10] sm:$0xff]
      %v880 = vld [vmem:[#allocation2 + $0x20] sm:$0xff]
      %v881 = vld [vmem:[#allocation2 + $0x28] sm:$0xff]
      %v882 = vpack.c.bf16 %v880, %v878
      %v883 = vpack.c.bf16 %v881, %v879
      %v886 = vunpack.c.l.b16 %v882
      %v887 = vunpack.c.l.b16 %v883
      %v888 = vunpack.c.h.b16 %v882
      %v889 = vunpack.c.h.b16 %v883
      %v890 = vpack.c.b16 %v887, %v886
      %v891 = vpack.c.b16 %v889, %v888
      %892 = vrot.lane.b32.xlu0 %v890, 119
      %v893 = vpop.permute.xlu0 %892
      %894 = vrot.lane.b32.xlu0 %v891, 119
      %v895 = vpop.permute.xlu0 %894
      %v896 = vrot.slane %v893, 4
      %v897 = vrot.slane %v895, 4
      %v898 = vsel %vm467, %v893, %v896
      %v899 = vsel %vm467, %v895, %v897
      %902 = vst [vmem:[#allocation3 + $0x30] sm:$0xf] %v898
      %903 = vst [vmem:[#allocation3 + $0x34] sm:$0xf] %v899
      %v904 = vld [vmem:[#allocation2 + $0x8] sm:$0xff]
      %v905 = vld [vmem:[#allocation2 + $0x10] sm:$0xff]
      %v906 = vld [vmem:[#allocation2 + $0x20] sm:$0xff]
      %v907 = vld [vmem:[#allocation2 + $0x28] sm:$0xff]
      %v908 = vpack.c.bf16 %v906, %v904
      %v909 = vpack.c.bf16 %v907, %v905
      %v912 = vunpack.c.l.b16 %v908
      %v913 = vunpack.c.l.b16 %v909
      %v914 = vunpack.c.h.b16 %v908
      %v915 = vunpack.c.h.b16 %v909
      %v916 = vpack.c.b16 %v913, %v912
      %v917 = vpack.c.b16 %v915, %v914
      %918 = vrot.lane.b32.xlu0 %v916, 118
      %v919 = vpop.permute.xlu0 %918
      %920 = vrot.lane.b32.xlu0 %v917, 118
      %v921 = vpop.permute.xlu0 %920
      %v922 = vrot.slane %v919, 4
      %v923 = vrot.slane %v921, 4
      %v924 = vsel %vm494, %v919, %v922
      %v925 = vsel %vm494, %v921, %v923
      %928 = vst [vmem:[#allocation3 + $0x38] sm:$0xf] %v924
      %929 = vst [vmem:[#allocation3 + $0x3c] sm:$0xf] %v925
      %v930 = vld [vmem:[#allocation2 + $0x8] sm:$0xff]
      %v931 = vld [vmem:[#allocation2 + $0x10] sm:$0xff]
      %v932 = vld [vmem:[#allocation2 + $0x20] sm:$0xff]
      %v933 = vld [vmem:[#allocation2 + $0x28] sm:$0xff]
      %v934 = vpack.c.bf16 %v932, %v930
      %v935 = vpack.c.bf16 %v933, %v931
      %v938 = vunpack.c.l.b16 %v934
      %v939 = vunpack.c.l.b16 %v935
      %v940 = vunpack.c.h.b16 %v934
      %v941 = vunpack.c.h.b16 %v935
      %v942 = vpack.c.b16 %v939, %v938
      %v943 = vpack.c.b16 %v941, %v940
      %944 = vrot.lane.b32.xlu0 %v942, 117
      %v945 = vpop.permute.xlu0 %944
      %946 = vrot.lane.b32.xlu0 %v943, 117
      %v947 = vpop.permute.xlu0 %946
      %v948 = vrot.slane %v945, 4
      %v949 = vrot.slane %v947, 4
      %v950 = vsel %vm521, %v945, %v948
      %v951 = vsel %vm521, %v947, %v949
      %954 = vst [vmem:[#allocation3 + $0x40] sm:$0xf] %v950
      %955 = vst [vmem:[#allocation3 + $0x44] sm:$0xf] %v951
      %v956 = vld [vmem:[%s2] sm:$0xff]
      %v957 = vld [vmem:[%s2 + $0x8] sm:$0xff]
      %v958 = vld [vmem:[%s2 + $0x10] sm:$0xff]
      %v959 = vld [vmem:[%s2 + $0x18] sm:$0xff]
      %v960 = vld [vmem:[#allocation3] sm:$0xf]
      %v961 = vld [vmem:[#allocation3 + $0x4] sm:$0xf]
      %v962 = vld [vmem:[#allocation3 + $0x8] sm:$0xf]
      %v963 = vld [vmem:[#allocation3 + $0xc] sm:$0xf]
      %v964 = vld [vmem:[#allocation3 + $0x10] sm:$0xf]
      %v965 = vld [vmem:[#allocation3 + $0x14] sm:$0xf]
      %v966 = vld [vmem:[#allocation3 + $0x18] sm:$0xf]
      %v967 = vld [vmem:[#allocation3 + $0x1c] sm:$0xf]
      %v968 = vld [vmem:[#allocation3 + $0x20] sm:$0xf]
      %v969 = vld [vmem:[#allocation3 + $0x24] sm:$0xf]
      %v970 = vld [vmem:[#allocation3 + $0x28] sm:$0xf]
      %v971 = vld [vmem:[#allocation3 + $0x2c] sm:$0xf]
      %v972 = vld [vmem:[#allocation3 + $0x30] sm:$0xf]
      %v973 = vld [vmem:[#allocation3 + $0x34] sm:$0xf]
      %v974 = vld [vmem:[#allocation3 + $0x38] sm:$0xf]
      %v975 = vld [vmem:[#allocation3 + $0x3c] sm:$0xf]
      %v976 = vld [vmem:[#allocation3 + $0x40] sm:$0xf]
      %v977 = vld [vmem:[#allocation3 + $0x44] sm:$0xf]
      %v982 = vunpack.c.l.b16 %v956
      %v983 = vunpack.c.h.b16 %v956
      %v984 = vunpack.c.l.b16 %v957
      %v985 = vunpack.c.h.b16 %v957
      %v986 = vunpack.c.l.b16 %v958
      %v987 = vunpack.c.h.b16 %v958
      %v988 = vunpack.c.l.b16 %v959
      %v989 = vunpack.c.h.b16 %v959
      %v990 = vpack.c.b16 %v984, %v982
      %v991 = vpack.c.b16 %v985, %v983
      %v992 = vpack.c.b16 %v988, %v986
      %v993 = vpack.c.b16 %v989, %v987
      %v1014 = vunpack.c.l.b16 %v960
      %v1015 = vunpack.c.l.b16 %v961
      %v1016 = vunpack.c.l.b16 %v962
      %v1017 = vunpack.c.l.b16 %v963
      %v1018 = vunpack.c.l.b16 %v964
      %v1019 = vunpack.c.l.b16 %v965
      %v1020 = vunpack.c.l.b16 %v966
      %v1021 = vunpack.c.l.b16 %v967
      %v1022 = vunpack.c.l.b16 %v968
      %v1023 = vunpack.c.l.b16 %v969
      %v1024 = vunpack.c.l.b16 %v970
      %v1025 = vunpack.c.l.b16 %v971
      %v1026 = vunpack.c.l.b16 %v972
      %v1027 = vunpack.c.l.b16 %v973
      %v1028 = vunpack.c.l.b16 %v974
      %v1029 = vunpack.c.l.b16 %v975
      %v1030 = vunpack.c.l.b16 %v976
      %v1031 = vunpack.c.l.b16 %v977
      %v1032 = vpack.c.b16 %v1015, %v1014
      %v1033 = vpack.c.b16 %v1017, %v1016
      %v1034 = vpack.c.b16 %v1019, %v1018
      %v1035 = vpack.c.b16 %v1021, %v1020
      %v1036 = vpack.c.b16 %v1023, %v1022
      %v1037 = vpack.c.b16 %v1025, %v1024
      %v1038 = vpack.c.b16 %v1027, %v1026
      %v1039 = vpack.c.b16 %v1029, %v1028
      %v1040 = vpack.c.b16 %v1031, %v1030
      %v1051 = vsel %vm669, %v991, 0
      %v1054 = vsel %vm669, %v993, 0
      %1056 = vmatprep.subr.bf16.mxu0 0
      %1057 = vmatpush1.bf16.msra.mxu0 %v1039
      %1058 = vmatprep.subr.bf16.mxu0 0
      %1059 = vmatpush1.bf16.msra.mxu0 %v1038
      %1060 = vmatprep.subr.bf16.mxu0 0
      %1061 = vmatpush1.bf16.msra.mxu0 %v1037
      %1062 = vmatprep.subr.bf16.mxu0 0
      %1063 = vmatpush1.bf16.msra.mxu0 %v1036
      %1064 = vmatprep.subr.bf16.mxu0 0
      %1065 = vmatpush1.bf16.msra.mxu0 %v1035
      %1066 = vmatprep.subr.bf16.mxu0 0
      %1067 = vmatpush1.bf16.msra.mxu0 %v1034
      %1068 = vmatprep.subr.bf16.mxu0 0
      %1069 = vmatpush1.bf16.msra.mxu0 %v1033
      %1070 = vmatprep.subr.bf16.mxu0 0
      %1071 = vmatpush1.bf16.msra.mxu0 %v1032
      %1072 = vmatprep.subr.bf16.mxu0 0
      %1073 = vmatpush2.bf16.msra.mxu0 0
      %1074 = vmatprep.subr.bf16.mxu0 0
      %1075 = vmatpush2.bf16.msra.mxu0 0
      %1076 = vmatprep.subr.bf16.mxu0 0
      %1077 = vmatpush2.bf16.msra.mxu0 0
      %1078 = vmatprep.subr.bf16.mxu0 0
      %1079 = vmatpush2.bf16.msra.mxu0 0
      %1080 = vmatprep.subr.bf16.mxu0 0
      %1081 = vmatpush2.bf16.msra.mxu0 0
      %1082 = vmatprep.subr.bf16.mxu0 0
      %1083 = vmatpush2.bf16.msra.mxu0 0
      %1084 = vmatprep.subr.bf16.mxu0 0
      %1085 = vmatpush2.bf16.msra.mxu0 0
      %1086 = vmatprep.subr.bf16.mxu0 0
      %1087 = vmatpush2.bf16.msra.mxu0 %v1040
      %1088 = vmatprep.mubr.bf16.mxu0 %v1051
      %1089 = vmatmul.mubr.bf16.gmra.mxu0 %v990
      %v1090 = vpop.f32.mrf.mxu0
      %v1091 = vadd.f32 0.0, %v1090
      %v1092 = vpop.f32.mrf.mxu0
      %v1093 = vpop.f32.mrf.mxu0
      %v1094 = vadd.f32 0.0, %v1093
      %v1095 = vpop.f32.mrf.mxu0
      %1096 = vmatprep.mubr.bf16.mxu0 %v1054
      %1097 = vmatmul.mubr.bf16.gmra.mxu0 %v992
      %v1098 = vpop.f32.mrf.mxu0
      %v1099 = vadd.f32 0.0, %v1098
      %v1100 = vpop.f32.mrf.mxu0
      %v1101 = vpop.f32.mrf.mxu0
      %v1102 = vadd.f32 0.0, %v1101
      %v1103 = vpop.f32.mrf.mxu0
      %1104 = vdwg.mxu0
      %v1105 = vadd.f32 %v714, %v1091
      %v1106 = vadd.f32 %v717, %v1094
      %v1107 = vadd.f32 %v722, %v1099
      %v1108 = vadd.f32 %v725, %v1102
      %v1109 = vxor.u32 %v1105, 2147483648
      %v1110 = vxor.u32 %v1106, 2147483648
      %v1111 = vxor.u32 %v1107, 2147483648
      %v1112 = vxor.u32 %v1108, 2147483648
      %v1113 = vmul.f32 %v1109, 1.442695
      %v1114 = vpow.pop %v1113
      %v1115 = vmul.f32 %v1110, 1.442695
      %v1116 = vpow.pop %v1115
      %v1117 = vmul.f32 %v1111, 1.442695
      %v1118 = vpow.pop %v1117
      %v1119 = vmul.f32 %v1112, 1.442695
      %v1120 = vpow.pop %v1119
      %v1121 = vadd.f32 %v1114, 1.0
      %v1122 = vadd.f32 %v1116, 1.0
      %v1123 = vadd.f32 %v1118, 1.0
      %v1124 = vadd.f32 %v1120, 1.0
      %v1125 = vrcp.pop %v1121
      %v1126 = vmul.f32 1.0, %v1125
      %v1127 = vrcp.pop %v1122
      %v1128 = vmul.f32 1.0, %v1127
      %v1129 = vrcp.pop %v1123
      %v1130 = vmul.f32 1.0, %v1129
      %v1131 = vrcp.pop %v1124
      %v1132 = vmul.f32 1.0, %v1131
      %v1133 = vmul.f32 %v736, %v1130
      %v1134 = vmul.f32 %v737, %v1132
      %1135 = vst [vmem:[#allocation2 + $0x8] sm:$0xff] %v1133
      %1136 = vst [vmem:[#allocation2 + $0x20] sm:$0xff] %v1134
      %v1137 = vld [vmem:[#allocation2] sm:$0xff]
      %v1138 = vld [vmem:[#allocation2 + $0x8] sm:$0xff]
      %v1139 = vld [vmem:[#allocation2 + $0x18] sm:$0xff]
      %v1140 = vld [vmem:[#allocation2 + $0x20] sm:$0xff]
      %v1141 = vpack.c.bf16 %v1139, %v1137
      %v1142 = vpack.c.bf16 %v1140, %v1138
      %v1145 = vunpack.c.l.b16 %v1141
      %v1146 = vunpack.c.l.b16 %v1142
      %v1147 = vunpack.c.h.b16 %v1141
      %v1148 = vunpack.c.h.b16 %v1142
      %v1149 = vpack.c.b16 %v1146, %v1145
      %v1150 = vpack.c.b16 %v1148, %v1147
      %1151 = vrot.lane.b32.xlu0 %v1149, 11
      %v1152 = vpop.permute.xlu0 %1151
      %1153 = vrot.lane.b32.xlu0 %v1150, 11
      %v1154 = vpop.permute.xlu0 %1153
      %v1155 = vrot.slane %v1152, 4
      %v1156 = vrot.slane %v1154, 4
      %v1157 = vsel %vm320, %v1152, %v1155
      %v1158 = vsel %vm320, %v1154, %v1156
      %1161 = vst [vmem:[#allocation3] sm:$0xf] %v1157
      %1162 = vst [vmem:[#allocation3 + $0x4] sm:$0xf] %v1158
      %v1163 = vld [vmem:[#allocation2] sm:$0xff]
      %v1164 = vld [vmem:[#allocation2 + $0x8] sm:$0xff]
      %v1165 = vld [vmem:[#allocation2 + $0x18] sm:$0xff]
      %v1166 = vld [vmem:[#allocation2 + $0x20] sm:$0xff]
      %v1167 = vpack.c.bf16 %v1165, %v1163
      %v1168 = vpack.c.bf16 %v1166, %v1164
      %v1171 = vunpack.c.l.b16 %v1167
      %v1172 = vunpack.c.l.b16 %v1168
      %v1173 = vunpack.c.h.b16 %v1167
      %v1174 = vunpack.c.h.b16 %v1168
      %v1175 = vpack.c.b16 %v1172, %v1171
      %v1176 = vpack.c.b16 %v1174, %v1173
      %1177 = vrot.lane.b32.xlu0 %v1175, 10
      %v1178 = vpop.permute.xlu0 %1177
      %1179 = vrot.lane.b32.xlu0 %v1176, 10
      %v1180 = vpop.permute.xlu0 %1179
      %v1181 = vrot.slane %v1178, 4
      %v1182 = vrot.slane %v1180, 4
      %v1183 = vsel %vm347, %v1178, %v1181
      %v1184 = vsel %vm347, %v1180, %v1182
      %1187 = vst [vmem:[#allocation3 + $0x8] sm:$0xf] %v1183
      %1188 = vst [vmem:[#allocation3 + $0xc] sm:$0xf] %v1184
      %v1189 = vld [vmem:[#allocation2] sm:$0xff]
      %v1190 = vld [vmem:[#allocation2 + $0x8] sm:$0xff]
      %v1191 = vld [vmem:[#allocation2 + $0x18] sm:$0xff]
      %v1192 = vld [vmem:[#allocation2 + $0x20] sm:$0xff]
      %v1193 = vpack.c.bf16 %v1191, %v1189
      %v1194 = vpack.c.bf16 %v1192, %v1190
      %v1197 = vunpack.c.l.b16 %v1193
      %v1198 = vunpack.c.l.b16 %v1194
      %v1199 = vunpack.c.h.b16 %v1193
      %v1200 = vunpack.c.h.b16 %v1194
      %v1201 = vpack.c.b16 %v1198, %v1197
      %v1202 = vpack.c.b16 %v1200, %v1199
      %1203 = vrot.lane.b32.xlu0 %v1201, 9
      %v1204 = vpop.permute.xlu0 %1203
      %1205 = vrot.lane.b32.xlu0 %v1202, 9
      %v1206 = vpop.permute.xlu0 %1205
      %v1207 = vrot.slane %v1204, 4
      %v1208 = vrot.slane %v1206, 4
      %v1209 = vsel %vm374, %v1204, %v1207
      %v1210 = vsel %vm374, %v1206, %v1208
      %1213 = vst [vmem:[#allocation3 + $0x10] sm:$0xf] %v1209
      %1214 = vst [vmem:[#allocation3 + $0x14] sm:$0xf] %v1210
      %v1215 = vld [vmem:[#allocation2] sm:$0xff]
      %v1216 = vld [vmem:[#allocation2 + $0x8] sm:$0xff]
      %v1217 = vld [vmem:[#allocation2 + $0x18] sm:$0xff]
      %v1218 = vld [vmem:[#allocation2 + $0x20] sm:$0xff]
      %v1219 = vpack.c.bf16 %v1217, %v1215
      %v1220 = vpack.c.bf16 %v1218, %v1216
      %v1223 = vunpack.c.l.b16 %v1219
      %v1224 = vunpack.c.l.b16 %v1220
      %v1225 = vunpack.c.h.b16 %v1219
      %v1226 = vunpack.c.h.b16 %v1220
      %v1227 = vpack.c.b16 %v1224, %v1223
      %v1228 = vpack.c.b16 %v1226, %v1225
      %1229 = vrot.lane.b32.xlu0 %v1227, 1
      %v1230 = vpop.permute.xlu0 %1229
      %1231 = vrot.lane.b32.xlu0 %v1228, 1
      %v1232 = vpop.permute.xlu0 %1231
      %v1233 = vrot.slane %v1230, 4
      %v1234 = vrot.slane %v1232, 4
      %v1235 = vsel %vm401, %v1230, %v1233
      %v1236 = vsel %vm401, %v1232, %v1234
      %1239 = vst [vmem:[#allocation3 + $0x18] sm:$0xf] %v1235
      %1240 = vst [vmem:[#allocation3 + $0x1c] sm:$0xf] %v1236
      %v1241 = vld [vmem:[#allocation2 + $0x8] sm:$0xff]
      %v1242 = vld [vmem:[#allocation2 + $0x20] sm:$0xff]
      %v1243 = vpack.c.bf16 %v1242, %v1241
      %v1245 = vunpack.c.l.b16 %v1243
      %v1246 = vunpack.c.h.b16 %v1243
      %v1247 = vpack.c.b16 %v1245, %v1245
      %v1248 = vpack.c.b16 %v1246, %v1246
      %1251 = vst [vmem:[#allocation3 + $0x20] sm:$0xf] %v1247
      %1252 = vst [vmem:[#allocation3 + $0x24] sm:$0xf] %v1248
      %v1253 = vld [vmem:[#allocation2 + $0x8] sm:$0xff]
      %v1254 = vld [vmem:[#allocation2 + $0x10] sm:$0xff]
      %v1255 = vld [vmem:[#allocation2 + $0x20] sm:$0xff]
      %v1256 = vld [vmem:[#allocation2 + $0x28] sm:$0xff]
      %v1257 = vpack.c.bf16 %v1255, %v1253
      %v1258 = vpack.c.bf16 %v1256, %v1254
      %v1261 = vunpack.c.l.b16 %v1257
      %v1262 = vunpack.c.l.b16 %v1258
      %v1263 = vunpack.c.h.b16 %v1257
      %v1264 = vunpack.c.h.b16 %v1258
      %v1265 = vpack.c.b16 %v1262, %v1261
      %v1266 = vpack.c.b16 %v1264, %v1263
      %1267 = vrot.lane.b32.xlu0 %v1265, 127
      %v1268 = vpop.permute.xlu0 %1267
      %1269 = vrot.lane.b32.xlu0 %v1266, 127
      %v1270 = vpop.permute.xlu0 %1269
      %v1271 = vrot.slane %v1268, 4
      %v1272 = vrot.slane %v1270, 4
      %v1273 = vsel %vm440, %v1268, %v1271
      %v1274 = vsel %vm440, %v1270, %v1272
      %1277 = vst [vmem:[#allocation3 + $0x28] sm:$0xf] %v1273
      %1278 = vst [vmem:[#allocation3 + $0x2c] sm:$0xf] %v1274
      %v1279 = vld [vmem:[#allocation2 + $0x8] sm:$0xff]
      %v1280 = vld [vmem:[#allocation2 + $0x10] sm:$0xff]
      %v1281 = vld [vmem:[#allocation2 + $0x20] sm:$0xff]
      %v1282 = vld [vmem:[#allocation2 + $0x28] sm:$0xff]
      %v1283 = vpack.c.bf16 %v1281, %v1279
      %v1284 = vpack.c.bf16 %v1282, %v1280
      %v1287 = vunpack.c.l.b16 %v1283
      %v1288 = vunpack.c.l.b16 %v1284
      %v1289 = vunpack.c.h.b16 %v1283
      %v1290 = vunpack.c.h.b16 %v1284
      %v1291 = vpack.c.b16 %v1288, %v1287
      %v1292 = vpack.c.b16 %v1290, %v1289
      %1293 = vrot.lane.b32.xlu0 %v1291, 119
      %v1294 = vpop.permute.xlu0 %1293
      %1295 = vrot.lane.b32.xlu0 %v1292, 119
      %v1296 = vpop.permute.xlu0 %1295
      %v1297 = vrot.slane %v1294, 4
      %v1298 = vrot.slane %v1296, 4
      %v1299 = vsel %vm467, %v1294, %v1297
      %v1300 = vsel %vm467, %v1296, %v1298
      %1303 = vst [vmem:[#allocation3 + $0x30] sm:$0xf] %v1299
      %1304 = vst [vmem:[#allocation3 + $0x34] sm:$0xf] %v1300
      %v1305 = vld [vmem:[#allocation2 + $0x8] sm:$0xff]
      %v1306 = vld [vmem:[#allocation2 + $0x10] sm:$0xff]
      %v1307 = vld [vmem:[#allocation2 + $0x20] sm:$0xff]
      %v1308 = vld [vmem:[#allocation2 + $0x28] sm:$0xff]
      %v1309 = vpack.c.bf16 %v1307, %v1305
      %v1310 = vpack.c.bf16 %v1308, %v1306
      %v1313 = vunpack.c.l.b16 %v1309
      %v1314 = vunpack.c.l.b16 %v1310
      %v1315 = vunpack.c.h.b16 %v1309
      %v1316 = vunpack.c.h.b16 %v1310
      %v1317 = vpack.c.b16 %v1314, %v1313
      %v1318 = vpack.c.b16 %v1316, %v1315
      %1319 = vrot.lane.b32.xlu0 %v1317, 118
      %v1320 = vpop.permute.xlu0 %1319
      %1321 = vrot.lane.b32.xlu0 %v1318, 118
      %v1322 = vpop.permute.xlu0 %1321
      %v1323 = vrot.slane %v1320, 4
      %v1324 = vrot.slane %v1322, 4
      %v1325 = vsel %vm494, %v1320, %v1323
      %v1326 = vsel %vm494, %v1322, %v1324
      %1329 = vst [vmem:[#allocation3 + $0x38] sm:$0xf] %v1325
      %1330 = vst [vmem:[#allocation3 + $0x3c] sm:$0xf] %v1326
      %v1331 = vld [vmem:[#allocation2 + $0x8] sm:$0xff]
      %v1332 = vld [vmem:[#allocation2 + $0x10] sm:$0xff]
      %v1333 = vld [vmem:[#allocation2 + $0x20] sm:$0xff]
      %v1334 = vld [vmem:[#allocation2 + $0x28] sm:$0xff]
      %v1335 = vpack.c.bf16 %v1333, %v1331
      %v1336 = vpack.c.bf16 %v1334, %v1332
      %v1339 = vunpack.c.l.b16 %v1335
      %v1340 = vunpack.c.l.b16 %v1336
      %v1341 = vunpack.c.h.b16 %v1335
      %v1342 = vunpack.c.h.b16 %v1336
      %v1343 = vpack.c.b16 %v1340, %v1339
      %v1344 = vpack.c.b16 %v1342, %v1341
      %1345 = vrot.lane.b32.xlu0 %v1343, 117
      %v1346 = vpop.permute.xlu0 %1345
      %1347 = vrot.lane.b32.xlu0 %v1344, 117
      %v1348 = vpop.permute.xlu0 %1347
      %v1349 = vrot.slane %v1346, 4
      %v1350 = vrot.slane %v1348, 4
      %v1351 = vsel %vm521, %v1346, %v1349
      %v1352 = vsel %vm521, %v1348, %v1350
      %1355 = vst [vmem:[#allocation3 + $0x40] sm:$0xf] %v1351
      %1356 = vst [vmem:[#allocation3 + $0x44] sm:$0xf] %v1352
      %v1357 = vld [vmem:[%s3] sm:$0xff]
      %v1358 = vld [vmem:[%s3 + $0x8] sm:$0xff]
      %v1359 = vld [vmem:[#allocation3] sm:$0xf]
      %v1360 = vld [vmem:[#allocation3 + $0x4] sm:$0xf]
      %v1361 = vld [vmem:[#allocation3 + $0x8] sm:$0xf]
      %v1362 = vld [vmem:[#allocation3 + $0xc] sm:$0xf]
      %v1363 = vld [vmem:[#allocation3 + $0x10] sm:$0xf]
      %v1364 = vld [vmem:[#allocation3 + $0x14] sm:$0xf]
      %v1365 = vld [vmem:[#allocation3 + $0x18] sm:$0xf]
      %v1366 = vld [vmem:[#allocation3 + $0x1c] sm:$0xf]
      %v1367 = vld [vmem:[#allocation3 + $0x20] sm:$0xf]
      %v1368 = vld [vmem:[#allocation3 + $0x24] sm:$0xf]
      %v1369 = vld [vmem:[#allocation3 + $0x28] sm:$0xf]
      %v1370 = vld [vmem:[#allocation3 + $0x2c] sm:$0xf]
      %v1371 = vld [vmem:[#allocation3 + $0x30] sm:$0xf]
      %v1372 = vld [vmem:[#allocation3 + $0x34] sm:$0xf]
      %v1373 = vld [vmem:[#allocation3 + $0x38] sm:$0xf]
      %v1374 = vld [vmem:[#allocation3 + $0x3c] sm:$0xf]
      %v1375 = vld [vmem:[#allocation3 + $0x40] sm:$0xf]
      %v1376 = vld [vmem:[#allocation3 + $0x44] sm:$0xf]
      %v1379 = vunpack.c.l.b16 %v1357
      %v1380 = vunpack.c.h.b16 %v1357
      %v1381 = vunpack.c.l.b16 %v1358
      %v1382 = vunpack.c.h.b16 %v1358
      %v1383 = vpack.c.b16 %v1381, %v1379
      %v1384 = vpack.c.b16 %v1382, %v1380
      %v1404 = vunpack.c.l.b16 %v1359
      %v1405 = vunpack.c.l.b16 %v1360
      %v1406 = vunpack.c.l.b16 %v1361
      %v1407 = vunpack.c.l.b16 %v1362
      %v1408 = vunpack.c.l.b16 %v1363
      %v1409 = vunpack.c.l.b16 %v1364
      %v1410 = vunpack.c.l.b16 %v1365
      %v1411 = vunpack.c.l.b16 %v1366
      %v1412 = vunpack.c.l.b16 %v1367
      %v1413 = vunpack.c.l.b16 %v1368
      %v1414 = vunpack.c.l.b16 %v1369
      %v1415 = vunpack.c.l.b16 %v1370
      %v1416 = vunpack.c.l.b16 %v1371
      %v1417 = vunpack.c.l.b16 %v1372
      %v1418 = vunpack.c.l.b16 %v1373
      %v1419 = vunpack.c.l.b16 %v1374
      %v1420 = vunpack.c.l.b16 %v1375
      %v1421 = vunpack.c.l.b16 %v1376
      %v1422 = vpack.c.b16 %v1405, %v1404
      %v1423 = vpack.c.b16 %v1407, %v1406
      %v1424 = vpack.c.b16 %v1409, %v1408
      %v1425 = vpack.c.b16 %v1411, %v1410
      %v1426 = vpack.c.b16 %v1413, %v1412
      %v1427 = vpack.c.b16 %v1415, %v1414
      %v1428 = vpack.c.b16 %v1417, %v1416
      %v1429 = vpack.c.b16 %v1419, %v1418
      %v1430 = vpack.c.b16 %v1421, %v1420
      %v1441 = vsel %vm669, %v1384, 0
      %1443 = vmatprep.subr.bf16.mxu0 0
      %1444 = vmatpush1.bf16.msra.mxu0 %v1429
      %1445 = vmatprep.subr.bf16.mxu0 0
      %1446 = vmatpush1.bf16.msra.mxu0 %v1428
      %1447 = vmatprep.subr.bf16.mxu0 0
      %1448 = vmatpush1.bf16.msra.mxu0 %v1427
      %1449 = vmatprep.subr.bf16.mxu0 0
      %1450 = vmatpush1.bf16.msra.mxu0 %v1426
      %1451 = vmatprep.subr.bf16.mxu0 0
      %1452 = vmatpush1.bf16.msra.mxu0 %v1425
      %1453 = vmatprep.subr.bf16.mxu0 0
      %1454 = vmatpush1.bf16.msra.mxu0 %v1424
      %1455 = vmatprep.subr.bf16.mxu0 0
      %1456 = vmatpush1.bf16.msra.mxu0 %v1423
      %1457 = vmatprep.subr.bf16.mxu0 0
      %1458 = vmatpush1.bf16.msra.mxu0 %v1422
      %1459 = vmatprep.subr.bf16.mxu0 0
      %1460 = vmatpush2.bf16.msra.mxu0 0
      %1461 = vmatprep.subr.bf16.mxu0 0
      %1462 = vmatpush2.bf16.msra.mxu0 0
      %1463 = vmatprep.subr.bf16.mxu0 0
      %1464 = vmatpush2.bf16.msra.mxu0 0
      %1465 = vmatprep.subr.bf16.mxu0 0
      %1466 = vmatpush2.bf16.msra.mxu0 0
      %1467 = vmatprep.subr.bf16.mxu0 0
      %1468 = vmatpush2.bf16.msra.mxu0 0
      %1469 = vmatprep.subr.bf16.mxu0 0
      %1470 = vmatpush2.bf16.msra.mxu0 0
      %1471 = vmatprep.subr.bf16.mxu0 0
      %1472 = vmatpush2.bf16.msra.mxu0 0
      %1473 = vmatprep.subr.bf16.mxu0 0
      %1474 = vmatpush2.bf16.msra.mxu0 %v1430
      %1475 = vmatprep.mubr.bf16.mxu0 %v1441
      %1476 = vmatmul.mubr.bf16.gmra.mxu0 %v1383
      %v1477 = vpop.f32.mrf.mxu0
      %v1478 = vadd.f32 0.0, %v1477
      %v1479 = vpop.f32.mrf.mxu0
      %v1480 = vpop.f32.mrf.mxu0
      %v1481 = vadd.f32 0.0, %v1480
      %v1482 = vpop.f32.mrf.mxu0
      %1483 = vdwg.mxu0
      %v1484 = vadd.f32 %v730, %v1478
      %v1485 = vadd.f32 %v733, %v1481
      %v1486 = vtanh.pop %v1484
      %v1487 = vtanh.pop %v1485
      %v1488 = vsub.f32 1.0, %v1126
      %v1489 = vsub.f32 1.0, %v1128
      %v1490 = vmul.f32 %v736, %v1488
      %v1491 = vmul.f32 %v737, %v1489
      %v1492 = vmul.f32 %v1486, %v1126
      %v1493 = vmul.f32 %v1487, %v1128
      %v1494 = vadd.f32 %v1490, %v1492
      %v1495 = vadd.f32 %v1491, %v1493
      %v1496 = vld [vmem:[%s5] sm:$0x1]
      %v1498 = vlaneseq
      %v1499 = vshrl.u32 %v1498, 7
      %v1500 = vsub.s32 0, %v1499
      %v1501 = vrot.slane %v1496, %v1500
      %v1503 = vmul.f32 %v1494, %v1501
      %v1504 = vmul.f32 %v1495, %v1501
      %1505 = vst [vmem:[%s287] sm:$0xff] %v1503
      %1506 = vst [vmem:[%s287 + $0x8] sm:$0xff] %v1504
      %1507 = vst [vmem:[#allocation2 + $0x8] sm:$0xff] %v1503
      %1508 = vst [vmem:[#allocation2 + $0x20] sm:$0xff] %v1504
      %p1509 = scmp.lt.s32.totalorder %s21, 1
      %s1510 = scalar_select %p1509, %s21, 1
      %p1511 = scmp.lt.s32.totalorder %s22, 3
      %s1512 = scalar_select %p1511, %s22, 3
      %s1513 = smul.addr %s1512, 2
      %s1514 = smul.addr %s1510, 8
      %s1515 = sadd.s32 %s1513, %s1514
      %s1516 = smul.addr %s1515, 8
      %s1517 = scalar_lea.vmem %s6, %s1516
      // Predicated region
      $region49: #{encoder_forward.3} parent=43 // pred_check
        %p1518 = pneg %p182
      $region50: #{encoder_forward.3} parent=43 // pred_check_branch
        %1520 = sbr.rel (%p1518) target = $region52
      $region51: #{encoder_forward.3} parent=43 // pred_region
        _
      $region52: #{encoder_forward.3} parent=43 // pred_fallthru
        _
    $region44: #{encoder_forward.3} parent=5 // pred_fallthru
      _
    %p1521 = scmp.le.s32.totalorder 2, %s12
    // Predicated region
    $region53: #{encoder_forward.3} parent=5 // pred_check
      %p1522 = pneg %p1521
    $region54: #{encoder_forward.3} parent=5 // pred_check_branch
      %1524 = sbr.rel (%p1522) target = $region56
    $region55: #{encoder_forward.3} parent=5 // pred_region
      %s1525 = ssub.s32 %s12, 2
      // Predicated region
      $region57: #{encoder_forward.3} parent=55 // pred_check
        %p1526 = pneg %p188
      $region58: #{encoder_forward.3} parent=55 // pred_check_branch
        %1528 = sbr.rel (%p1526) target = $region60
      $region59: #{encoder_forward.3} parent=55 // pred_region
        %p1529 = scmp.lt.s32.totalorder %s23, 1
        %s1530 = scalar_select %p1529, %s23, 1
        %p1531 = scmp.lt.s32.totalorder %s24, 3
        %s1532 = scalar_select %p1531, %s24, 3
        %s1533 = smul.addr %s1532, 2
        %s1534 = smul.addr %s1530, 8
        %s1535 = sadd.s32 %s1533, %s1534
        %s1536 = smul.addr %s1535, 8
        %s1537 = scalar_lea.vmem %s6, %s1536
      $region60: #{encoder_forward.3} parent=55 // pred_fallthru
        _
    $region56: #{encoder_forward.3} parent=5 // pred_fallthru
      _
  $region6: #{encoder_forward.3} parent=0 // loop_footer
    %s16 = sadd.s32 1, %s12
  $region7: #{encoder_forward.3} parent=0 // loop_footer_branch
    %11 = sbr.rel target = $region3
  $region8: #{encoder_forward.3} parent=0 // loop_exit
    _

</llo_original>
